<compile_context>
chip_gen: v6e
topology: v6e:2x2x1
jax: 0.10.0
libtpu: 0.0.40
codegen_flags: <defaults>
</compile_context>

<pallas_src>
import jax
import jax.numpy as jnp
from jax import lax
from jax.experimental import pallas as pl
from jax.experimental.pallas import tpu as pltpu


def _residual_block_kernel(x_ref, t_ref, w1_ref, b1_ref, w2_ref, b2_ref,
                           wt_ref, bt_ref, o_ref, pad_ref, col_ref):
    """One batch element per grid step.  Refs (VMEM):

      x_ref  : (1, H, W, C)   image block, NHWC, float32
      t_ref  : (1, 1, C)      time features for this image, float32
      w1_ref : (9C, C)        conv1 weight, im2col-packed, compute dtype
      b1_ref : (1, C)         conv1 bias, float32
      w2_ref : (9C, C)        conv2 weight, im2col-packed, compute dtype
      b2_ref : (1, C)         conv2 bias, float32
      wt_ref : (C, C)         time Linear weight (in, out), compute dtype
      bt_ref : (1, C)         time Linear bias, float32
      o_ref  : (1, H, W, C)   output block, float32 (HBM-aliased with images)
      pad_ref: (H+2, W+2, C)  zero-padded activation scratch, float32
      col_ref: (H, W, 9C)     im2col scratch, compute dtype
    """
    _, H, W, C = x_ref.shape
    cdt = col_ref.dtype

    x = x_ref[0]                                            # (H, W, C) f32

    # Time embedding (Linear), with the conv1 bias folded in:  (1, C) f32.
    temb = jnp.dot(t_ref[0].astype(cdt), wt_ref[...],
                   preferred_element_type=jnp.float32)
    temb = temb + bt_ref[...] + b1_ref[...]

    # Zero only the 1-pixel border of the padding scratch (thin strips).  The
    # interior is fully rewritten before each conv and the border is never
    # written afterwards, so both convs share this buffer.  (Re-done every
    # grid step so it stays correct under megacore grid sharding.)
    zrow = jnp.zeros((1, W + 2, C), jnp.float32)
    zcol = jnp.zeros((H + 2, 1, C), jnp.float32)
    pad_ref[0:1, :, :] = zrow
    pad_ref[H + 1:H + 2, :, :] = zrow
    pad_ref[:, 0:1, :] = zcol
    pad_ref[:, W + 1:W + 2, :] = zcol

    def im2col_matmul(w_ref):
        # Gather the 9 shifted taps into a lane-major (H, W, 9C) buffer with
        # plain slice->slice copies, then run the whole 3x3 conv as a single
        # (H*W, 9C) x (9C, C) MXU matmul with f32 accumulation.
        for t in range(9):
            kh, kw = t // 3, t % 3
            col_ref[:, :, t * C:(t + 1) * C] = (
                pad_ref[kh:kh + H, kw:kw + W, :].astype(cdt))
        col2d = col_ref[...].reshape(H * W, 9 * C)
        return jnp.dot(col2d, w_ref[...],
                       preferred_element_type=jnp.float32)  # (H*W, C) f32

    # conv1 + bias + time embedding + ReLU (fused epilogue).
    pad_ref[1:H + 1, 1:W + 1, :] = x
    h = jnp.maximum(im2col_matmul(w1_ref) + temb, 0.0)       # (H*W, C) f32

    # conv2 + bias, then the residual add.
    pad_ref[1:H + 1, 1:W + 1, :] = h.reshape(H, W, C)
    y = im2col_matmul(w2_ref) + b2_ref[...]                  # (H*W, C) f32
    o_ref[0] = (x + y.reshape(H, W, C)).astype(o_ref.dtype)


def prepare_params(params, compute_dtype=jnp.float32):
    """One-time packing of PyTorch-layout params for the kernel.

    params = (w1 OIHW, b1, w2 OIHW, b2, wt (out, in), bt)
    Conv weights: OIHW -> HWIO -> (9*C_in, C_out) im2col layout.
    Linear weight: (out, in) -> (in, out).
    Biases stay float32 (they are added to f32 accumulators).
    """
    w1, b1, w2, b2, wt, bt = params
    C = w1.shape[0]

    def pack(w):
        return jnp.transpose(w, (2, 3, 1, 0)).reshape(9 * C, C).astype(compute_dtype)

    return (pack(w1), b1.reshape(1, C).astype(jnp.float32),
            pack(w2), b2.reshape(1, C).astype(jnp.float32),
            wt.T.astype(compute_dtype), bt.reshape(1, C).astype(jnp.float32))


def residual_block_nhwc(x_nhwc, times, kparams):
    """Fast path: channels-last activations, pre-packed params."""
    B, H, W, C = x_nhwc.shape
    w1c, b1, w2c, b2, wt_io, bt = kparams
    cdt = w1c.dtype

    x_f32 = x_nhwc.astype(jnp.float32)
    times3 = times.astype(jnp.float32).reshape(B, 1, C)

    return pl.pallas_call(
        _residual_block_kernel,
        out_shape=jax.ShapeDtypeStruct((B, H, W, C), jnp.float32),
        grid=(B,),
        in_specs=[
            pl.BlockSpec((1, H, W, C), lambda b: (b, 0, 0, 0)),   # images
            pl.BlockSpec((1, 1, C), lambda b: (b, 0, 0)),         # times
            pl.BlockSpec((9 * C, C), lambda b: (0, 0)),           # conv1 w (im2col)
            pl.BlockSpec((1, C), lambda b: (0, 0)),               # conv1 b
            pl.BlockSpec((9 * C, C), lambda b: (0, 0)),           # conv2 w (im2col)
            pl.BlockSpec((1, C), lambda b: (0, 0)),               # conv2 b
            pl.BlockSpec((C, C), lambda b: (0, 0)),               # time linear w
            pl.BlockSpec((1, C), lambda b: (0, 0)),               # time linear b
        ],
        out_specs=pl.BlockSpec((1, H, W, C), lambda b: (b, 0, 0, 0)),
        scratch_shapes=[
            pltpu.VMEM((H + 2, W + 2, C), jnp.float32),   # padded activations
            pltpu.VMEM((H, W, 9 * C), cdt),               # im2col buffer
        ],
        compiler_params=pltpu.CompilerParams(
            dimension_semantics=("parallel",)),
        input_output_aliases={0: 0},
    )(x_f32, times3, w1c, b1, w2c, b2, wt_io, bt)


def residual_block_nchw(images_nchw, times, kparams):
    """NCHW adapter matching the PyTorch module interface.

    A channels-last model should call residual_block_nhwc directly and keep
    activations NHWC end to end; these two transposes are layout plumbing.
    """
    x_nhwc = jnp.transpose(images_nchw, (0, 2, 3, 1))
    out_nhwc = residual_block_nhwc(x_nhwc, times, kparams)
    return jnp.transpose(out_nhwc, (0, 3, 1, 2))


def residual_block_reference(images, times, params):
    """Pure-JAX reference with PyTorch (NCHW / OIHW) conventions."""
    w1, b1, w2, b2, wt, bt = params

    def conv(x, w, b):
        y = lax.conv_general_dilated(
            x, w, window_strides=(1, 1), padding="SAME",
            dimension_numbers=("NCHW", "OIHW", "NCHW"))
        return y + b[None, :, None, None]

    t = times @ wt.T + bt
    h = conv(images, w1, b1) + t[:, :, None, None]
    h = jnp.maximum(h, 0.0)
    h = conv(h, w2, b2)
    return images + h


if __name__ == "__main__":
    B, C, H, W = 2, 4, 16, 16   # width = 4

    key = jax.random.PRNGKey(0)
    k_img, k_t, k_w1, k_b1, k_w2, k_b2, k_wt, k_bt = jax.random.split(key, 8)

    images = jax.random.normal(k_img, (B, C, H, W), jnp.float32)
    times = jax.random.normal(k_t, (B, C), jnp.float32)

    params = (
        0.1 * jax.random.normal(k_w1, (C, C, 3, 3), jnp.float32),  # conv1 OIHW
        0.1 * jax.random.normal(k_b1, (C,), jnp.float32),
        0.1 * jax.random.normal(k_w2, (C, C, 3, 3), jnp.float32),  # conv2 OIHW
        0.1 * jax.random.normal(k_b2, (C,), jnp.float32),
        0.1 * jax.random.normal(k_wt, (C, C), jnp.float32),        # Linear (out,in)
        0.1 * jax.random.normal(k_bt, (C,), jnp.float32),
    )

    ref = jax.block_until_ready(residual_block_reference(images, times, params))

    # f32 compute path.
    kparams_f32 = prepare_params(params, jnp.float32)
    run_f32 = jax.jit(lambda x, t: residual_block_nchw(x, t, kparams_f32))
    out = jax.block_until_ready(run_f32(images, times))
    assert out.shape == (B, C, H, W) and out.dtype == jnp.float32
    assert jnp.allclose(out, ref, atol=3e-4, rtol=3e-4), "f32 kernel mismatch"

    # bf16 matmul-operand path (v6e/v7x MXU), f32 accumulation -> looser tol.
    kparams_bf16 = prepare_params(params, jnp.bfloat16)
    run_bf16 = jax.jit(lambda x, t: residual_block_nchw(x, t, kparams_bf16))
    out_bf16 = jax.block_until_ready(run_bf16(images, times))
    assert out_bf16.shape == (B, C, H, W)
    assert jnp.allclose(out_bf16, ref, atol=5e-2, rtol=5e-2), "bf16 kernel mismatch"

    print("KERNEL_OK")
</pallas_src>

<mosaic_0001>
module attributes {stable_mosaic.version = 11 : i64} {
  func.func @_residual_block_kernel(%arg0: i32, %arg1: memref<1x16x16x4xf32, #tpu.memory_space<vmem>>, %arg2: memref<1x1x4xf32, #tpu.memory_space<vmem>>, %arg3: memref<36x4xf32, #tpu.memory_space<vmem>>, %arg4: memref<1x4xf32, #tpu.memory_space<vmem>>, %arg5: memref<36x4xf32, #tpu.memory_space<vmem>>, %arg6: memref<1x4xf32, #tpu.memory_space<vmem>>, %arg7: memref<4x4xf32, #tpu.memory_space<vmem>>, %arg8: memref<1x4xf32, #tpu.memory_space<vmem>>, %arg9: memref<1x16x16x4xf32, #tpu.memory_space<vmem>>, %arg10: memref<18x18x4xf32, #tpu.memory_space<vmem>>, %arg11: memref<16x16x36xf32, #tpu.memory_space<vmem>>) attributes {dimension_semantics = [#tpu.dimension_semantics<parallel>], iteration_bounds = array<i64: 2>, scalar_prefetch = 0 : i64, scratch_operands = 2 : i64, tpu.core_type = #tpu.core_type<tc>, window_params = [{transform_indices = @transform_0, window_bounds = array<i64: 1, 16, 16, 4>}, {transform_indices = @transform_1, window_bounds = array<i64: 1, 1, 4>}, {pipeline_mode = #tpu.pipeline_mode<synchronous>, transform_indices = @transform_2, window_bounds = array<i64: 36, 4>}, {pipeline_mode = #tpu.pipeline_mode<synchronous>, transform_indices = @transform_3, window_bounds = array<i64: 1, 4>}, {pipeline_mode = #tpu.pipeline_mode<synchronous>, transform_indices = @transform_4, window_bounds = array<i64: 36, 4>}, {pipeline_mode = #tpu.pipeline_mode<synchronous>, transform_indices = @transform_5, window_bounds = array<i64: 1, 4>}, {pipeline_mode = #tpu.pipeline_mode<synchronous>, transform_indices = @transform_6, window_bounds = array<i64: 4, 4>}, {pipeline_mode = #tpu.pipeline_mode<synchronous>, transform_indices = @transform_7, window_bounds = array<i64: 1, 4>}, {transform_indices = @transform_8, window_bounds = array<i64: 1, 16, 16, 4>}]} {
    %c0 = arith.constant 0 : index
    %c0_0 = arith.constant 0 : index
    %c0_1 = arith.constant 0 : index
    %c0_2 = arith.constant 0 : index
    %0 = vector.load %arg1[%c0, %c0_0, %c0_1, %c0_2] : memref<1x16x16x4xf32, #tpu.memory_space<vmem>>, vector<1x16x16x4xf32>
    %1 = vector.shape_cast %0 : vector<1x16x16x4xf32> to vector<16x16x4xf32>
    %c0_3 = arith.constant 0 : index
    %c0_4 = arith.constant 0 : index
    %c0_5 = arith.constant 0 : index
    %2 = vector.load %arg2[%c0_3, %c0_4, %c0_5] : memref<1x1x4xf32, #tpu.memory_space<vmem>>, vector<1x1x4xf32>
    %3 = vector.shape_cast %2 : vector<1x1x4xf32> to vector<1x4xf32>
    %c0_6 = arith.constant 0 : index
    %c0_7 = arith.constant 0 : index
    %4 = vector.load %arg7[%c0_6, %c0_7] : memref<4x4xf32, #tpu.memory_space<vmem>>, vector<4x4xf32>
    %cst = arith.constant dense<0.000000e+00> : vector<1x4xf32>
    %5 = tpu.matmul %3, %4, %cst {dimension_numbers = #tpu.dot_dimension_numbers<[1], [0], [0], [1], [0, 0, 1, 1], [], []>} : vector<1x4xf32>, vector<4x4xf32>, vector<1x4xf32> -> vector<1x4xf32>
    %c0_8 = arith.constant 0 : index
    %c0_9 = arith.constant 0 : index
    %6 = vector.load %arg8[%c0_8, %c0_9] : memref<1x4xf32, #tpu.memory_space<vmem>>, vector<1x4xf32>
    %7 = arith.addf %5, %6 : vector<1x4xf32>
    %c0_10 = arith.constant 0 : index
    %c0_11 = arith.constant 0 : index
    %8 = vector.load %arg4[%c0_10, %c0_11] : memref<1x4xf32, #tpu.memory_space<vmem>>, vector<1x4xf32>
    %9 = arith.addf %7, %8 : vector<1x4xf32>
    %cst_12 = arith.constant 0.000000e+00 : f32
    %10 = vector.broadcast %cst_12 : f32 to vector<1x18x4xf32>
    %cst_13 = arith.constant 0.000000e+00 : f32
    %11 = vector.broadcast %cst_13 : f32 to vector<18x1x4xf32>
    %c0_14 = arith.constant 0 : index
    %c0_15 = arith.constant 0 : index
    %c0_16 = arith.constant 0 : index
    %12 = vector.load %arg10[%c0_14, %c0_15, %c0_16] : memref<18x18x4xf32, #tpu.memory_space<vmem>>, vector<1x18x4xf32>
    tpu.vector_store %arg10[%c0_14, %c0_15, %c0_16], %10 {strides = array<i32>} : memref<18x18x4xf32, #tpu.memory_space<vmem>>, vector<1x18x4xf32>,
    %c17 = arith.constant 17 : index
    %c0_17 = arith.constant 0 : index
    %c0_18 = arith.constant 0 : index
    %13 = vector.load %arg10[%c17, %c0_17, %c0_18] : memref<18x18x4xf32, #tpu.memory_space<vmem>>, vector<1x18x4xf32>
    tpu.vector_store %arg10[%c17, %c0_17, %c0_18], %10 {strides = array<i32>} : memref<18x18x4xf32, #tpu.memory_space<vmem>>, vector<1x18x4xf32>,
    %c0_19 = arith.constant 0 : index
    %c0_20 = arith.constant 0 : index
    %c0_21 = arith.constant 0 : index
    %14 = vector.load %arg10[%c0_19, %c0_20, %c0_21] : memref<18x18x4xf32, #tpu.memory_space<vmem>>, vector<18x1x4xf32>
    tpu.vector_store %arg10[%c0_19, %c0_20, %c0_21], %11 {strides = array<i32>} : memref<18x18x4xf32, #tpu.memory_space<vmem>>, vector<18x1x4xf32>,
    %c0_22 = arith.constant 0 : index
    %c17_23 = arith.constant 17 : index
    %c0_24 = arith.constant 0 : index
    %15 = vector.load %arg10[%c0_22, %c17_23, %c0_24] : memref<18x18x4xf32, #tpu.memory_space<vmem>>, vector<18x1x4xf32>
    tpu.vector_store %arg10[%c0_22, %c17_23, %c0_24], %11 {strides = array<i32>} : memref<18x18x4xf32, #tpu.memory_space<vmem>>, vector<18x1x4xf32>,
    %c1 = arith.constant 1 : index
    %c1_25 = arith.constant 1 : index
    %c0_26 = arith.constant 0 : index
    %16 = vector.load %arg10[%c1, %c1_25, %c0_26] : memref<18x18x4xf32, #tpu.memory_space<vmem>>, vector<16x16x4xf32>
    tpu.vector_store %arg10[%c1, %c1_25, %c0_26], %1 {strides = array<i32>} : memref<18x18x4xf32, #tpu.memory_space<vmem>>, vector<16x16x4xf32>,
    %c0_27 = arith.constant 0 : index
    %c0_28 = arith.constant 0 : index
    %c0_29 = arith.constant 0 : index
    %17 = vector.load %arg10[%c0_27, %c0_28, %c0_29] : memref<18x18x4xf32, #tpu.memory_space<vmem>>, vector<16x16x4xf32>
    %c0_30 = arith.constant 0 : index
    %c0_31 = arith.constant 0 : index
    %c0_32 = arith.constant 0 : index
    %18 = vector.load %arg11[%c0_30, %c0_31, %c0_32] : memref<16x16x36xf32, #tpu.memory_space<vmem>>, vector<16x16x4xf32>
    tpu.vector_store %arg11[%c0_30, %c0_31, %c0_32], %17 {strides = array<i32>} : memref<16x16x36xf32, #tpu.memory_space<vmem>>, vector<16x16x4xf32>,
    %c0_33 = arith.constant 0 : index
    %c1_34 = arith.constant 1 : index
    %c0_35 = arith.constant 0 : index
    %19 = vector.load %arg10[%c0_33, %c1_34, %c0_35] : memref<18x18x4xf32, #tpu.memory_space<vmem>>, vector<16x16x4xf32>
    %c0_36 = arith.constant 0 : index
    %c0_37 = arith.constant 0 : index
    %c4 = arith.constant 4 : index
    %20 = vector.load %arg11[%c0_36, %c0_37, %c4] : memref<16x16x36xf32, #tpu.memory_space<vmem>>, vector<16x16x4xf32>
    tpu.vector_store %arg11[%c0_36, %c0_37, %c4], %19 {strides = array<i32>} : memref<16x16x36xf32, #tpu.memory_space<vmem>>, vector<16x16x4xf32>,
    %c0_38 = arith.constant 0 : index
    %c2 = arith.constant 2 : index
    %c0_39 = arith.constant 0 : index
    %21 = vector.load %arg10[%c0_38, %c2, %c0_39] : memref<18x18x4xf32, #tpu.memory_space<vmem>>, vector<16x16x4xf32>
    %c0_40 = arith.constant 0 : index
    %c0_41 = arith.constant 0 : index
    %c8 = arith.constant 8 : index
    %22 = vector.load %arg11[%c0_40, %c0_41, %c8] : memref<16x16x36xf32, #tpu.memory_space<vmem>>, vector<16x16x4xf32>
    tpu.vector_store %arg11[%c0_40, %c0_41, %c8], %21 {strides = array<i32>} : memref<16x16x36xf32, #tpu.memory_space<vmem>>, vector<16x16x4xf32>,
    %c1_42 = arith.constant 1 : index
    %c0_43 = arith.constant 0 : index
    %c0_44 = arith.constant 0 : index
    %23 = vector.load %arg10[%c1_42, %c0_43, %c0_44] : memref<18x18x4xf32, #tpu.memory_space<vmem>>, vector<16x16x4xf32>
    %c0_45 = arith.constant 0 : index
    %c0_46 = arith.constant 0 : index
    %c12 = arith.constant 12 : index
    %24 = vector.load %arg11[%c0_45, %c0_46, %c12] : memref<16x16x36xf32, #tpu.memory_space<vmem>>, vector<16x16x4xf32>
    tpu.vector_store %arg11[%c0_45, %c0_46, %c12], %23 {strides = array<i32>} : memref<16x16x36xf32, #tpu.memory_space<vmem>>, vector<16x16x4xf32>,
    %c1_47 = arith.constant 1 : index
    %c1_48 = arith.constant 1 : index
    %c0_49 = arith.constant 0 : index
    %25 = vector.load %arg10[%c1_47, %c1_48, %c0_49] : memref<18x18x4xf32, #tpu.memory_space<vmem>>, vector<16x16x4xf32>
    %c0_50 = arith.constant 0 : index
    %c0_51 = arith.constant 0 : index
    %c16 = arith.constant 16 : index
    %26 = vector.load %arg11[%c0_50, %c0_51, %c16] : memref<16x16x36xf32, #tpu.memory_space<vmem>>, vector<16x16x4xf32>
    tpu.vector_store %arg11[%c0_50, %c0_51, %c16], %25 {strides = array<i32>} : memref<16x16x36xf32, #tpu.memory_space<vmem>>, vector<16x16x4xf32>,
    %c1_52 = arith.constant 1 : index
    %c2_53 = arith.constant 2 : index
    %c0_54 = arith.constant 0 : index
    %27 = vector.load %arg10[%c1_52, %c2_53, %c0_54] : memref<18x18x4xf32, #tpu.memory_space<vmem>>, vector<16x16x4xf32>
    %c0_55 = arith.constant 0 : index
    %c0_56 = arith.constant 0 : index
    %c20 = arith.constant 20 : index
    %28 = vector.load %arg11[%c0_55, %c0_56, %c20] : memref<16x16x36xf32, #tpu.memory_space<vmem>>, vector<16x16x4xf32>
    tpu.vector_store %arg11[%c0_55, %c0_56, %c20], %27 {strides = array<i32>} : memref<16x16x36xf32, #tpu.memory_space<vmem>>, vector<16x16x4xf32>,
    %c2_57 = arith.constant 2 : index
    %c0_58 = arith.constant 0 : index
    %c0_59 = arith.constant 0 : index
    %29 = vector.load %arg10[%c2_57, %c0_58, %c0_59] : memref<18x18x4xf32, #tpu.memory_space<vmem>>, vector<16x16x4xf32>
    %c0_60 = arith.constant 0 : index
    %c0_61 = arith.constant 0 : index
    %c24 = arith.constant 24 : index
    %30 = vector.load %arg11[%c0_60, %c0_61, %c24] : memref<16x16x36xf32, #tpu.memory_space<vmem>>, vector<16x16x4xf32>
    tpu.vector_store %arg11[%c0_60, %c0_61, %c24], %29 {strides = array<i32>} : memref<16x16x36xf32, #tpu.memory_space<vmem>>, vector<16x16x4xf32>,
    %c2_62 = arith.constant 2 : index
    %c1_63 = arith.constant 1 : index
    %c0_64 = arith.constant 0 : index
    %31 = vector.load %arg10[%c2_62, %c1_63, %c0_64] : memref<18x18x4xf32, #tpu.memory_space<vmem>>, vector<16x16x4xf32>
    %c0_65 = arith.constant 0 : index
    %c0_66 = arith.constant 0 : index
    %c28 = arith.constant 28 : index
    %32 = vector.load %arg11[%c0_65, %c0_66, %c28] : memref<16x16x36xf32, #tpu.memory_space<vmem>>, vector<16x16x4xf32>
    tpu.vector_store %arg11[%c0_65, %c0_66, %c28], %31 {strides = array<i32>} : memref<16x16x36xf32, #tpu.memory_space<vmem>>, vector<16x16x4xf32>,
    %c2_67 = arith.constant 2 : index
    %c2_68 = arith.constant 2 : index
    %c0_69 = arith.constant 0 : index
    %33 = vector.load %arg10[%c2_67, %c2_68, %c0_69] : memref<18x18x4xf32, #tpu.memory_space<vmem>>, vector<16x16x4xf32>
    %c0_70 = arith.constant 0 : index
    %c0_71 = arith.constant 0 : index
    %c32 = arith.constant 32 : index
    %34 = vector.load %arg11[%c0_70, %c0_71, %c32] : memref<16x16x36xf32, #tpu.memory_space<vmem>>, vector<16x16x4xf32>
    tpu.vector_store %arg11[%c0_70, %c0_71, %c32], %33 {strides = array<i32>} : memref<16x16x36xf32, #tpu.memory_space<vmem>>, vector<16x16x4xf32>,
    %c0_72 = arith.constant 0 : index
    %c0_73 = arith.constant 0 : index
    %c0_74 = arith.constant 0 : index
    %35 = vector.load %arg11[%c0_72, %c0_73, %c0_74] : memref<16x16x36xf32, #tpu.memory_space<vmem>>, vector<16x16x36xf32>
    %36 = vector.shape_cast %35 : vector<16x16x36xf32> to vector<256x36xf32>
    %c0_75 = arith.constant 0 : index
    %c0_76 = arith.constant 0 : index
    %37 = vector.load %arg3[%c0_75, %c0_76] : memref<36x4xf32, #tpu.memory_space<vmem>>, vector<36x4xf32>
    %cst_77 = arith.constant dense<0.000000e+00> : vector<256x4xf32>
    %38 = tpu.matmul %36, %37, %cst_77 {dimension_numbers = #tpu.dot_dimension_numbers<[1], [0], [0], [1], [0, 0, 1, 1], [], []>} : vector<256x36xf32>, vector<36x4xf32>, vector<256x4xf32> -> vector<256x4xf32>
    %39 = vector.broadcast %9 : vector<1x4xf32> to vector<256x4xf32>
    %40 = arith.addf %38, %39 : vector<256x4xf32>
    %cst_78 = arith.constant 0.000000e+00 : f32
    %41 = vector.broadcast %cst_78 : f32 to vector<256x4xf32>
    %42 = arith.maximumf %40, %41 : vector<256x4xf32>
    %43 = vector.shape_cast %42 : vector<256x4xf32> to vector<16x16x4xf32>
    %c1_79 = arith.constant 1 : index
    %c1_80 = arith.constant 1 : index
    %c0_81 = arith.constant 0 : index
    %44 = vector.load %arg10[%c1_79, %c1_80, %c0_81] : memref<18x18x4xf32, #tpu.memory_space<vmem>>, vector<16x16x4xf32>
    tpu.vector_store %arg10[%c1_79, %c1_80, %c0_81], %43 {strides = array<i32>} : memref<18x18x4xf32, #tpu.memory_space<vmem>>, vector<16x16x4xf32>,
    %c0_82 = arith.constant 0 : index
    %c0_83 = arith.constant 0 : index
    %c0_84 = arith.constant 0 : index
    %45 = vector.load %arg10[%c0_82, %c0_83, %c0_84] : memref<18x18x4xf32, #tpu.memory_space<vmem>>, vector<16x16x4xf32>
    %c0_85 = arith.constant 0 : index
    %c0_86 = arith.constant 0 : index
    %c0_87 = arith.constant 0 : index
    %46 = vector.load %arg11[%c0_85, %c0_86, %c0_87] : memref<16x16x36xf32, #tpu.memory_space<vmem>>, vector<16x16x4xf32>
    tpu.vector_store %arg11[%c0_85, %c0_86, %c0_87], %45 {strides = array<i32>} : memref<16x16x36xf32, #tpu.memory_space<vmem>>, vector<16x16x4xf32>,
    %c0_88 = arith.constant 0 : index
    %c1_89 = arith.constant 1 : index
    %c0_90 = arith.constant 0 : index
    %47 = vector.load %arg10[%c0_88, %c1_89, %c0_90] : memref<18x18x4xf32, #tpu.memory_space<vmem>>, vector<16x16x4xf32>
    %c0_91 = arith.constant 0 : index
    %c0_92 = arith.constant 0 : index
    %c4_93 = arith.constant 4 : index
    %48 = vector.load %arg11[%c0_91, %c0_92, %c4_93] : memref<16x16x36xf32, #tpu.memory_space<vmem>>, vector<16x16x4xf32>
    tpu.vector_store %arg11[%c0_91, %c0_92, %c4_93], %47 {strides = array<i32>} : memref<16x16x36xf32, #tpu.memory_space<vmem>>, vector<16x16x4xf32>,
    %c0_94 = arith.constant 0 : index
    %c2_95 = arith.constant 2 : index
    %c0_96 = arith.constant 0 : index
    %49 = vector.load %arg10[%c0_94, %c2_95, %c0_96] : memref<18x18x4xf32, #tpu.memory_space<vmem>>, vector<16x16x4xf32>
    %c0_97 = arith.constant 0 : index
    %c0_98 = arith.constant 0 : index
    %c8_99 = arith.constant 8 : index
    %50 = vector.load %arg11[%c0_97, %c0_98, %c8_99] : memref<16x16x36xf32, #tpu.memory_space<vmem>>, vector<16x16x4xf32>
    tpu.vector_store %arg11[%c0_97, %c0_98, %c8_99], %49 {strides = array<i32>} : memref<16x16x36xf32, #tpu.memory_space<vmem>>, vector<16x16x4xf32>,
    %c1_100 = arith.constant 1 : index
    %c0_101 = arith.constant 0 : index
    %c0_102 = arith.constant 0 : index
    %51 = vector.load %arg10[%c1_100, %c0_101, %c0_102] : memref<18x18x4xf32, #tpu.memory_space<vmem>>, vector<16x16x4xf32>
    %c0_103 = arith.constant 0 : index
    %c0_104 = arith.constant 0 : index
    %c12_105 = arith.constant 12 : index
    %52 = vector.load %arg11[%c0_103, %c0_104, %c12_105] : memref<16x16x36xf32, #tpu.memory_space<vmem>>, vector<16x16x4xf32>
    tpu.vector_store %arg11[%c0_103, %c0_104, %c12_105], %51 {strides = array<i32>} : memref<16x16x36xf32, #tpu.memory_space<vmem>>, vector<16x16x4xf32>,
    %c1_106 = arith.constant 1 : index
    %c1_107 = arith.constant 1 : index
    %c0_108 = arith.constant 0 : index
    %53 = vector.load %arg10[%c1_106, %c1_107, %c0_108] : memref<18x18x4xf32, #tpu.memory_space<vmem>>, vector<16x16x4xf32>
    %c0_109 = arith.constant 0 : index
    %c0_110 = arith.constant 0 : index
    %c16_111 = arith.constant 16 : index
    %54 = vector.load %arg11[%c0_109, %c0_110, %c16_111] : memref<16x16x36xf32, #tpu.memory_space<vmem>>, vector<16x16x4xf32>
    tpu.vector_store %arg11[%c0_109, %c0_110, %c16_111], %53 {strides = array<i32>} : memref<16x16x36xf32, #tpu.memory_space<vmem>>, vector<16x16x4xf32>,
    %c1_112 = arith.constant 1 : index
    %c2_113 = arith.constant 2 : index
    %c0_114 = arith.constant 0 : index
    %55 = vector.load %arg10[%c1_112, %c2_113, %c0_114] : memref<18x18x4xf32, #tpu.memory_space<vmem>>, vector<16x16x4xf32>
    %c0_115 = arith.constant 0 : index
    %c0_116 = arith.constant 0 : index
    %c20_117 = arith.constant 20 : index
    %56 = vector.load %arg11[%c0_115, %c0_116, %c20_117] : memref<16x16x36xf32, #tpu.memory_space<vmem>>, vector<16x16x4xf32>
    tpu.vector_store %arg11[%c0_115, %c0_116, %c20_117], %55 {strides = array<i32>} : memref<16x16x36xf32, #tpu.memory_space<vmem>>, vector<16x16x4xf32>,
    %c2_118 = arith.constant 2 : index
    %c0_119 = arith.constant 0 : index
    %c0_120 = arith.constant 0 : index
    %57 = vector.load %arg10[%c2_118, %c0_119, %c0_120] : memref<18x18x4xf32, #tpu.memory_space<vmem>>, vector<16x16x4xf32>
    %c0_121 = arith.constant 0 : index
    %c0_122 = arith.constant 0 : index
    %c24_123 = arith.constant 24 : index
    %58 = vector.load %arg11[%c0_121, %c0_122, %c24_123] : memref<16x16x36xf32, #tpu.memory_space<vmem>>, vector<16x16x4xf32>
    tpu.vector_store %arg11[%c0_121, %c0_122, %c24_123], %57 {strides = array<i32>} : memref<16x16x36xf32, #tpu.memory_space<vmem>>, vector<16x16x4xf32>,
    %c2_124 = arith.constant 2 : index
    %c1_125 = arith.constant 1 : index
    %c0_126 = arith.constant 0 : index
    %59 = vector.load %arg10[%c2_124, %c1_125, %c0_126] : memref<18x18x4xf32, #tpu.memory_space<vmem>>, vector<16x16x4xf32>
    %c0_127 = arith.constant 0 : index
    %c0_128 = arith.constant 0 : index
    %c28_129 = arith.constant 28 : index
    %60 = vector.load %arg11[%c0_127, %c0_128, %c28_129] : memref<16x16x36xf32, #tpu.memory_space<vmem>>, vector<16x16x4xf32>
    tpu.vector_store %arg11[%c0_127, %c0_128, %c28_129], %59 {strides = array<i32>} : memref<16x16x36xf32, #tpu.memory_space<vmem>>, vector<16x16x4xf32>,
    %c2_130 = arith.constant 2 : index
    %c2_131 = arith.constant 2 : index
    %c0_132 = arith.constant 0 : index
    %61 = vector.load %arg10[%c2_130, %c2_131, %c0_132] : memref<18x18x4xf32, #tpu.memory_space<vmem>>, vector<16x16x4xf32>
    %c0_133 = arith.constant 0 : index
    %c0_134 = arith.constant 0 : index
    %c32_135 = arith.constant 32 : index
    %62 = vector.load %arg11[%c0_133, %c0_134, %c32_135] : memref<16x16x36xf32, #tpu.memory_space<vmem>>, vector<16x16x4xf32>
    tpu.vector_store %arg11[%c0_133, %c0_134, %c32_135], %61 {strides = array<i32>} : memref<16x16x36xf32, #tpu.memory_space<vmem>>, vector<16x16x4xf32>,
    %c0_136 = arith.constant 0 : index
    %c0_137 = arith.constant 0 : index
    %c0_138 = arith.constant 0 : index
    %63 = vector.load %arg11[%c0_136, %c0_137, %c0_138] : memref<16x16x36xf32, #tpu.memory_space<vmem>>, vector<16x16x36xf32>
    %64 = vector.shape_cast %63 : vector<16x16x36xf32> to vector<256x36xf32>
    %c0_139 = arith.constant 0 : index
    %c0_140 = arith.constant 0 : index
    %65 = vector.load %arg5[%c0_139, %c0_140] : memref<36x4xf32, #tpu.memory_space<vmem>>, vector<36x4xf32>
    %cst_141 = arith.constant dense<0.000000e+00> : vector<256x4xf32>
    %66 = tpu.matmul %64, %65, %cst_141 {dimension_numbers = #tpu.dot_dimension_numbers<[1], [0], [0], [1], [0, 0, 1, 1], [], []>} : vector<256x36xf32>, vector<36x4xf32>, vector<256x4xf32> -> vector<256x4xf32>
    %c0_142 = arith.constant 0 : index
    %c0_143 = arith.constant 0 : index
    %67 = vector.load %arg6[%c0_142, %c0_143] : memref<1x4xf32, #tpu.memory_space<vmem>>, vector<1x4xf32>
    %68 = vector.broadcast %67 : vector<1x4xf32> to vector<256x4xf32>
    %69 = arith.addf %66, %68 : vector<256x4xf32>
    %70 = vector.shape_cast %69 : vector<256x4xf32> to vector<16x16x4xf32>
    %71 = arith.addf %1, %70 : vector<16x16x4xf32>
    %c0_144 = arith.constant 0 : index
    %c0_145 = arith.constant 0 : index
    %c0_146 = arith.constant 0 : index
    %c0_147 = arith.constant 0 : index
    %72 = vector.load %arg9[%c0_144, %c0_145, %c0_146, %c0_147] : memref<1x16x16x4xf32, #tpu.memory_space<vmem>>, vector<1x16x16x4xf32>
    %73 = vector.shape_cast %72 : vector<1x16x16x4xf32> to vector<16x16x4xf32>
    %74 = vector.shape_cast %71 : vector<16x16x4xf32> to vector<1x16x16x4xf32>
    tpu.vector_store %arg9[%c0_144, %c0_145, %c0_146, %c0_147], %74 {strides = array<i32>} : memref<1x16x16x4xf32, #tpu.memory_space<vmem>>, vector<1x16x16x4xf32>,
    return
  }
  func.func @transform_0(%arg0: i32) -> (i32, i32, i32, i32) {
    %c0_i32 = arith.constant 0 : i32
    %c0_i32_0 = arith.constant 0 : i32
    %c0_i32_1 = arith.constant 0 : i32
    %c0_i32_2 = arith.constant 0 : i32
    return %arg0, %c0_i32, %c0_i32_0, %c0_i32_1 : i32, i32, i32, i32
  }
  func.func @transform_1(%arg0: i32) -> (i32, i32, i32) {
    %c0_i32 = arith.constant 0 : i32
    %c0_i32_0 = arith.constant 0 : i32
    %c0_i32_1 = arith.constant 0 : i32
    return %arg0, %c0_i32, %c0_i32_0 : i32, i32, i32
  }
  func.func @transform_2(%arg0: i32) -> (i32, i32) {
    %c0_i32 = arith.constant 0 : i32
    %c0_i32_0 = arith.constant 0 : i32
    %c0_i32_1 = arith.constant 0 : i32
    return %c0_i32, %c0_i32_0 : i32, i32
  }
  func.func @transform_3(%arg0: i32) -> (i32, i32) {
    %c0_i32 = arith.constant 0 : i32
    %c0_i32_0 = arith.constant 0 : i32
    %c0_i32_1 = arith.constant 0 : i32
    return %c0_i32, %c0_i32_0 : i32, i32
  }
  func.func @transform_4(%arg0: i32) -> (i32, i32) {
    %c0_i32 = arith.constant 0 : i32
    %c0_i32_0 = arith.constant 0 : i32
    %c0_i32_1 = arith.constant 0 : i32
    return %c0_i32, %c0_i32_0 : i32, i32
  }
  func.func @transform_5(%arg0: i32) -> (i32, i32) {
    %c0_i32 = arith.constant 0 : i32
    %c0_i32_0 = arith.constant 0 : i32
    %c0_i32_1 = arith.constant 0 : i32
    return %c0_i32, %c0_i32_0 : i32, i32
  }
  func.func @transform_6(%arg0: i32) -> (i32, i32) {
    %c0_i32 = arith.constant 0 : i32
    %c0_i32_0 = arith.constant 0 : i32
    %c0_i32_1 = arith.constant 0 : i32
    return %c0_i32, %c0_i32_0 : i32, i32
  }
  func.func @transform_7(%arg0: i32) -> (i32, i32) {
    %c0_i32 = arith.constant 0 : i32
    %c0_i32_0 = arith.constant 0 : i32
    %c0_i32_1 = arith.constant 0 : i32
    return %c0_i32, %c0_i32_0 : i32, i32
  }
  func.func @transform_8(%arg0: i32) -> (i32, i32, i32, i32) {
    %c0_i32 = arith.constant 0 : i32
    %c0_i32_0 = arith.constant 0 : i32
    %c0_i32_1 = arith.constant 0 : i32
    %c0_i32_2 = arith.constant 0 : i32
    return %arg0, %c0_i32, %c0_i32_0, %c0_i32_1 : i32, i32, i32, i32
  }
}

</mosaic_0001>

<llo_original>
// kernel: _lambda_.1
$region0: #{_lambda_.1}
  #allocation0 [shape = 'u32[]', space=smem, size = 0x4, offset = 0x4, fixed_abs, tag = 'smem constant byte address 0x4 - core index']
  #allocation1 [shape = 'u32[144,128]{1,0:T(1,128)}', space=vmem, size = 0x12000, scoped, tag = 'internal scratch']
  #allocation2 [shape = 'f32[18,18,4]{2,1,0:T(8,128)}', space=vmem, size = 0x36000, scoped, tag = 'scratch operand']
  #allocation3 [shape = 'f32[16,16,36]{2,1,0:T(8,128)}', space=vmem, size = 0x20000, scoped, tag = 'scratch operand']
  %s0 = inlined_call_operand.vmem [shape: f32[2,16,16,4], index: 0, kind: input, shape index: {}, may-alias: {0,8}]
  %s1 = inlined_call_operand.vmem [shape: f32[2,1,4], index: 1, kind: input, shape index: {}]
  %s2 = inlined_call_operand.vmem [shape: f32[36,4], index: 2, kind: input, shape index: {}]
  %s3 = inlined_call_operand.vmem [shape: f32[1,4], index: 3, kind: input, shape index: {}]
  %s4 = inlined_call_operand.vmem [shape: f32[36,4], index: 4, kind: input, shape index: {}]
  %s5 = inlined_call_operand.vmem [shape: f32[1,4], index: 5, kind: input, shape index: {}]
  %s6 = inlined_call_operand.vmem [shape: f32[4,4], index: 6, kind: input, shape index: {}]
  %s7 = inlined_call_operand.vmem [shape: f32[1,4], index: 7, kind: input, shape index: {}]
  %s8 = inlined_call_operand.vmem [shape: f32[2,16,16,4], index: 8, kind: output, shape index: {}, may-alias: {0,8}]
  %s9 = sld [smem:[#allocation0]]
  $region65: #{_lambda_.1} parent=0
    _
  %s11 = ssub.s32 1, %s9
  %s12 = scalar_select 0, %s11, %s9
  loop: start=0, step=1, limit=4
  $region2: #{_lambda_.1} parent=0 // loop_pre_header
    _
  $region3: #{_lambda_.1} parent=0 // loop_header
    %s14 = sphi 0, %s18
    %p15 = scmp.ge.s32.totalorder %s14, 4
    %s24 = sphi 0, %s26
    %s27 = sphi 0, %s24
    %s28 = sphi 0, %s27
    %s44 = sphi 0, %s28
    %s50 = sphi 0, %s52
    %s53 = sphi 0, %s50
    %s54 = sphi 0, %s53
    %s70 = sphi 0, %s54
    %s74 = sphi 0, %s74
    %s76 = sphi 0, %s74
    %s77 = sphi 0, %s76
    %s91 = sphi 0, %s77
    %s95 = sphi 0, %s95
    %s97 = sphi 0, %s95
    %s98 = sphi 0, %s97
    %s112 = sphi 0, %s98
    %s116 = sphi 0, %s116
    %s118 = sphi 0, %s116
    %s119 = sphi 0, %s118
    %s133 = sphi 0, %s119
    %s137 = sphi 0, %s137
    %s139 = sphi 0, %s137
    %s140 = sphi 0, %s139
    %s154 = sphi 0, %s140
    %s158 = sphi 0, %s158
    %s160 = sphi 0, %s158
    %s161 = sphi 0, %s160
    %s175 = sphi 0, %s161
    %s179 = sphi 0, %s179
    %s181 = sphi 0, %s179
    %s182 = sphi 0, %s181
    %s196 = sphi 0, %s182
    %s202 = sphi 0, %s204
    %s205 = sphi 0, %s202
    %s206 = sphi 0, %s205
    %s222 = sphi 0, %s206
  $region4: #{_lambda_.1} parent=0 // loop_header_branch
    %17 = sbr.rel (%p15) target = $region8
  $region5: #{_lambda_.1} parent=0 // loop_body
    %s19 = ssub.s32 %s14, 1
    %s20 = ssub.s32 %s14, 2
    %s21 = sadd.s32 %s14, 1
    %s22 = ssub.s32 %s14, %s21
    %p23 = scmp.eq.s32.totalorder %s22, 0
    %s25 = sadd.s32 %s24, 1
    %s26 = scalar_select %p23, %s24, %s25
    %p29 = pneg %p23
    %p30 = scmp.eq.s32.totalorder %s14, 1
    %p31 = por %p29, %p30
    %p32 = scmp.ne.s32.totalorder %s24, %s27
    %p33 = scmp.eq.s32.totalorder %s14, 0
    %p34 = por %p32, %p33
    %p35 = scmp.ne.s32.totalorder %s24, %s27
    %p36 = scmp.eq.s32.totalorder %s19, 1
    %p37 = por %p35, %p36
    %p38 = scmp.ne.s32.totalorder %s27, %s28
    %p39 = scmp.eq.s32.totalorder %s19, 0
    %p40 = por %p38, %p39
    %p41 = scmp.ne.s32.totalorder %s27, %s28
    %p42 = scmp.eq.s32.totalorder %s20, 1
    %p43 = por %p41, %p42
    %p45 = scmp.ne.s32.totalorder %s28, %s44
    %p46 = scmp.eq.s32.totalorder %s20, 0
    %p47 = por %p45, %p46
    %s48 = ssub.s32 %s14, %s21
    %p49 = scmp.eq.s32.totalorder %s48, 0
    %s51 = sadd.s32 %s50, 1
    %s52 = scalar_select %p49, %s50, %s51
    %p55 = pneg %p49
    %p56 = scmp.eq.s32.totalorder %s14, 1
    %p57 = por %p55, %p56
    %p58 = scmp.ne.s32.totalorder %s50, %s53
    %p59 = scmp.eq.s32.totalorder %s14, 0
    %p60 = por %p58, %p59
    %p61 = scmp.ne.s32.totalorder %s50, %s53
    %p62 = scmp.eq.s32.totalorder %s19, 1
    %p63 = por %p61, %p62
    %p64 = scmp.ne.s32.totalorder %s53, %s54
    %p65 = scmp.eq.s32.totalorder %s19, 0
    %p66 = por %p64, %p65
    %p67 = scmp.ne.s32.totalorder %s53, %s54
    %p68 = scmp.eq.s32.totalorder %s20, 1
    %p69 = por %p67, %p68
    %p71 = scmp.ne.s32.totalorder %s54, %s70
    %p72 = scmp.eq.s32.totalorder %s20, 0
    %p73 = por %p71, %p72
    %s75 = sadd.s32 %s74, 1
    %p78 = scmp.eq.s32.totalorder %s14, 1
    %p79 = scmp.ne.s32.totalorder %s74, %s76
    %p80 = scmp.eq.s32.totalorder %s14, 0
    %p81 = por %p79, %p80
    %p82 = scmp.ne.s32.totalorder %s74, %s76
    %p83 = scmp.eq.s32.totalorder %s19, 1
    %p84 = por %p82, %p83
    %p85 = scmp.ne.s32.totalorder %s76, %s77
    %p86 = scmp.eq.s32.totalorder %s19, 0
    %p87 = por %p85, %p86
    %p88 = scmp.ne.s32.totalorder %s76, %s77
    %p89 = scmp.eq.s32.totalorder %s20, 1
    %p90 = por %p88, %p89
    %p92 = scmp.ne.s32.totalorder %s77, %s91
    %p93 = scmp.eq.s32.totalorder %s20, 0
    %p94 = por %p92, %p93
    %s96 = sadd.s32 %s95, 1
    %p99 = scmp.eq.s32.totalorder %s14, 1
    %p100 = scmp.ne.s32.totalorder %s95, %s97
    %p101 = scmp.eq.s32.totalorder %s14, 0
    %p102 = por %p100, %p101
    %p103 = scmp.ne.s32.totalorder %s95, %s97
    %p104 = scmp.eq.s32.totalorder %s19, 1
    %p105 = por %p103, %p104
    %p106 = scmp.ne.s32.totalorder %s97, %s98
    %p107 = scmp.eq.s32.totalorder %s19, 0
    %p108 = por %p106, %p107
    %p109 = scmp.ne.s32.totalorder %s97, %s98
    %p110 = scmp.eq.s32.totalorder %s20, 1
    %p111 = por %p109, %p110
    %p113 = scmp.ne.s32.totalorder %s98, %s112
    %p114 = scmp.eq.s32.totalorder %s20, 0
    %p115 = por %p113, %p114
    %s117 = sadd.s32 %s116, 1
    %p120 = scmp.eq.s32.totalorder %s14, 1
    %p121 = scmp.ne.s32.totalorder %s116, %s118
    %p122 = scmp.eq.s32.totalorder %s14, 0
    %p123 = por %p121, %p122
    %p124 = scmp.ne.s32.totalorder %s116, %s118
    %p125 = scmp.eq.s32.totalorder %s19, 1
    %p126 = por %p124, %p125
    %p127 = scmp.ne.s32.totalorder %s118, %s119
    %p128 = scmp.eq.s32.totalorder %s19, 0
    %p129 = por %p127, %p128
    %p130 = scmp.ne.s32.totalorder %s118, %s119
    %p131 = scmp.eq.s32.totalorder %s20, 1
    %p132 = por %p130, %p131
    %p134 = scmp.ne.s32.totalorder %s119, %s133
    %p135 = scmp.eq.s32.totalorder %s20, 0
    %p136 = por %p134, %p135
    %s138 = sadd.s32 %s137, 1
    %p141 = scmp.eq.s32.totalorder %s14, 1
    %p142 = scmp.ne.s32.totalorder %s137, %s139
    %p143 = scmp.eq.s32.totalorder %s14, 0
    %p144 = por %p142, %p143
    %p145 = scmp.ne.s32.totalorder %s137, %s139
    %p146 = scmp.eq.s32.totalorder %s19, 1
    %p147 = por %p145, %p146
    %p148 = scmp.ne.s32.totalorder %s139, %s140
    %p149 = scmp.eq.s32.totalorder %s19, 0
    %p150 = por %p148, %p149
    %p151 = scmp.ne.s32.totalorder %s139, %s140
    %p152 = scmp.eq.s32.totalorder %s20, 1
    %p153 = por %p151, %p152
    %p155 = scmp.ne.s32.totalorder %s140, %s154
    %p156 = scmp.eq.s32.totalorder %s20, 0
    %p157 = por %p155, %p156
    %s159 = sadd.s32 %s158, 1
    %p162 = scmp.eq.s32.totalorder %s14, 1
    %p163 = scmp.ne.s32.totalorder %s158, %s160
    %p164 = scmp.eq.s32.totalorder %s14, 0
    %p165 = por %p163, %p164
    %p166 = scmp.ne.s32.totalorder %s158, %s160
    %p167 = scmp.eq.s32.totalorder %s19, 1
    %p168 = por %p166, %p167
    %p169 = scmp.ne.s32.totalorder %s160, %s161
    %p170 = scmp.eq.s32.totalorder %s19, 0
    %p171 = por %p169, %p170
    %p172 = scmp.ne.s32.totalorder %s160, %s161
    %p173 = scmp.eq.s32.totalorder %s20, 1
    %p174 = por %p172, %p173
    %p176 = scmp.ne.s32.totalorder %s161, %s175
    %p177 = scmp.eq.s32.totalorder %s20, 0
    %p178 = por %p176, %p177
    %s180 = sadd.s32 %s179, 1
    %p183 = scmp.eq.s32.totalorder %s14, 1
    %p184 = scmp.ne.s32.totalorder %s179, %s181
    %p185 = scmp.eq.s32.totalorder %s14, 0
    %p186 = por %p184, %p185
    %p187 = scmp.ne.s32.totalorder %s179, %s181
    %p188 = scmp.eq.s32.totalorder %s19, 1
    %p189 = por %p187, %p188
    %p190 = scmp.ne.s32.totalorder %s181, %s182
    %p191 = scmp.eq.s32.totalorder %s19, 0
    %p192 = por %p190, %p191
    %p193 = scmp.ne.s32.totalorder %s181, %s182
    %p194 = scmp.eq.s32.totalorder %s20, 1
    %p195 = por %p193, %p194
    %p197 = scmp.ne.s32.totalorder %s182, %s196
    %p198 = scmp.eq.s32.totalorder %s20, 0
    %p199 = por %p197, %p198
    %s200 = ssub.s32 %s14, %s21
    %p201 = scmp.eq.s32.totalorder %s200, 0
    %s203 = sadd.s32 %s202, 1
    %s204 = scalar_select %p201, %s202, %s203
    %p207 = pneg %p201
    %p208 = scmp.eq.s32.totalorder %s14, 1
    %p209 = por %p207, %p208
    %p210 = scmp.ne.s32.totalorder %s202, %s205
    %p211 = scmp.eq.s32.totalorder %s14, 0
    %p212 = por %p210, %p211
    %p213 = scmp.ne.s32.totalorder %s202, %s205
    %p214 = scmp.eq.s32.totalorder %s19, 1
    %p215 = por %p213, %p214
    %p216 = scmp.ne.s32.totalorder %s205, %s206
    %p217 = scmp.eq.s32.totalorder %s19, 0
    %p218 = por %p216, %p217
    %p219 = scmp.ne.s32.totalorder %s205, %s206
    %p220 = scmp.eq.s32.totalorder %s20, 1
    %p221 = por %p219, %p220
    %p223 = scmp.ne.s32.totalorder %s206, %s222
    %p224 = scmp.eq.s32.totalorder %s20, 0
    %p225 = por %p223, %p224
    %p226 = scmp.le.s32.totalorder 1, %s14
    %p227 = scmp.lt.s32.totalorder %s14, 3
    %p228 = pnand %p226, %p227
    %p229 = pneg %p228
    // Predicated region
    $region9: #{_lambda_.1} parent=5 // pred_check
      _
    $region10: #{_lambda_.1} parent=5 // pred_check_branch
      %231 = sbr.rel (%p228) target = $region12
    $region11: #{_lambda_.1} parent=5 // pred_region
      %s232 = ssub.s32 %s14, 1
      // Predicated region
      $region13: #{_lambda_.1} parent=11 // pred_check
        %p233 = pneg %p87
      $region14: #{_lambda_.1} parent=11 // pred_check_branch
        %235 = sbr.rel (%p233) target = $region16
      $region15: #{_lambda_.1} parent=11 // pred_region
        _
      $region16: #{_lambda_.1} parent=11 // pred_fallthru
        _
      // Predicated region
      $region17: #{_lambda_.1} parent=11 // pred_check
        %p236 = pneg %p108
      $region18: #{_lambda_.1} parent=11 // pred_check_branch
        %238 = sbr.rel (%p236) target = $region20
      $region19: #{_lambda_.1} parent=11 // pred_region
        _
      $region20: #{_lambda_.1} parent=11 // pred_fallthru
        _
      // Predicated region
      $region21: #{_lambda_.1} parent=11 // pred_check
        %p239 = pneg %p129
      $region22: #{_lambda_.1} parent=11 // pred_check_branch
        %241 = sbr.rel (%p239) target = $region24
      $region23: #{_lambda_.1} parent=11 // pred_region
        _
      $region24: #{_lambda_.1} parent=11 // pred_fallthru
        _
      // Predicated region
      $region25: #{_lambda_.1} parent=11 // pred_check
        %p242 = pneg %p150
      $region26: #{_lambda_.1} parent=11 // pred_check_branch
        %244 = sbr.rel (%p242) target = $region28
      $region27: #{_lambda_.1} parent=11 // pred_region
        _
      $region28: #{_lambda_.1} parent=11 // pred_fallthru
        _
      // Predicated region
      $region29: #{_lambda_.1} parent=11 // pred_check
        %p245 = pneg %p171
      $region30: #{_lambda_.1} parent=11 // pred_check_branch
        %247 = sbr.rel (%p245) target = $region32
      $region31: #{_lambda_.1} parent=11 // pred_region
        _
      $region32: #{_lambda_.1} parent=11 // pred_fallthru
        _
      // Predicated region
      $region33: #{_lambda_.1} parent=11 // pred_check
        %p248 = pneg %p192
      $region34: #{_lambda_.1} parent=11 // pred_check_branch
        %250 = sbr.rel (%p248) target = $region36
      $region35: #{_lambda_.1} parent=11 // pred_region
        _
      $region36: #{_lambda_.1} parent=11 // pred_fallthru
        _
    $region12: #{_lambda_.1} parent=5 // pred_fallthru
      _
    %p251 = scmp.lt.s32.totalorder %s14, 2
    // Predicated region
    $region37: #{_lambda_.1} parent=5 // pred_check
      %p252 = pneg %p251
    $region38: #{_lambda_.1} parent=5 // pred_check_branch
      %254 = sbr.rel (%p252) target = $region40
    $region39: #{_lambda_.1} parent=5 // pred_region
      // Predicated region
      $region41: #{_lambda_.1} parent=39 // pred_check
        %p255 = pneg %p34
      $region42: #{_lambda_.1} parent=39 // pred_check_branch
        %257 = sbr.rel (%p255) target = $region44
      $region43: #{_lambda_.1} parent=39 // pred_region
        %p258 = scmp.lt.s32.totalorder %s14, 1
        %s259 = scalar_select %p258, %s14, 1
        %s260 = smul.addr %s259, 32
        %s261 = smul.addr %s260, 8
        %s262 = scalar_lea.vmem %s0, %s261
      $region44: #{_lambda_.1} parent=39 // pred_fallthru
        _
      // Predicated region
      $region45: #{_lambda_.1} parent=39 // pred_check
        %p263 = pneg %p60
      $region46: #{_lambda_.1} parent=39 // pred_check_branch
        %265 = sbr.rel (%p263) target = $region48
      $region47: #{_lambda_.1} parent=39 // pred_region
        %p266 = scmp.lt.s32.totalorder %s14, 1
        %s267 = scalar_select %p266, %s14, 1
        %s268 = scalar_lea.vmem %s1, %s267
      $region48: #{_lambda_.1} parent=39 // pred_fallthru
        _
    $region40: #{_lambda_.1} parent=5 // pred_fallthru
      _
    %p269 = scmp.le.s32.totalorder 1, %s14
    %p270 = scmp.lt.s32.totalorder %s14, 3
    %p271 = pnand %p269, %p270
    %p272 = pneg %p271
    // Predicated region
    $region49: #{_lambda_.1} parent=5 // pred_check
      _
    $region50: #{_lambda_.1} parent=5 // pred_check_branch
      %274 = sbr.rel (%p271) target = $region52
    $region51: #{_lambda_.1} parent=5 // pred_region
      %s275 = ssub.s32 %s14, 1
      %p276 = scmp.lt.s32.totalorder %s19, 1
      %s277 = scalar_select %p276, %s19, 1
      %s278 = smul.addr %s277, 32
      %s279 = smul.addr %s278, 8
      %s280 = scalar_lea.vmem %s0, %s279
      %p281 = pneg %p40
      %p282 = pneg %p37
      %p283 = scmp.lt.s32.totalorder %s19, 1
      %s284 = scalar_select %p283, %s19, 1
      %s285 = scalar_lea.vmem %s1, %s284
      %p286 = pneg %p66
      %p287 = pneg %p63
      %p288 = pneg %p87
      %p289 = pneg %p84
      %p290 = pneg %p108
      %p291 = pneg %p105
      %p292 = pneg %p129
      %p293 = pneg %p126
      %p294 = pneg %p150
      %p295 = pneg %p147
      %p296 = pneg %p171
      %p297 = pneg %p168
      %p298 = pneg %p192
      %p299 = pneg %p189
      %p300 = pneg %p218
      %p301 = pneg %p215
      %p302 = scmp.lt.s32.totalorder %s19, 1
      %s303 = scalar_select %p302, %s19, 1
      %s304 = smul.addr %s303, 32
      %s305 = smul.addr %s304, 8
      %s306 = scalar_lea.vmem %s8, %s305
      %p307 = scmp.lt.s32.totalorder %s19, 1
      %s308 = scalar_select %p307, %s19, 1
      %s309 = smul.addr %s308, 32
      %s310 = smul.addr %s309, 8
      %s311 = scalar_lea.vmem %s0, %s310
      %p312 = scmp.lt.s32.totalorder %s19, 1
      %s313 = scalar_select %p312, %s19, 1
      %s314 = scalar_lea.vmem %s1, %s313
      %p315 = scmp.lt.s32.totalorder %s19, 1
      %s316 = scalar_select %p315, %s19, 1
      %s317 = smul.addr %s316, 32
      %s318 = smul.addr %s317, 8
      %s319 = scalar_lea.vmem %s8, %s318
      %v320 = vld [vmem:[%s311] sm:$0xff]
      %v321 = vld [vmem:[%s311 + $0x8] sm:$0xff]
      %v322 = vld [vmem:[%s311 + $0x10] sm:$0xff]
      %v323 = vld [vmem:[%s311 + $0x18] sm:$0xff]
      %v324 = vld [vmem:[%s311 + $0x20] sm:$0xff]
      %v325 = vld [vmem:[%s311 + $0x28] sm:$0xff]
      %v326 = vld [vmem:[%s311 + $0x30] sm:$0xff]
      %v327 = vld [vmem:[%s311 + $0x38] sm:$0xff]
      %v328 = vld [vmem:[%s311 + $0x40] sm:$0xff]
      %v329 = vld [vmem:[%s311 + $0x48] sm:$0xff]
      %v330 = vld [vmem:[%s311 + $0x50] sm:$0xff]
      %v331 = vld [vmem:[%s311 + $0x58] sm:$0xff]
      %v332 = vld [vmem:[%s311 + $0x60] sm:$0xff]
      %v333 = vld [vmem:[%s311 + $0x68] sm:$0xff]
      %v334 = vld [vmem:[%s311 + $0x70] sm:$0xff]
      %v335 = vld [vmem:[%s311 + $0x78] sm:$0xff]
      %v336 = vld [vmem:[%s311 + $0x80] sm:$0xff]
      %v337 = vld [vmem:[%s311 + $0x88] sm:$0xff]
      %v338 = vld [vmem:[%s311 + $0x90] sm:$0xff]
      %v339 = vld [vmem:[%s311 + $0x98] sm:$0xff]
      %v340 = vld [vmem:[%s311 + $0xa0] sm:$0xff]
      %v341 = vld [vmem:[%s311 + $0xa8] sm:$0xff]
      %v342 = vld [vmem:[%s311 + $0xb0] sm:$0xff]
      %v343 = vld [vmem:[%s311 + $0xb8] sm:$0xff]
      %v344 = vld [vmem:[%s311 + $0xc0] sm:$0xff]
      %v345 = vld [vmem:[%s311 + $0xc8] sm:$0xff]
      %v346 = vld [vmem:[%s311 + $0xd0] sm:$0xff]
      %v347 = vld [vmem:[%s311 + $0xd8] sm:$0xff]
      %v348 = vld [vmem:[%s311 + $0xe0] sm:$0xff]
      %v349 = vld [vmem:[%s311 + $0xe8] sm:$0xff]
      %v350 = vld [vmem:[%s311 + $0xf0] sm:$0xff]
      %v351 = vld [vmem:[%s311 + $0xf8] sm:$0xff]
      %v352 = vld [vmem:[%s314] sm:$0x1]
      %v353 = vld [vmem:[%s6] sm:$0xf]
      %v354 = vld [vmem:[%s7] sm:$0x1]
      %vm355 = vcmask 31744
      %v357 = vsel %vm355, %v352, 0
      %vm359 = vcmask 1043456
      %v361 = vsel %vm359, %v353, 0
      %363 = vmatprep.subr.mxu0 0.0
      %364 = vmatpush1.msra.mxu0 0.0
      %365 = vmatprep.subr.mxu0 0.0
      %366 = vmatpush1.msra.mxu0 0.0
      %367 = vmatprep.subr.mxu0 0.0
      %368 = vmatpush1.msra.mxu0 0.0
      %369 = vmatprep.subr.mxu0 0.0
      %370 = vmatpush1.msra.mxu0 0.0
      %371 = vmatprep.subr.mxu0 0.0
      %372 = vmatpush1.msra.mxu0 0.0
      %373 = vmatprep.subr.mxu0 0.0
      %374 = vmatpush1.msra.mxu0 0.0
      %375 = vmatprep.subr.mxu0 0.0
      %376 = vmatpush1.msra.mxu0 0.0
      %377 = vmatprep.subr.mxu0 0.0
      %378 = vmatpush1.msra.mxu0 0.0
      %379 = vmatprep.subr.mxu0 0.0
      %380 = vmatpush1.msra.mxu0 0.0
      %381 = vmatprep.subr.mxu0 0.0
      %382 = vmatpush1.msra.mxu0 0.0
      %383 = vmatprep.subr.mxu0 0.0
      %384 = vmatpush1.msra.mxu0 0.0
      %385 = vmatprep.subr.mxu0 0.0
      %386 = vmatpush1.msra.mxu0 0.0
      %387 = vmatprep.subr.mxu0 0.0
      %388 = vmatpush1.msra.mxu0 0.0
      %389 = vmatprep.subr.mxu0 0.0
      %390 = vmatpush1.msra.mxu0 0.0
      %391 = vmatprep.subr.mxu0 0.0
      %392 = vmatpush1.msra.mxu0 0.0
      %393 = vmatprep.subr.mxu0 0.0
      %394 = vmatpush1.msra.mxu0 %v361
      %395 = vmatprep.subr.mxu0 0.0
      %396 = vmatpush2.msra.mxu0 0.0
      %397 = vmatprep.subr.mxu0 0.0
      %398 = vmatpush2.msra.mxu0 0.0
      %399 = vmatprep.subr.mxu0 0.0
      %400 = vmatpush2.msra.mxu0 0.0
      %401 = vmatprep.subr.mxu0 0.0
      %402 = vmatpush2.msra.mxu0 0.0
      %403 = vmatprep.subr.mxu0 0.0
      %404 = vmatpush2.msra.mxu0 0.0
      %405 = vmatprep.subr.mxu0 0.0
      %406 = vmatpush2.msra.mxu0 0.0
      %407 = vmatprep.subr.mxu0 0.0
      %408 = vmatpush2.msra.mxu0 0.0
      %409 = vmatprep.subr.mxu0 0.0
      %410 = vmatpush2.msra.mxu0 0.0
      %411 = vmatprep.subr.mxu0 0.0
      %412 = vmatpush2.msra.mxu0 0.0
      %413 = vmatprep.subr.mxu0 0.0
      %414 = vmatpush2.msra.mxu0 0.0
      %415 = vmatprep.subr.mxu0 0.0
      %416 = vmatpush2.msra.mxu0 0.0
      %417 = vmatprep.subr.mxu0 0.0
      %418 = vmatpush2.msra.mxu0 0.0
      %419 = vmatprep.subr.mxu0 0.0
      %420 = vmatpush2.msra.mxu0 0.0
      %421 = vmatprep.subr.mxu0 0.0
      %422 = vmatpush2.msra.mxu0 0.0
      %423 = vmatprep.subr.mxu0 0.0
      %424 = vmatpush2.msra.mxu0 0.0
      %425 = vmatprep.subr.mxu0 0.0
      %426 = vmatpush2.msra.mxu0 0.0
      %427 = vmatprep.mubr.f32.mxu0 0.0
      %428 = vmatmul.mubr.f32.gmra.mxu0 %v357
      %v429 = vpop.f32.mrf.mxu0
      %v430 = vadd.f32 %v354, %v429
      %v431 = vpop.f32.mrf.mxu0
      %432 = vdwg.mxu0
      %v433 = vld [vmem:[%s3] sm:$0x1]
      %v434 = vadd.f32 %v430, %v433
      %435 = vst.msk [vmem:[#allocation2] sm:$0xff] %vm355, 0.0
      %436 = vst.msk [vmem:[#allocation2 + $0x8] sm:$0xff] %vm355, 0.0
      %vm437 = vcmask 25600
      %438 = vst.msk [vmem:[#allocation2 + $0x10] sm:$0x3] %vm437, 0.0
      %s439 = scalar_lea.vmem [#allocation2], 408
      %440 = vst.msk [vmem:[%s439] sm:$0xff] %vm355, 0.0
      %441 = vst.msk [vmem:[%s439 + $0x8] sm:$0xff] %vm355, 0.0
      %442 = vst.msk [vmem:[%s439 + $0x10] sm:$0x3] %vm437, 0.0
      %vm443 = vcmask 24576
      %444 = vst.msk [vmem:[#allocation2] sm:$0x1] %vm443, 0.0
      %445 = vst.msk [vmem:[#allocation2 + $0x18] sm:$0x1] %vm443, 0.0
      %446 = vst.msk [vmem:[#allocation2 + $0x30] sm:$0x1] %vm443, 0.0
      %447 = vst.msk [vmem:[#allocation2 + $0x48] sm:$0x1] %vm443, 0.0
      %448 = vst.msk [vmem:[#allocation2 + $0x60] sm:$0x1] %vm443, 0.0
      %449 = vst.msk [vmem:[#allocation2 + $0x78] sm:$0x1] %vm443, 0.0
      %450 = vst.msk [vmem:[#allocation2 + $0x90] sm:$0x1] %vm443, 0.0
      %451 = vst.msk [vmem:[#allocation2 + $0xa8] sm:$0x1] %vm443, 0.0
      %452 = vst.msk [vmem:[#allocation2 + $0xc0] sm:$0x1] %vm443, 0.0
      %453 = vst.msk [vmem:[#allocation2 + $0xd8] sm:$0x1] %vm443, 0.0
      %454 = vst.msk [vmem:[#allocation2 + $0xf0] sm:$0x1] %vm443, 0.0
      %455 = vst.msk [vmem:[#allocation2 + $0x108] sm:$0x1] %vm443, 0.0
      %456 = vst.msk [vmem:[#allocation2 + $0x120] sm:$0x1] %vm443, 0.0
      %457 = vst.msk [vmem:[#allocation2 + $0x138] sm:$0x1] %vm443, 0.0
      %458 = vst.msk [vmem:[#allocation2 + $0x150] sm:$0x1] %vm443, 0.0
      %459 = vst.msk [vmem:[#allocation2 + $0x168] sm:$0x1] %vm443, 0.0
      %460 = vst.msk [vmem:[#allocation2 + $0x180] sm:$0x1] %vm443, 0.0
      %461 = vst.msk [vmem:[#allocation2 + $0x198] sm:$0x1] %vm443, 0.0
      %462 = vst.msk [vmem:[#allocation2 + $0x11] sm:$0x1] %vm443, 0.0
      %463 = vst.msk [vmem:[#allocation2 + $0x29] sm:$0x1] %vm443, 0.0
      %464 = vst.msk [vmem:[#allocation2 + $0x41] sm:$0x1] %vm443, 0.0
      %465 = vst.msk [vmem:[#allocation2 + $0x59] sm:$0x1] %vm443, 0.0
      %466 = vst.msk [vmem:[#allocation2 + $0x71] sm:$0x1] %vm443, 0.0
      %467 = vst.msk [vmem:[#allocation2 + $0x89] sm:$0x1] %vm443, 0.0
      %468 = vst.msk [vmem:[#allocation2 + $0xa1] sm:$0x1] %vm443, 0.0
      %469 = vst.msk [vmem:[#allocation2 + $0xb9] sm:$0x1] %vm443, 0.0
      %470 = vst.msk [vmem:[#allocation2 + $0xd1] sm:$0x1] %vm443, 0.0
      %471 = vst.msk [vmem:[#allocation2 + $0xe9] sm:$0x1] %vm443, 0.0
      %472 = vst.msk [vmem:[#allocation2 + $0x101] sm:$0x1] %vm443, 0.0
      %473 = vst.msk [vmem:[#allocation2 + $0x119] sm:$0x1] %vm443, 0.0
      %474 = vst.msk [vmem:[#allocation2 + $0x131] sm:$0x1] %vm443, 0.0
      %475 = vst.msk [vmem:[#allocation2 + $0x149] sm:$0x1] %vm443, 0.0
      %476 = vst.msk [vmem:[#allocation2 + $0x161] sm:$0x1] %vm443, 0.0
      %477 = vst.msk [vmem:[#allocation2 + $0x179] sm:$0x1] %vm443, 0.0
      %478 = vst.msk [vmem:[#allocation2 + $0x191] sm:$0x1] %vm443, 0.0
      %479 = vst.msk [vmem:[#allocation2 + $0x1a9] sm:$0x1] %vm443, 0.0
      %s480 = scalar_lea.vmem [#allocation2], 24
      %481 = vst.msk [vmem:[%s480 + $0x1] sm:$0xff] %vm355, %v320
      %482 = vst.msk [vmem:[%s480 + $0x9] sm:$0xff] %vm355, %v321
      %483 = vst.msk [vmem:[%s480 + $0x19] sm:$0xff] %vm355, %v322
      %484 = vst.msk [vmem:[%s480 + $0x21] sm:$0xff] %vm355, %v323
      %485 = vst.msk [vmem:[%s480 + $0x31] sm:$0xff] %vm355, %v324
      %486 = vst.msk [vmem:[%s480 + $0x39] sm:$0xff] %vm355, %v325
      %487 = vst.msk [vmem:[%s480 + $0x49] sm:$0xff] %vm355, %v326
      %488 = vst.msk [vmem:[%s480 + $0x51] sm:$0xff] %vm355, %v327
      %489 = vst.msk [vmem:[%s480 + $0x61] sm:$0xff] %vm355, %v328
      %490 = vst.msk [vmem:[%s480 + $0x69] sm:$0xff] %vm355, %v329
      %491 = vst.msk [vmem:[%s480 + $0x79] sm:$0xff] %vm355, %v330
      %492 = vst.msk [vmem:[%s480 + $0x81] sm:$0xff] %vm355, %v331
      %493 = vst.msk [vmem:[%s480 + $0x91] sm:$0xff] %vm355, %v332
      %494 = vst.msk [vmem:[%s480 + $0x99] sm:$0xff] %vm355, %v333
      %495 = vst.msk [vmem:[%s480 + $0xa9] sm:$0xff] %vm355, %v334
      %496 = vst.msk [vmem:[%s480 + $0xb1] sm:$0xff] %vm355, %v335
      %497 = vst.msk [vmem:[%s480 + $0xc1] sm:$0xff] %vm355, %v336
      %498 = vst.msk [vmem:[%s480 + $0xc9] sm:$0xff] %vm355, %v337
      %499 = vst.msk [vmem:[%s480 + $0xd9] sm:$0xff] %vm355, %v338
      %500 = vst.msk [vmem:[%s480 + $0xe1] sm:$0xff] %vm355, %v339
      %501 = vst.msk [vmem:[%s480 + $0xf1] sm:$0xff] %vm355, %v340
      %502 = vst.msk [vmem:[%s480 + $0xf9] sm:$0xff] %vm355, %v341
      %503 = vst.msk [vmem:[%s480 + $0x109] sm:$0xff] %vm355, %v342
      %504 = vst.msk [vmem:[%s480 + $0x111] sm:$0xff] %vm355, %v343
      %505 = vst.msk [vmem:[%s480 + $0x121] sm:$0xff] %vm355, %v344
      %506 = vst.msk [vmem:[%s480 + $0x129] sm:$0xff] %vm355, %v345
      %507 = vst.msk [vmem:[%s480 + $0x139] sm:$0xff] %vm355, %v346
      %508 = vst.msk [vmem:[%s480 + $0x141] sm:$0xff] %vm355, %v347
      %509 = vst.msk [vmem:[%s480 + $0x151] sm:$0xff] %vm355, %v348
      %510 = vst.msk [vmem:[%s480 + $0x159] sm:$0xff] %vm355, %v349
      %511 = vst.msk [vmem:[%s480 + $0x169] sm:$0xff] %vm355, %v350
      %512 = vst.msk [vmem:[%s480 + $0x171] sm:$0xff] %vm355, %v351
      %v513 = vld [vmem:[#allocation2] sm:$0xff]
      %v514 = vld [vmem:[#allocation2 + $0x8] sm:$0xff]
      %v515 = vld [vmem:[#allocation2 + $0x18] sm:$0xff]
      %v516 = vld [vmem:[#allocation2 + $0x20] sm:$0xff]
      %v517 = vld [vmem:[#allocation2 + $0x30] sm:$0xff]
      %v518 = vld [vmem:[#allocation2 + $0x38] sm:$0xff]
      %v519 = vld [vmem:[#allocation2 + $0x48] sm:$0xff]
      %v520 = vld [vmem:[#allocation2 + $0x50] sm:$0xff]
      %v521 = vld [vmem:[#allocation2 + $0x60] sm:$0xff]
      %v522 = vld [vmem:[#allocation2 + $0x68] sm:$0xff]
      %v523 = vld [vmem:[#allocation2 + $0x78] sm:$0xff]
      %v524 = vld [vmem:[#allocation2 + $0x80] sm:$0xff]
      %v525 = vld [vmem:[#allocation2 + $0x90] sm:$0xff]
      %v526 = vld [vmem:[#allocation2 + $0x98] sm:$0xff]
      %v527 = vld [vmem:[#allocation2 + $0xa8] sm:$0xff]
      %v528 = vld [vmem:[#allocation2 + $0xb0] sm:$0xff]
      %v529 = vld [vmem:[#allocation2 + $0xc0] sm:$0xff]
      %v530 = vld [vmem:[#allocation2 + $0xc8] sm:$0xff]
      %v531 = vld [vmem:[#allocation2 + $0xd8] sm:$0xff]
      %v532 = vld [vmem:[#allocation2 + $0xe0] sm:$0xff]
      %v533 = vld [vmem:[#allocation2 + $0xf0] sm:$0xff]
      %v534 = vld [vmem:[#allocation2 + $0xf8] sm:$0xff]
      %v535 = vld [vmem:[#allocation2 + $0x108] sm:$0xff]
      %v536 = vld [vmem:[#allocation2 + $0x110] sm:$0xff]
      %v537 = vld [vmem:[#allocation2 + $0x120] sm:$0xff]
      %v538 = vld [vmem:[#allocation2 + $0x128] sm:$0xff]
      %v539 = vld [vmem:[#allocation2 + $0x138] sm:$0xff]
      %v540 = vld [vmem:[#allocation2 + $0x140] sm:$0xff]
      %v541 = vld [vmem:[#allocation2 + $0x150] sm:$0xff]
      %v542 = vld [vmem:[#allocation2 + $0x158] sm:$0xff]
      %v543 = vld [vmem:[#allocation2 + $0x168] sm:$0xff]
      %v544 = vld [vmem:[#allocation2 + $0x170] sm:$0xff]
      %545 = vst.msk [vmem:[#allocation3] sm:$0xff] %vm355, %v513
      %546 = vst.msk [vmem:[#allocation3 + $0x8] sm:$0xff] %vm355, %v514
      %547 = vst.msk [vmem:[#allocation3 + $0x10] sm:$0xff] %vm355, %v515
      %548 = vst.msk [vmem:[#allocation3 + $0x18] sm:$0xff] %vm355, %v516
      %549 = vst.msk [vmem:[#allocation3 + $0x20] sm:$0xff] %vm355, %v517
      %550 = vst.msk [vmem:[#allocation3 + $0x28] sm:$0xff] %vm355, %v518
      %551 = vst.msk [vmem:[#allocation3 + $0x30] sm:$0xff] %vm355, %v519
      %552 = vst.msk [vmem:[#allocation3 + $0x38] sm:$0xff] %vm355, %v520
      %553 = vst.msk [vmem:[#allocation3 + $0x40] sm:$0xff] %vm355, %v521
      %554 = vst.msk [vmem:[#allocation3 + $0x48] sm:$0xff] %vm355, %v522
      %555 = vst.msk [vmem:[#allocation3 + $0x50] sm:$0xff] %vm355, %v523
      %556 = vst.msk [vmem:[#allocation3 + $0x58] sm:$0xff] %vm355, %v524
      %557 = vst.msk [vmem:[#allocation3 + $0x60] sm:$0xff] %vm355, %v525
      %558 = vst.msk [vmem:[#allocation3 + $0x68] sm:$0xff] %vm355, %v526
      %559 = vst.msk [vmem:[#allocation3 + $0x70] sm:$0xff] %vm355, %v527
      %560 = vst.msk [vmem:[#allocation3 + $0x78] sm:$0xff] %vm355, %v528
      %561 = vst.msk [vmem:[#allocation3 + $0x80] sm:$0xff] %vm355, %v529
      %562 = vst.msk [vmem:[#allocation3 + $0x88] sm:$0xff] %vm355, %v530
      %563 = vst.msk [vmem:[#allocation3 + $0x90] sm:$0xff] %vm355, %v531
      %564 = vst.msk [vmem:[#allocation3 + $0x98] sm:$0xff] %vm355, %v532
      %565 = vst.msk [vmem:[#allocation3 + $0xa0] sm:$0xff] %vm355, %v533
      %566 = vst.msk [vmem:[#allocation3 + $0xa8] sm:$0xff] %vm355, %v534
      %567 = vst.msk [vmem:[#allocation3 + $0xb0] sm:$0xff] %vm355, %v535
      %568 = vst.msk [vmem:[#allocation3 + $0xb8] sm:$0xff] %vm355, %v536
      %569 = vst.msk [vmem:[#allocation3 + $0xc0] sm:$0xff] %vm355, %v537
      %570 = vst.msk [vmem:[#allocation3 + $0xc8] sm:$0xff] %vm355, %v538
      %571 = vst.msk [vmem:[#allocation3 + $0xd0] sm:$0xff] %vm355, %v539
      %572 = vst.msk [vmem:[#allocation3 + $0xd8] sm:$0xff] %vm355, %v540
      %573 = vst.msk [vmem:[#allocation3 + $0xe0] sm:$0xff] %vm355, %v541
      %574 = vst.msk [vmem:[#allocation3 + $0xe8] sm:$0xff] %vm355, %v542
      %575 = vst.msk [vmem:[#allocation3 + $0xf0] sm:$0xff] %vm355, %v543
      %576 = vst.msk [vmem:[#allocation3 + $0xf8] sm:$0xff] %vm355, %v544
      %v577 = vld [vmem:[#allocation2 + $0x1] sm:$0xff]
      %v578 = vld [vmem:[#allocation2 + $0x9] sm:$0xff]
      %v579 = vld [vmem:[#allocation2 + $0x19] sm:$0xff]
      %v580 = vld [vmem:[#allocation2 + $0x21] sm:$0xff]
      %v581 = vld [vmem:[#allocation2 + $0x31] sm:$0xff]
      %v582 = vld [vmem:[#allocation2 + $0x39] sm:$0xff]
      %v583 = vld [vmem:[#allocation2 + $0x49] sm:$0xff]
      %v584 = vld [vmem:[#allocation2 + $0x51] sm:$0xff]
      %v585 = vld [vmem:[#allocation2 + $0x61] sm:$0xff]
      %v586 = vld [vmem:[#allocation2 + $0x69] sm:$0xff]
      %v587 = vld [vmem:[#allocation2 + $0x79] sm:$0xff]
      %v588 = vld [vmem:[#allocation2 + $0x81] sm:$0xff]
      %v589 = vld [vmem:[#allocation2 + $0x91] sm:$0xff]
      %v590 = vld [vmem:[#allocation2 + $0x99] sm:$0xff]
      %v591 = vld [vmem:[#allocation2 + $0xa9] sm:$0xff]
      %v592 = vld [vmem:[#allocation2 + $0xb1] sm:$0xff]
      %v593 = vld [vmem:[#allocation2 + $0xc1] sm:$0xff]
      %v594 = vld [vmem:[#allocation2 + $0xc9] sm:$0xff]
      %v595 = vld [vmem:[#allocation2 + $0xd9] sm:$0xff]
      %v596 = vld [vmem:[#allocation2 + $0xe1] sm:$0xff]
      %v597 = vld [vmem:[#allocation2 + $0xf1] sm:$0xff]
      %v598 = vld [vmem:[#allocation2 + $0xf9] sm:$0xff]
      %v599 = vld [vmem:[#allocation2 + $0x109] sm:$0xff]
      %v600 = vld [vmem:[#allocation2 + $0x111] sm:$0xff]
      %v601 = vld [vmem:[#allocation2 + $0x121] sm:$0xff]
      %v602 = vld [vmem:[#allocation2 + $0x129] sm:$0xff]
      %v603 = vld [vmem:[#allocation2 + $0x139] sm:$0xff]
      %v604 = vld [vmem:[#allocation2 + $0x141] sm:$0xff]
      %v605 = vld [vmem:[#allocation2 + $0x151] sm:$0xff]
      %v606 = vld [vmem:[#allocation2 + $0x159] sm:$0xff]
      %v607 = vld [vmem:[#allocation2 + $0x169] sm:$0xff]
      %v608 = vld [vmem:[#allocation2 + $0x171] sm:$0xff]
      %641 = vrot.lane.b32.xlu0 %v577, 4
      %v642 = vpop.permute.xlu0 %641
      %643 = vrot.lane.b32.xlu0 %v578, 4
      %v644 = vpop.permute.xlu0 %643
      %645 = vrot.lane.b32.xlu0 %v579, 4
      %v646 = vpop.permute.xlu0 %645
      %647 = vrot.lane.b32.xlu0 %v580, 4
      %v648 = vpop.permute.xlu0 %647
      %649 = vrot.lane.b32.xlu0 %v581, 4
      %v650 = vpop.permute.xlu0 %649
      %651 = vrot.lane.b32.xlu0 %v582, 4
      %v652 = vpop.permute.xlu0 %651
      %653 = vrot.lane.b32.xlu0 %v583, 4
      %v654 = vpop.permute.xlu0 %653
      %655 = vrot.lane.b32.xlu0 %v584, 4
      %v656 = vpop.permute.xlu0 %655
      %657 = vrot.lane.b32.xlu0 %v585, 4
      %v658 = vpop.permute.xlu0 %657
      %659 = vrot.lane.b32.xlu0 %v586, 4
      %v660 = vpop.permute.xlu0 %659
      %661 = vrot.lane.b32.xlu0 %v587, 4
      %v662 = vpop.permute.xlu0 %661
      %663 = vrot.lane.b32.xlu0 %v588, 4
      %v664 = vpop.permute.xlu0 %663
      %665 = vrot.lane.b32.xlu0 %v589, 4
      %v666 = vpop.permute.xlu0 %665
      %667 = vrot.lane.b32.xlu0 %v590, 4
      %v668 = vpop.permute.xlu0 %667
      %669 = vrot.lane.b32.xlu0 %v591, 4
      %v670 = vpop.permute.xlu0 %669
      %671 = vrot.lane.b32.xlu0 %v592, 4
      %v672 = vpop.permute.xlu0 %671
      %673 = vrot.lane.b32.xlu0 %v593, 4
      %v674 = vpop.permute.xlu0 %673
      %675 = vrot.lane.b32.xlu0 %v594, 4
      %v676 = vpop.permute.xlu0 %675
      %677 = vrot.lane.b32.xlu0 %v595, 4
      %v678 = vpop.permute.xlu0 %677
      %679 = vrot.lane.b32.xlu0 %v596, 4
      %v680 = vpop.permute.xlu0 %679
      %681 = vrot.lane.b32.xlu0 %v597, 4
      %v682 = vpop.permute.xlu0 %681
      %683 = vrot.lane.b32.xlu0 %v598, 4
      %v684 = vpop.permute.xlu0 %683
      %685 = vrot.lane.b32.xlu0 %v599, 4
      %v686 = vpop.permute.xlu0 %685
      %687 = vrot.lane.b32.xlu0 %v600, 4
      %v688 = vpop.permute.xlu0 %687
      %689 = vrot.lane.b32.xlu0 %v601, 4
      %v690 = vpop.permute.xlu0 %689
      %691 = vrot.lane.b32.xlu0 %v602, 4
      %v692 = vpop.permute.xlu0 %691
      %693 = vrot.lane.b32.xlu0 %v603, 4
      %v694 = vpop.permute.xlu0 %693
      %695 = vrot.lane.b32.xlu0 %v604, 4
      %v696 = vpop.permute.xlu0 %695
      %697 = vrot.lane.b32.xlu0 %v605, 4
      %v698 = vpop.permute.xlu0 %697
      %699 = vrot.lane.b32.xlu0 %v606, 4
      %v700 = vpop.permute.xlu0 %699
      %701 = vrot.lane.b32.xlu0 %v607, 4
      %v702 = vpop.permute.xlu0 %701
      %703 = vrot.lane.b32.xlu0 %v608, 4
      %v704 = vpop.permute.xlu0 %703
      %vm737 = vcmask 64544
      %738 = vst.msk [vmem:[#allocation3] sm:$0xff] %vm737, %v642
      %739 = vst.msk [vmem:[#allocation3 + $0x8] sm:$0xff] %vm737, %v644
      %740 = vst.msk [vmem:[#allocation3 + $0x10] sm:$0xff] %vm737, %v646
      %741 = vst.msk [vmem:[#allocation3 + $0x18] sm:$0xff] %vm737, %v648
      %742 = vst.msk [vmem:[#allocation3 + $0x20] sm:$0xff] %vm737, %v650
      %743 = vst.msk [vmem:[#allocation3 + $0x28] sm:$0xff] %vm737, %v652
      %744 = vst.msk [vmem:[#allocation3 + $0x30] sm:$0xff] %vm737, %v654
      %745 = vst.msk [vmem:[#allocation3 + $0x38] sm:$0xff] %vm737, %v656
      %746 = vst.msk [vmem:[#allocation3 + $0x40] sm:$0xff] %vm737, %v658
      %747 = vst.msk [vmem:[#allocation3 + $0x48] sm:$0xff] %vm737, %v660
      %748 = vst.msk [vmem:[#allocation3 + $0x50] sm:$0xff] %vm737, %v662
      %749 = vst.msk [vmem:[#allocation3 + $0x58] sm:$0xff] %vm737, %v664
      %750 = vst.msk [vmem:[#allocation3 + $0x60] sm:$0xff] %vm737, %v666
      %751 = vst.msk [vmem:[#allocation3 + $0x68] sm:$0xff] %vm737, %v668
      %752 = vst.msk [vmem:[#allocation3 + $0x70] sm:$0xff] %vm737, %v670
      %753 = vst.msk [vmem:[#allocation3 + $0x78] sm:$0xff] %vm737, %v672
      %754 = vst.msk [vmem:[#allocation3 + $0x80] sm:$0xff] %vm737, %v674
      %755 = vst.msk [vmem:[#allocation3 + $0x88] sm:$0xff] %vm737, %v676
      %756 = vst.msk [vmem:[#allocation3 + $0x90] sm:$0xff] %vm737, %v678
      %757 = vst.msk [vmem:[#allocation3 + $0x98] sm:$0xff] %vm737, %v680
      %758 = vst.msk [vmem:[#allocation3 + $0xa0] sm:$0xff] %vm737, %v682
      %759 = vst.msk [vmem:[#allocation3 + $0xa8] sm:$0xff] %vm737, %v684
      %760 = vst.msk [vmem:[#allocation3 + $0xb0] sm:$0xff] %vm737, %v686
      %761 = vst.msk [vmem:[#allocation3 + $0xb8] sm:$0xff] %vm737, %v688
      %762 = vst.msk [vmem:[#allocation3 + $0xc0] sm:$0xff] %vm737, %v690
      %763 = vst.msk [vmem:[#allocation3 + $0xc8] sm:$0xff] %vm737, %v692
      %764 = vst.msk [vmem:[#allocation3 + $0xd0] sm:$0xff] %vm737, %v694
      %765 = vst.msk [vmem:[#allocation3 + $0xd8] sm:$0xff] %vm737, %v696
      %766 = vst.msk [vmem:[#allocation3 + $0xe0] sm:$0xff] %vm737, %v698
      %767 = vst.msk [vmem:[#allocation3 + $0xe8] sm:$0xff] %vm737, %v700
      %768 = vst.msk [vmem:[#allocation3 + $0xf0] sm:$0xff] %vm737, %v702
      %769 = vst.msk [vmem:[#allocation3 + $0xf8] sm:$0xff] %vm737, %v704
      %v770 = vld [vmem:[#allocation2 + $0x2] sm:$0xff]
      %v771 = vld [vmem:[#allocation2 + $0xa] sm:$0xff]
      %v772 = vld [vmem:[#allocation2 + $0x1a] sm:$0xff]
      %v773 = vld [vmem:[#allocation2 + $0x22] sm:$0xff]
      %v774 = vld [vmem:[#allocation2 + $0x32] sm:$0xff]
      %v775 = vld [vmem:[#allocation2 + $0x3a] sm:$0xff]
      %v776 = vld [vmem:[#allocation2 + $0x4a] sm:$0xff]
      %v777 = vld [vmem:[#allocation2 + $0x52] sm:$0xff]
      %v778 = vld [vmem:[#allocation2 + $0x62] sm:$0xff]
      %v779 = vld [vmem:[#allocation2 + $0x6a] sm:$0xff]
      %v780 = vld [vmem:[#allocation2 + $0x7a] sm:$0xff]
      %v781 = vld [vmem:[#allocation2 + $0x82] sm:$0xff]
      %v782 = vld [vmem:[#allocation2 + $0x92] sm:$0xff]
      %v783 = vld [vmem:[#allocation2 + $0x9a] sm:$0xff]
      %v784 = vld [vmem:[#allocation2 + $0xaa] sm:$0xff]
      %v785 = vld [vmem:[#allocation2 + $0xb2] sm:$0xff]
      %v786 = vld [vmem:[#allocation2 + $0xc2] sm:$0xff]
      %v787 = vld [vmem:[#allocation2 + $0xca] sm:$0xff]
      %v788 = vld [vmem:[#allocation2 + $0xda] sm:$0xff]
      %v789 = vld [vmem:[#allocation2 + $0xe2] sm:$0xff]
      %v790 = vld [vmem:[#allocation2 + $0xf2] sm:$0xff]
      %v791 = vld [vmem:[#allocation2 + $0xfa] sm:$0xff]
      %v792 = vld [vmem:[#allocation2 + $0x10a] sm:$0xff]
      %v793 = vld [vmem:[#allocation2 + $0x112] sm:$0xff]
      %v794 = vld [vmem:[#allocation2 + $0x122] sm:$0xff]
      %v795 = vld [vmem:[#allocation2 + $0x12a] sm:$0xff]
      %v796 = vld [vmem:[#allocation2 + $0x13a] sm:$0xff]
      %v797 = vld [vmem:[#allocation2 + $0x142] sm:$0xff]
      %v798 = vld [vmem:[#allocation2 + $0x152] sm:$0xff]
      %v799 = vld [vmem:[#allocation2 + $0x15a] sm:$0xff]
      %v800 = vld [vmem:[#allocation2 + $0x16a] sm:$0xff]
      %v801 = vld [vmem:[#allocation2 + $0x172] sm:$0xff]
      %834 = vrot.lane.b32.xlu0 %v770, 8
      %v835 = vpop.permute.xlu0 %834
      %836 = vrot.lane.b32.xlu0 %v771, 8
      %v837 = vpop.permute.xlu0 %836
      %838 = vrot.lane.b32.xlu0 %v772, 8
      %v839 = vpop.permute.xlu0 %838
      %840 = vrot.lane.b32.xlu0 %v773, 8
      %v841 = vpop.permute.xlu0 %840
      %842 = vrot.lane.b32.xlu0 %v774, 8
      %v843 = vpop.permute.xlu0 %842
      %844 = vrot.lane.b32.xlu0 %v775, 8
      %v845 = vpop.permute.xlu0 %844
      %846 = vrot.lane.b32.xlu0 %v776, 8
      %v847 = vpop.permute.xlu0 %846
      %848 = vrot.lane.b32.xlu0 %v777, 8
      %v849 = vpop.permute.xlu0 %848
      %850 = vrot.lane.b32.xlu0 %v778, 8
      %v851 = vpop.permute.xlu0 %850
      %852 = vrot.lane.b32.xlu0 %v779, 8
      %v853 = vpop.permute.xlu0 %852
      %854 = vrot.lane.b32.xlu0 %v780, 8
      %v855 = vpop.permute.xlu0 %854
      %856 = vrot.lane.b32.xlu0 %v781, 8
      %v857 = vpop.permute.xlu0 %856
      %858 = vrot.lane.b32.xlu0 %v782, 8
      %v859 = vpop.permute.xlu0 %858
      %860 = vrot.lane.b32.xlu0 %v783, 8
      %v861 = vpop.permute.xlu0 %860
      %862 = vrot.lane.b32.xlu0 %v784, 8
      %v863 = vpop.permute.xlu0 %862
      %864 = vrot.lane.b32.xlu0 %v785, 8
      %v865 = vpop.permute.xlu0 %864
      %866 = vrot.lane.b32.xlu0 %v786, 8
      %v867 = vpop.permute.xlu0 %866
      %868 = vrot.lane.b32.xlu0 %v787, 8
      %v869 = vpop.permute.xlu0 %868
      %870 = vrot.lane.b32.xlu0 %v788, 8
      %v871 = vpop.permute.xlu0 %870
      %872 = vrot.lane.b32.xlu0 %v789, 8
      %v873 = vpop.permute.xlu0 %872
      %874 = vrot.lane.b32.xlu0 %v790, 8
      %v875 = vpop.permute.xlu0 %874
      %876 = vrot.lane.b32.xlu0 %v791, 8
      %v877 = vpop.permute.xlu0 %876
      %878 = vrot.lane.b32.xlu0 %v792, 8
      %v879 = vpop.permute.xlu0 %878
      %880 = vrot.lane.b32.xlu0 %v793, 8
      %v881 = vpop.permute.xlu0 %880
      %882 = vrot.lane.b32.xlu0 %v794, 8
      %v883 = vpop.permute.xlu0 %882
      %884 = vrot.lane.b32.xlu0 %v795, 8
      %v885 = vpop.permute.xlu0 %884
      %886 = vrot.lane.b32.xlu0 %v796, 8
      %v887 = vpop.permute.xlu0 %886
      %888 = vrot.lane.b32.xlu0 %v797, 8
      %v889 = vpop.permute.xlu0 %888
      %890 = vrot.lane.b32.xlu0 %v798, 8
      %v891 = vpop.permute.xlu0 %890
      %892 = vrot.lane.b32.xlu0 %v799, 8
      %v893 = vpop.permute.xlu0 %892
      %894 = vrot.lane.b32.xlu0 %v800, 8
      %v895 = vpop.permute.xlu0 %894
      %896 = vrot.lane.b32.xlu0 %v801, 8
      %v897 = vpop.permute.xlu0 %896
      %vm930 = vcmask 97344
      %931 = vst.msk [vmem:[#allocation3] sm:$0xff] %vm930, %v835
      %932 = vst.msk [vmem:[#allocation3 + $0x8] sm:$0xff] %vm930, %v837
      %933 = vst.msk [vmem:[#allocation3 + $0x10] sm:$0xff] %vm930, %v839
      %934 = vst.msk [vmem:[#allocation3 + $0x18] sm:$0xff] %vm930, %v841
      %935 = vst.msk [vmem:[#allocation3 + $0x20] sm:$0xff] %vm930, %v843
      %936 = vst.msk [vmem:[#allocation3 + $0x28] sm:$0xff] %vm930, %v845
      %937 = vst.msk [vmem:[#allocation3 + $0x30] sm:$0xff] %vm930, %v847
      %938 = vst.msk [vmem:[#allocation3 + $0x38] sm:$0xff] %vm930, %v849
      %939 = vst.msk [vmem:[#allocation3 + $0x40] sm:$0xff] %vm930, %v851
      %940 = vst.msk [vmem:[#allocation3 + $0x48] sm:$0xff] %vm930, %v853
      %941 = vst.msk [vmem:[#allocation3 + $0x50] sm:$0xff] %vm930, %v855
      %942 = vst.msk [vmem:[#allocation3 + $0x58] sm:$0xff] %vm930, %v857
      %943 = vst.msk [vmem:[#allocation3 + $0x60] sm:$0xff] %vm930, %v859
      %944 = vst.msk [vmem:[#allocation3 + $0x68] sm:$0xff] %vm930, %v861
      %945 = vst.msk [vmem:[#allocation3 + $0x70] sm:$0xff] %vm930, %v863
      %946 = vst.msk [vmem:[#allocation3 + $0x78] sm:$0xff] %vm930, %v865
      %947 = vst.msk [vmem:[#allocation3 + $0x80] sm:$0xff] %vm930, %v867
      %948 = vst.msk [vmem:[#allocation3 + $0x88] sm:$0xff] %vm930, %v869
      %949 = vst.msk [vmem:[#allocation3 + $0x90] sm:$0xff] %vm930, %v871
      %950 = vst.msk [vmem:[#allocation3 + $0x98] sm:$0xff] %vm930, %v873
      %951 = vst.msk [vmem:[#allocation3 + $0xa0] sm:$0xff] %vm930, %v875
      %952 = vst.msk [vmem:[#allocation3 + $0xa8] sm:$0xff] %vm930, %v877
      %953 = vst.msk [vmem:[#allocation3 + $0xb0] sm:$0xff] %vm930, %v879
      %954 = vst.msk [vmem:[#allocation3 + $0xb8] sm:$0xff] %vm930, %v881
      %955 = vst.msk [vmem:[#allocation3 + $0xc0] sm:$0xff] %vm930, %v883
      %956 = vst.msk [vmem:[#allocation3 + $0xc8] sm:$0xff] %vm930, %v885
      %957 = vst.msk [vmem:[#allocation3 + $0xd0] sm:$0xff] %vm930, %v887
      %958 = vst.msk [vmem:[#allocation3 + $0xd8] sm:$0xff] %vm930, %v889
      %959 = vst.msk [vmem:[#allocation3 + $0xe0] sm:$0xff] %vm930, %v891
      %960 = vst.msk [vmem:[#allocation3 + $0xe8] sm:$0xff] %vm930, %v893
      %961 = vst.msk [vmem:[#allocation3 + $0xf0] sm:$0xff] %vm930, %v895
      %962 = vst.msk [vmem:[#allocation3 + $0xf8] sm:$0xff] %vm930, %v897
      %v963 = vld [vmem:[%s480] sm:$0xff]
      %v964 = vld [vmem:[%s480 + $0x8] sm:$0xff]
      %v965 = vld [vmem:[%s480 + $0x18] sm:$0xff]
      %v966 = vld [vmem:[%s480 + $0x20] sm:$0xff]
      %v967 = vld [vmem:[%s480 + $0x30] sm:$0xff]
      %v968 = vld [vmem:[%s480 + $0x38] sm:$0xff]
      %v969 = vld [vmem:[%s480 + $0x48] sm:$0xff]
      %v970 = vld [vmem:[%s480 + $0x50] sm:$0xff]
      %v971 = vld [vmem:[%s480 + $0x60] sm:$0xff]
      %v972 = vld [vmem:[%s480 + $0x68] sm:$0xff]
      %v973 = vld [vmem:[%s480 + $0x78] sm:$0xff]
      %v974 = vld [vmem:[%s480 + $0x80] sm:$0xff]
      %v975 = vld [vmem:[%s480 + $0x90] sm:$0xff]
      %v976 = vld [vmem:[%s480 + $0x98] sm:$0xff]
      %v977 = vld [vmem:[%s480 + $0xa8] sm:$0xff]
      %v978 = vld [vmem:[%s480 + $0xb0] sm:$0xff]
      %v979 = vld [vmem:[%s480 + $0xc0] sm:$0xff]
      %v980 = vld [vmem:[%s480 + $0xc8] sm:$0xff]
      %v981 = vld [vmem:[%s480 + $0xd8] sm:$0xff]
      %v982 = vld [vmem:[%s480 + $0xe0] sm:$0xff]
      %v983 = vld [vmem:[%s480 + $0xf0] sm:$0xff]
      %v984 = vld [vmem:[%s480 + $0xf8] sm:$0xff]
      %v985 = vld [vmem:[%s480 + $0x108] sm:$0xff]
      %v986 = vld [vmem:[%s480 + $0x110] sm:$0xff]
      %v987 = vld [vmem:[%s480 + $0x120] sm:$0xff]
      %v988 = vld [vmem:[%s480 + $0x128] sm:$0xff]
      %v989 = vld [vmem:[%s480 + $0x138] sm:$0xff]
      %v990 = vld [vmem:[%s480 + $0x140] sm:$0xff]
      %v991 = vld [vmem:[%s480 + $0x150] sm:$0xff]
      %v992 = vld [vmem:[%s480 + $0x158] sm:$0xff]
      %v993 = vld [vmem:[%s480 + $0x168] sm:$0xff]
      %v994 = vld [vmem:[%s480 + $0x170] sm:$0xff]
      %1027 = vrot.lane.b32.xlu0 %v963, 12
      %v1028 = vpop.permute.xlu0 %1027
      %1029 = vrot.lane.b32.xlu0 %v964, 12
      %v1030 = vpop.permute.xlu0 %1029
      %1031 = vrot.lane.b32.xlu0 %v965, 12
      %v1032 = vpop.permute.xlu0 %1031
      %1033 = vrot.lane.b32.xlu0 %v966, 12
      %v1034 = vpop.permute.xlu0 %1033
      %1035 = vrot.lane.b32.xlu0 %v967, 12
      %v1036 = vpop.permute.xlu0 %1035
      %1037 = vrot.lane.b32.xlu0 %v968, 12
      %v1038 = vpop.permute.xlu0 %1037
      %1039 = vrot.lane.b32.xlu0 %v969, 12
      %v1040 = vpop.permute.xlu0 %1039
      %1041 = vrot.lane.b32.xlu0 %v970, 12
      %v1042 = vpop.permute.xlu0 %1041
      %1043 = vrot.lane.b32.xlu0 %v971, 12
      %v1044 = vpop.permute.xlu0 %1043
      %1045 = vrot.lane.b32.xlu0 %v972, 12
      %v1046 = vpop.permute.xlu0 %1045
      %1047 = vrot.lane.b32.xlu0 %v973, 12
      %v1048 = vpop.permute.xlu0 %1047
      %1049 = vrot.lane.b32.xlu0 %v974, 12
      %v1050 = vpop.permute.xlu0 %1049
      %1051 = vrot.lane.b32.xlu0 %v975, 12
      %v1052 = vpop.permute.xlu0 %1051
      %1053 = vrot.lane.b32.xlu0 %v976, 12
      %v1054 = vpop.permute.xlu0 %1053
      %1055 = vrot.lane.b32.xlu0 %v977, 12
      %v1056 = vpop.permute.xlu0 %1055
      %1057 = vrot.lane.b32.xlu0 %v978, 12
      %v1058 = vpop.permute.xlu0 %1057
      %1059 = vrot.lane.b32.xlu0 %v979, 12
      %v1060 = vpop.permute.xlu0 %1059
      %1061 = vrot.lane.b32.xlu0 %v980, 12
      %v1062 = vpop.permute.xlu0 %1061
      %1063 = vrot.lane.b32.xlu0 %v981, 12
      %v1064 = vpop.permute.xlu0 %1063
      %1065 = vrot.lane.b32.xlu0 %v982, 12
      %v1066 = vpop.permute.xlu0 %1065
      %1067 = vrot.lane.b32.xlu0 %v983, 12
      %v1068 = vpop.permute.xlu0 %1067
      %1069 = vrot.lane.b32.xlu0 %v984, 12
      %v1070 = vpop.permute.xlu0 %1069
      %1071 = vrot.lane.b32.xlu0 %v985, 12
      %v1072 = vpop.permute.xlu0 %1071
      %1073 = vrot.lane.b32.xlu0 %v986, 12
      %v1074 = vpop.permute.xlu0 %1073
      %1075 = vrot.lane.b32.xlu0 %v987, 12
      %v1076 = vpop.permute.xlu0 %1075
      %1077 = vrot.lane.b32.xlu0 %v988, 12
      %v1078 = vpop.permute.xlu0 %1077
      %1079 = vrot.lane.b32.xlu0 %v989, 12
      %v1080 = vpop.permute.xlu0 %1079
      %1081 = vrot.lane.b32.xlu0 %v990, 12
      %v1082 = vpop.permute.xlu0 %1081
      %1083 = vrot.lane.b32.xlu0 %v991, 12
      %v1084 = vpop.permute.xlu0 %1083
      %1085 = vrot.lane.b32.xlu0 %v992, 12
      %v1086 = vpop.permute.xlu0 %1085
      %1087 = vrot.lane.b32.xlu0 %v993, 12
      %v1088 = vpop.permute.xlu0 %1087
      %1089 = vrot.lane.b32.xlu0 %v994, 12
      %v1090 = vpop.permute.xlu0 %1089
      %vm1123 = vcmask 130144
      %1124 = vst.msk [vmem:[#allocation3] sm:$0xff] %vm1123, %v1028
      %1125 = vst.msk [vmem:[#allocation3 + $0x8] sm:$0xff] %vm1123, %v1030
      %1126 = vst.msk [vmem:[#allocation3 + $0x10] sm:$0xff] %vm1123, %v1032
      %1127 = vst.msk [vmem:[#allocation3 + $0x18] sm:$0xff] %vm1123, %v1034
      %1128 = vst.msk [vmem:[#allocation3 + $0x20] sm:$0xff] %vm1123, %v1036
      %1129 = vst.msk [vmem:[#allocation3 + $0x28] sm:$0xff] %vm1123, %v1038
      %1130 = vst.msk [vmem:[#allocation3 + $0x30] sm:$0xff] %vm1123, %v1040
      %1131 = vst.msk [vmem:[#allocation3 + $0x38] sm:$0xff] %vm1123, %v1042
      %1132 = vst.msk [vmem:[#allocation3 + $0x40] sm:$0xff] %vm1123, %v1044
      %1133 = vst.msk [vmem:[#allocation3 + $0x48] sm:$0xff] %vm1123, %v1046
      %1134 = vst.msk [vmem:[#allocation3 + $0x50] sm:$0xff] %vm1123, %v1048
      %1135 = vst.msk [vmem:[#allocation3 + $0x58] sm:$0xff] %vm1123, %v1050
      %1136 = vst.msk [vmem:[#allocation3 + $0x60] sm:$0xff] %vm1123, %v1052
      %1137 = vst.msk [vmem:[#allocation3 + $0x68] sm:$0xff] %vm1123, %v1054
      %1138 = vst.msk [vmem:[#allocation3 + $0x70] sm:$0xff] %vm1123, %v1056
      %1139 = vst.msk [vmem:[#allocation3 + $0x78] sm:$0xff] %vm1123, %v1058
      %1140 = vst.msk [vmem:[#allocation3 + $0x80] sm:$0xff] %vm1123, %v1060
      %1141 = vst.msk [vmem:[#allocation3 + $0x88] sm:$0xff] %vm1123, %v1062
      %1142 = vst.msk [vmem:[#allocation3 + $0x90] sm:$0xff] %vm1123, %v1064
      %1143 = vst.msk [vmem:[#allocation3 + $0x98] sm:$0xff] %vm1123, %v1066
      %1144 = vst.msk [vmem:[#allocation3 + $0xa0] sm:$0xff] %vm1123, %v1068
      %1145 = vst.msk [vmem:[#allocation3 + $0xa8] sm:$0xff] %vm1123, %v1070
      %1146 = vst.msk [vmem:[#allocation3 + $0xb0] sm:$0xff] %vm1123, %v1072
      %1147 = vst.msk [vmem:[#allocation3 + $0xb8] sm:$0xff] %vm1123, %v1074
      %1148 = vst.msk [vmem:[#allocation3 + $0xc0] sm:$0xff] %vm1123, %v1076
      %1149 = vst.msk [vmem:[#allocation3 + $0xc8] sm:$0xff] %vm1123, %v1078
      %1150 = vst.msk [vmem:[#allocation3 + $0xd0] sm:$0xff] %vm1123, %v1080
      %1151 = vst.msk [vmem:[#allocation3 + $0xd8] sm:$0xff] %vm1123, %v1082
      %1152 = vst.msk [vmem:[#allocation3 + $0xe0] sm:$0xff] %vm1123, %v1084
      %1153 = vst.msk [vmem:[#allocation3 + $0xe8] sm:$0xff] %vm1123, %v1086
      %1154 = vst.msk [vmem:[#allocation3 + $0xf0] sm:$0xff] %vm1123, %v1088
      %1155 = vst.msk [vmem:[#allocation3 + $0xf8] sm:$0xff] %vm1123, %v1090
      %v1156 = vld [vmem:[%s480 + $0x1] sm:$0xff]
      %v1157 = vld [vmem:[%s480 + $0x9] sm:$0xff]
      %v1158 = vld [vmem:[%s480 + $0x19] sm:$0xff]
      %v1159 = vld [vmem:[%s480 + $0x21] sm:$0xff]
      %v1160 = vld [vmem:[%s480 + $0x31] sm:$0xff]
      %v1161 = vld [vmem:[%s480 + $0x39] sm:$0xff]
      %v1162 = vld [vmem:[%s480 + $0x49] sm:$0xff]
      %v1163 = vld [vmem:[%s480 + $0x51] sm:$0xff]
      %v1164 = vld [vmem:[%s480 + $0x61] sm:$0xff]
      %v1165 = vld [vmem:[%s480 + $0x69] sm:$0xff]
      %v1166 = vld [vmem:[%s480 + $0x79] sm:$0xff]
      %v1167 = vld [vmem:[%s480 + $0x81] sm:$0xff]
      %v1168 = vld [vmem:[%s480 + $0x91] sm:$0xff]
      %v1169 = vld [vmem:[%s480 + $0x99] sm:$0xff]
      %v1170 = vld [vmem:[%s480 + $0xa9] sm:$0xff]
      %v1171 = vld [vmem:[%s480 + $0xb1] sm:$0xff]
      %v1172 = vld [vmem:[%s480 + $0xc1] sm:$0xff]
      %v1173 = vld [vmem:[%s480 + $0xc9] sm:$0xff]
      %v1174 = vld [vmem:[%s480 + $0xd9] sm:$0xff]
      %v1175 = vld [vmem:[%s480 + $0xe1] sm:$0xff]
      %v1176 = vld [vmem:[%s480 + $0xf1] sm:$0xff]
      %v1177 = vld [vmem:[%s480 + $0xf9] sm:$0xff]
      %v1178 = vld [vmem:[%s480 + $0x109] sm:$0xff]
      %v1179 = vld [vmem:[%s480 + $0x111] sm:$0xff]
      %v1180 = vld [vmem:[%s480 + $0x121] sm:$0xff]
      %v1181 = vld [vmem:[%s480 + $0x129] sm:$0xff]
      %v1182 = vld [vmem:[%s480 + $0x139] sm:$0xff]
      %v1183 = vld [vmem:[%s480 + $0x141] sm:$0xff]
      %v1184 = vld [vmem:[%s480 + $0x151] sm:$0xff]
      %v1185 = vld [vmem:[%s480 + $0x159] sm:$0xff]
      %v1186 = vld [vmem:[%s480 + $0x169] sm:$0xff]
      %v1187 = vld [vmem:[%s480 + $0x171] sm:$0xff]
      %1220 = vrot.lane.b32.xlu0 %v1156, 16
      %v1221 = vpop.permute.xlu0 %1220
      %1222 = vrot.lane.b32.xlu0 %v1157, 16
      %v1223 = vpop.permute.xlu0 %1222
      %1224 = vrot.lane.b32.xlu0 %v1158, 16
      %v1225 = vpop.permute.xlu0 %1224
      %1226 = vrot.lane.b32.xlu0 %v1159, 16
      %v1227 = vpop.permute.xlu0 %1226
      %1228 = vrot.lane.b32.xlu0 %v1160, 16
      %v1229 = vpop.permute.xlu0 %1228
      %1230 = vrot.lane.b32.xlu0 %v1161, 16
      %v1231 = vpop.permute.xlu0 %1230
      %1232 = vrot.lane.b32.xlu0 %v1162, 16
      %v1233 = vpop.permute.xlu0 %1232
      %1234 = vrot.lane.b32.xlu0 %v1163, 16
      %v1235 = vpop.permute.xlu0 %1234
      %1236 = vrot.lane.b32.xlu0 %v1164, 16
      %v1237 = vpop.permute.xlu0 %1236
      %1238 = vrot.lane.b32.xlu0 %v1165, 16
      %v1239 = vpop.permute.xlu0 %1238
      %1240 = vrot.lane.b32.xlu0 %v1166, 16
      %v1241 = vpop.permute.xlu0 %1240
      %1242 = vrot.lane.b32.xlu0 %v1167, 16
      %v1243 = vpop.permute.xlu0 %1242
      %1244 = vrot.lane.b32.xlu0 %v1168, 16
      %v1245 = vpop.permute.xlu0 %1244
      %1246 = vrot.lane.b32.xlu0 %v1169, 16
      %v1247 = vpop.permute.xlu0 %1246
      %1248 = vrot.lane.b32.xlu0 %v1170, 16
      %v1249 = vpop.permute.xlu0 %1248
      %1250 = vrot.lane.b32.xlu0 %v1171, 16
      %v1251 = vpop.permute.xlu0 %1250
      %1252 = vrot.lane.b32.xlu0 %v1172, 16
      %v1253 = vpop.permute.xlu0 %1252
      %1254 = vrot.lane.b32.xlu0 %v1173, 16
      %v1255 = vpop.permute.xlu0 %1254
      %1256 = vrot.lane.b32.xlu0 %v1174, 16
      %v1257 = vpop.permute.xlu0 %1256
      %1258 = vrot.lane.b32.xlu0 %v1175, 16
      %v1259 = vpop.permute.xlu0 %1258
      %1260 = vrot.lane.b32.xlu0 %v1176, 16
      %v1261 = vpop.permute.xlu0 %1260
      %1262 = vrot.lane.b32.xlu0 %v1177, 16
      %v1263 = vpop.permute.xlu0 %1262
      %1264 = vrot.lane.b32.xlu0 %v1178, 16
      %v1265 = vpop.permute.xlu0 %1264
      %1266 = vrot.lane.b32.xlu0 %v1179, 16
      %v1267 = vpop.permute.xlu0 %1266
      %1268 = vrot.lane.b32.xlu0 %v1180, 16
      %v1269 = vpop.permute.xlu0 %1268
      %1270 = vrot.lane.b32.xlu0 %v1181, 16
      %v1271 = vpop.permute.xlu0 %1270
      %1272 = vrot.lane.b32.xlu0 %v1182, 16
      %v1273 = vpop.permute.xlu0 %1272
      %1274 = vrot.lane.b32.xlu0 %v1183, 16
      %v1275 = vpop.permute.xlu0 %1274
      %1276 = vrot.lane.b32.xlu0 %v1184, 16
      %v1277 = vpop.permute.xlu0 %1276
      %1278 = vrot.lane.b32.xlu0 %v1185, 16
      %v1279 = vpop.permute.xlu0 %1278
      %1280 = vrot.lane.b32.xlu0 %v1186, 16
      %v1281 = vpop.permute.xlu0 %1280
      %1282 = vrot.lane.b32.xlu0 %v1187, 16
      %v1283 = vpop.permute.xlu0 %1282
      %vm1316 = vcmask 162944
      %1317 = vst.msk [vmem:[#allocation3] sm:$0xff] %vm1316, %v1221
      %1318 = vst.msk [vmem:[#allocation3 + $0x8] sm:$0xff] %vm1316, %v1223
      %1319 = vst.msk [vmem:[#allocation3 + $0x10] sm:$0xff] %vm1316, %v1225
      %1320 = vst.msk [vmem:[#allocation3 + $0x18] sm:$0xff] %vm1316, %v1227
      %1321 = vst.msk [vmem:[#allocation3 + $0x20] sm:$0xff] %vm1316, %v1229
      %1322 = vst.msk [vmem:[#allocation3 + $0x28] sm:$0xff] %vm1316, %v1231
      %1323 = vst.msk [vmem:[#allocation3 + $0x30] sm:$0xff] %vm1316, %v1233
      %1324 = vst.msk [vmem:[#allocation3 + $0x38] sm:$0xff] %vm1316, %v1235
      %1325 = vst.msk [vmem:[#allocation3 + $0x40] sm:$0xff] %vm1316, %v1237
      %1326 = vst.msk [vmem:[#allocation3 + $0x48] sm:$0xff] %vm1316, %v1239
      %1327 = vst.msk [vmem:[#allocation3 + $0x50] sm:$0xff] %vm1316, %v1241
      %1328 = vst.msk [vmem:[#allocation3 + $0x58] sm:$0xff] %vm1316, %v1243
      %1329 = vst.msk [vmem:[#allocation3 + $0x60] sm:$0xff] %vm1316, %v1245
      %1330 = vst.msk [vmem:[#allocation3 + $0x68] sm:$0xff] %vm1316, %v1247
      %1331 = vst.msk [vmem:[#allocation3 + $0x70] sm:$0xff] %vm1316, %v1249
      %1332 = vst.msk [vmem:[#allocation3 + $0x78] sm:$0xff] %vm1316, %v1251
      %1333 = vst.msk [vmem:[#allocation3 + $0x80] sm:$0xff] %vm1316, %v1253
      %1334 = vst.msk [vmem:[#allocation3 + $0x88] sm:$0xff] %vm1316, %v1255
      %1335 = vst.msk [vmem:[#allocation3 + $0x90] sm:$0xff] %vm1316, %v1257
      %1336 = vst.msk [vmem:[#allocation3 + $0x98] sm:$0xff] %vm1316, %v1259
      %1337 = vst.msk [vmem:[#allocation3 + $0xa0] sm:$0xff] %vm1316, %v1261
      %1338 = vst.msk [vmem:[#allocation3 + $0xa8] sm:$0xff] %vm1316, %v1263
      %1339 = vst.msk [vmem:[#allocation3 + $0xb0] sm:$0xff] %vm1316, %v1265
      %1340 = vst.msk [vmem:[#allocation3 + $0xb8] sm:$0xff] %vm1316, %v1267
      %1341 = vst.msk [vmem:[#allocation3 + $0xc0] sm:$0xff] %vm1316, %v1269
      %1342 = vst.msk [vmem:[#allocation3 + $0xc8] sm:$0xff] %vm1316, %v1271
      %1343 = vst.msk [vmem:[#allocation3 + $0xd0] sm:$0xff] %vm1316, %v1273
      %1344 = vst.msk [vmem:[#allocation3 + $0xd8] sm:$0xff] %vm1316, %v1275
      %1345 = vst.msk [vmem:[#allocation3 + $0xe0] sm:$0xff] %vm1316, %v1277
      %1346 = vst.msk [vmem:[#allocation3 + $0xe8] sm:$0xff] %vm1316, %v1279
      %1347 = vst.msk [vmem:[#allocation3 + $0xf0] sm:$0xff] %vm1316, %v1281
      %1348 = vst.msk [vmem:[#allocation3 + $0xf8] sm:$0xff] %vm1316, %v1283
      %v1349 = vld [vmem:[%s480 + $0x2] sm:$0xff]
      %v1350 = vld [vmem:[%s480 + $0xa] sm:$0xff]
      %v1351 = vld [vmem:[%s480 + $0x1a] sm:$0xff]
      %v1352 = vld [vmem:[%s480 + $0x22] sm:$0xff]
      %v1353 = vld [vmem:[%s480 + $0x32] sm:$0xff]
      %v1354 = vld [vmem:[%s480 + $0x3a] sm:$0xff]
      %v1355 = vld [vmem:[%s480 + $0x4a] sm:$0xff]
      %v1356 = vld [vmem:[%s480 + $0x52] sm:$0xff]
      %v1357 = vld [vmem:[%s480 + $0x62] sm:$0xff]
      %v1358 = vld [vmem:[%s480 + $0x6a] sm:$0xff]
      %v1359 = vld [vmem:[%s480 + $0x7a] sm:$0xff]
      %v1360 = vld [vmem:[%s480 + $0x82] sm:$0xff]
      %v1361 = vld [vmem:[%s480 + $0x92] sm:$0xff]
      %v1362 = vld [vmem:[%s480 + $0x9a] sm:$0xff]
      %v1363 = vld [vmem:[%s480 + $0xaa] sm:$0xff]
      %v1364 = vld [vmem:[%s480 + $0xb2] sm:$0xff]
      %v1365 = vld [vmem:[%s480 + $0xc2] sm:$0xff]
      %v1366 = vld [vmem:[%s480 + $0xca] sm:$0xff]
      %v1367 = vld [vmem:[%s480 + $0xda] sm:$0xff]
      %v1368 = vld [vmem:[%s480 + $0xe2] sm:$0xff]
      %v1369 = vld [vmem:[%s480 + $0xf2] sm:$0xff]
      %v1370 = vld [vmem:[%s480 + $0xfa] sm:$0xff]
      %v1371 = vld [vmem:[%s480 + $0x10a] sm:$0xff]
      %v1372 = vld [vmem:[%s480 + $0x112] sm:$0xff]
      %v1373 = vld [vmem:[%s480 + $0x122] sm:$0xff]
      %v1374 = vld [vmem:[%s480 + $0x12a] sm:$0xff]
      %v1375 = vld [vmem:[%s480 + $0x13a] sm:$0xff]
      %v1376 = vld [vmem:[%s480 + $0x142] sm:$0xff]
      %v1377 = vld [vmem:[%s480 + $0x152] sm:$0xff]
      %v1378 = vld [vmem:[%s480 + $0x15a] sm:$0xff]
      %v1379 = vld [vmem:[%s480 + $0x16a] sm:$0xff]
      %v1380 = vld [vmem:[%s480 + $0x172] sm:$0xff]
      %1413 = vrot.lane.b32.xlu0 %v1349, 20
      %v1414 = vpop.permute.xlu0 %1413
      %1415 = vrot.lane.b32.xlu0 %v1350, 20
      %v1416 = vpop.permute.xlu0 %1415
      %1417 = vrot.lane.b32.xlu0 %v1351, 20
      %v1418 = vpop.permute.xlu0 %1417
      %1419 = vrot.lane.b32.xlu0 %v1352, 20
      %v1420 = vpop.permute.xlu0 %1419
      %1421 = vrot.lane.b32.xlu0 %v1353, 20
      %v1422 = vpop.permute.xlu0 %1421
      %1423 = vrot.lane.b32.xlu0 %v1354, 20
      %v1424 = vpop.permute.xlu0 %1423
      %1425 = vrot.lane.b32.xlu0 %v1355, 20
      %v1426 = vpop.permute.xlu0 %1425
      %1427 = vrot.lane.b32.xlu0 %v1356, 20
      %v1428 = vpop.permute.xlu0 %1427
      %1429 = vrot.lane.b32.xlu0 %v1357, 20
      %v1430 = vpop.permute.xlu0 %1429
      %1431 = vrot.lane.b32.xlu0 %v1358, 20
      %v1432 = vpop.permute.xlu0 %1431
      %1433 = vrot.lane.b32.xlu0 %v1359, 20
      %v1434 = vpop.permute.xlu0 %1433
      %1435 = vrot.lane.b32.xlu0 %v1360, 20
      %v1436 = vpop.permute.xlu0 %1435
      %1437 = vrot.lane.b32.xlu0 %v1361, 20
      %v1438 = vpop.permute.xlu0 %1437
      %1439 = vrot.lane.b32.xlu0 %v1362, 20
      %v1440 = vpop.permute.xlu0 %1439
      %1441 = vrot.lane.b32.xlu0 %v1363, 20
      %v1442 = vpop.permute.xlu0 %1441
      %1443 = vrot.lane.b32.xlu0 %v1364, 20
      %v1444 = vpop.permute.xlu0 %1443
      %1445 = vrot.lane.b32.xlu0 %v1365, 20
      %v1446 = vpop.permute.xlu0 %1445
      %1447 = vrot.lane.b32.xlu0 %v1366, 20
      %v1448 = vpop.permute.xlu0 %1447
      %1449 = vrot.lane.b32.xlu0 %v1367, 20
      %v1450 = vpop.permute.xlu0 %1449
      %1451 = vrot.lane.b32.xlu0 %v1368, 20
      %v1452 = vpop.permute.xlu0 %1451
      %1453 = vrot.lane.b32.xlu0 %v1369, 20
      %v1454 = vpop.permute.xlu0 %1453
      %1455 = vrot.lane.b32.xlu0 %v1370, 20
      %v1456 = vpop.permute.xlu0 %1455
      %1457 = vrot.lane.b32.xlu0 %v1371, 20
      %v1458 = vpop.permute.xlu0 %1457
      %1459 = vrot.lane.b32.xlu0 %v1372, 20
      %v1460 = vpop.permute.xlu0 %1459
      %1461 = vrot.lane.b32.xlu0 %v1373, 20
      %v1462 = vpop.permute.xlu0 %1461
      %1463 = vrot.lane.b32.xlu0 %v1374, 20
      %v1464 = vpop.permute.xlu0 %1463
      %1465 = vrot.lane.b32.xlu0 %v1375, 20
      %v1466 = vpop.permute.xlu0 %1465
      %1467 = vrot.lane.b32.xlu0 %v1376, 20
      %v1468 = vpop.permute.xlu0 %1467
      %1469 = vrot.lane.b32.xlu0 %v1377, 20
      %v1470 = vpop.permute.xlu0 %1469
      %1471 = vrot.lane.b32.xlu0 %v1378, 20
      %v1472 = vpop.permute.xlu0 %1471
      %1473 = vrot.lane.b32.xlu0 %v1379, 20
      %v1474 = vpop.permute.xlu0 %1473
      %1475 = vrot.lane.b32.xlu0 %v1380, 20
      %v1476 = vpop.permute.xlu0 %1475
      %vm1509 = vcmask 195744
      %1510 = vst.msk [vmem:[#allocation3] sm:$0xff] %vm1509, %v1414
      %1511 = vst.msk [vmem:[#allocation3 + $0x8] sm:$0xff] %vm1509, %v1416
      %1512 = vst.msk [vmem:[#allocation3 + $0x10] sm:$0xff] %vm1509, %v1418
      %1513 = vst.msk [vmem:[#allocation3 + $0x18] sm:$0xff] %vm1509, %v1420
      %1514 = vst.msk [vmem:[#allocation3 + $0x20] sm:$0xff] %vm1509, %v1422
      %1515 = vst.msk [vmem:[#allocation3 + $0x28] sm:$0xff] %vm1509, %v1424
      %1516 = vst.msk [vmem:[#allocation3 + $0x30] sm:$0xff] %vm1509, %v1426
      %1517 = vst.msk [vmem:[#allocation3 + $0x38] sm:$0xff] %vm1509, %v1428
      %1518 = vst.msk [vmem:[#allocation3 + $0x40] sm:$0xff] %vm1509, %v1430
      %1519 = vst.msk [vmem:[#allocation3 + $0x48] sm:$0xff] %vm1509, %v1432
      %1520 = vst.msk [vmem:[#allocation3 + $0x50] sm:$0xff] %vm1509, %v1434
      %1521 = vst.msk [vmem:[#allocation3 + $0x58] sm:$0xff] %vm1509, %v1436
      %1522 = vst.msk [vmem:[#allocation3 + $0x60] sm:$0xff] %vm1509, %v1438
      %1523 = vst.msk [vmem:[#allocation3 + $0x68] sm:$0xff] %vm1509, %v1440
      %1524 = vst.msk [vmem:[#allocation3 + $0x70] sm:$0xff] %vm1509, %v1442
      %1525 = vst.msk [vmem:[#allocation3 + $0x78] sm:$0xff] %vm1509, %v1444
      %1526 = vst.msk [vmem:[#allocation3 + $0x80] sm:$0xff] %vm1509, %v1446
      %1527 = vst.msk [vmem:[#allocation3 + $0x88] sm:$0xff] %vm1509, %v1448
      %1528 = vst.msk [vmem:[#allocation3 + $0x90] sm:$0xff] %vm1509, %v1450
      %1529 = vst.msk [vmem:[#allocation3 + $0x98] sm:$0xff] %vm1509, %v1452
      %1530 = vst.msk [vmem:[#allocation3 + $0xa0] sm:$0xff] %vm1509, %v1454
      %1531 = vst.msk [vmem:[#allocation3 + $0xa8] sm:$0xff] %vm1509, %v1456
      %1532 = vst.msk [vmem:[#allocation3 + $0xb0] sm:$0xff] %vm1509, %v1458
      %1533 = vst.msk [vmem:[#allocation3 + $0xb8] sm:$0xff] %vm1509, %v1460
      %1534 = vst.msk [vmem:[#allocation3 + $0xc0] sm:$0xff] %vm1509, %v1462
      %1535 = vst.msk [vmem:[#allocation3 + $0xc8] sm:$0xff] %vm1509, %v1464
      %1536 = vst.msk [vmem:[#allocation3 + $0xd0] sm:$0xff] %vm1509, %v1466
      %1537 = vst.msk [vmem:[#allocation3 + $0xd8] sm:$0xff] %vm1509, %v1468
      %1538 = vst.msk [vmem:[#allocation3 + $0xe0] sm:$0xff] %vm1509, %v1470
      %1539 = vst.msk [vmem:[#allocation3 + $0xe8] sm:$0xff] %vm1509, %v1472
      %1540 = vst.msk [vmem:[#allocation3 + $0xf0] sm:$0xff] %vm1509, %v1474
      %1541 = vst.msk [vmem:[#allocation3 + $0xf8] sm:$0xff] %vm1509, %v1476
      %s1542 = scalar_lea.vmem [#allocation2], 48
      %v1543 = vld [vmem:[%s1542] sm:$0xff]
      %v1544 = vld [vmem:[%s1542 + $0x8] sm:$0xff]
      %v1545 = vld [vmem:[%s1542 + $0x18] sm:$0xff]
      %v1546 = vld [vmem:[%s1542 + $0x20] sm:$0xff]
      %v1547 = vld [vmem:[%s1542 + $0x30] sm:$0xff]
      %v1548 = vld [vmem:[%s1542 + $0x38] sm:$0xff]
      %v1549 = vld [vmem:[%s1542 + $0x48] sm:$0xff]
      %v1550 = vld [vmem:[%s1542 + $0x50] sm:$0xff]
      %v1551 = vld [vmem:[%s1542 + $0x60] sm:$0xff]
      %v1552 = vld [vmem:[%s1542 + $0x68] sm:$0xff]
      %v1553 = vld [vmem:[%s1542 + $0x78] sm:$0xff]
      %v1554 = vld [vmem:[%s1542 + $0x80] sm:$0xff]
      %v1555 = vld [vmem:[%s1542 + $0x90] sm:$0xff]
      %v1556 = vld [vmem:[%s1542 + $0x98] sm:$0xff]
      %v1557 = vld [vmem:[%s1542 + $0xa8] sm:$0xff]
      %v1558 = vld [vmem:[%s1542 + $0xb0] sm:$0xff]
      %v1559 = vld [vmem:[%s1542 + $0xc0] sm:$0xff]
      %v1560 = vld [vmem:[%s1542 + $0xc8] sm:$0xff]
      %v1561 = vld [vmem:[%s1542 + $0xd8] sm:$0xff]
      %v1562 = vld [vmem:[%s1542 + $0xe0] sm:$0xff]
      %v1563 = vld [vmem:[%s1542 + $0xf0] sm:$0xff]
      %v1564 = vld [vmem:[%s1542 + $0xf8] sm:$0xff]
      %v1565 = vld [vmem:[%s1542 + $0x108] sm:$0xff]
      %v1566 = vld [vmem:[%s1542 + $0x110] sm:$0xff]
      %v1567 = vld [vmem:[%s1542 + $0x120] sm:$0xff]
      %v1568 = vld [vmem:[%s1542 + $0x128] sm:$0xff]
      %v1569 = vld [vmem:[%s1542 + $0x138] sm:$0xff]
      %v1570 = vld [vmem:[%s1542 + $0x140] sm:$0xff]
      %v1571 = vld [vmem:[%s1542 + $0x150] sm:$0xff]
      %v1572 = vld [vmem:[%s1542 + $0x158] sm:$0xff]
      %v1573 = vld [vmem:[%s1542 + $0x168] sm:$0xff]
      %v1574 = vld [vmem:[%s1542 + $0x170] sm:$0xff]
      %1607 = vrot.lane.b32.xlu0 %v1543, 24
      %v1608 = vpop.permute.xlu0 %1607
      %1609 = vrot.lane.b32.xlu0 %v1544, 24
      %v1610 = vpop.permute.xlu0 %1609
      %1611 = vrot.lane.b32.xlu0 %v1545, 24
      %v1612 = vpop.permute.xlu0 %1611
      %1613 = vrot.lane.b32.xlu0 %v1546, 24
      %v1614 = vpop.permute.xlu0 %1613
      %1615 = vrot.lane.b32.xlu0 %v1547, 24
      %v1616 = vpop.permute.xlu0 %1615
      %1617 = vrot.lane.b32.xlu0 %v1548, 24
      %v1618 = vpop.permute.xlu0 %1617
      %1619 = vrot.lane.b32.xlu0 %v1549, 24
      %v1620 = vpop.permute.xlu0 %1619
      %1621 = vrot.lane.b32.xlu0 %v1550, 24
      %v1622 = vpop.permute.xlu0 %1621
      %1623 = vrot.lane.b32.xlu0 %v1551, 24
      %v1624 = vpop.permute.xlu0 %1623
      %1625 = vrot.lane.b32.xlu0 %v1552, 24
      %v1626 = vpop.permute.xlu0 %1625
      %1627 = vrot.lane.b32.xlu0 %v1553, 24
      %v1628 = vpop.permute.xlu0 %1627
      %1629 = vrot.lane.b32.xlu0 %v1554, 24
      %v1630 = vpop.permute.xlu0 %1629
      %1631 = vrot.lane.b32.xlu0 %v1555, 24
      %v1632 = vpop.permute.xlu0 %1631
      %1633 = vrot.lane.b32.xlu0 %v1556, 24
      %v1634 = vpop.permute.xlu0 %1633
      %1635 = vrot.lane.b32.xlu0 %v1557, 24
      %v1636 = vpop.permute.xlu0 %1635
      %1637 = vrot.lane.b32.xlu0 %v1558, 24
      %v1638 = vpop.permute.xlu0 %1637
      %1639 = vrot.lane.b32.xlu0 %v1559, 24
      %v1640 = vpop.permute.xlu0 %1639
      %1641 = vrot.lane.b32.xlu0 %v1560, 24
      %v1642 = vpop.permute.xlu0 %1641
      %1643 = vrot.lane.b32.xlu0 %v1561, 24
      %v1644 = vpop.permute.xlu0 %1643
      %1645 = vrot.lane.b32.xlu0 %v1562, 24
      %v1646 = vpop.permute.xlu0 %1645
      %1647 = vrot.lane.b32.xlu0 %v1563, 24
      %v1648 = vpop.permute.xlu0 %1647
      %1649 = vrot.lane.b32.xlu0 %v1564, 24
      %v1650 = vpop.permute.xlu0 %1649
      %1651 = vrot.lane.b32.xlu0 %v1565, 24
      %v1652 = vpop.permute.xlu0 %1651
      %1653 = vrot.lane.b32.xlu0 %v1566, 24
      %v1654 = vpop.permute.xlu0 %1653
      %1655 = vrot.lane.b32.xlu0 %v1567, 24
      %v1656 = vpop.permute.xlu0 %1655
      %1657 = vrot.lane.b32.xlu0 %v1568, 24
      %v1658 = vpop.permute.xlu0 %1657
      %1659 = vrot.lane.b32.xlu0 %v1569, 24
      %v1660 = vpop.permute.xlu0 %1659
      %1661 = vrot.lane.b32.xlu0 %v1570, 24
      %v1662 = vpop.permute.xlu0 %1661
      %1663 = vrot.lane.b32.xlu0 %v1571, 24
      %v1664 = vpop.permute.xlu0 %1663
      %1665 = vrot.lane.b32.xlu0 %v1572, 24
      %v1666 = vpop.permute.xlu0 %1665
      %1667 = vrot.lane.b32.xlu0 %v1573, 24
      %v1668 = vpop.permute.xlu0 %1667
      %1669 = vrot.lane.b32.xlu0 %v1574, 24
      %v1670 = vpop.permute.xlu0 %1669
      %vm1703 = vcmask 228544
      %1704 = vst.msk [vmem:[#allocation3] sm:$0xff] %vm1703, %v1608
      %1705 = vst.msk [vmem:[#allocation3 + $0x8] sm:$0xff] %vm1703, %v1610
      %1706 = vst.msk [vmem:[#allocation3 + $0x10] sm:$0xff] %vm1703, %v1612
      %1707 = vst.msk [vmem:[#allocation3 + $0x18] sm:$0xff] %vm1703, %v1614
      %1708 = vst.msk [vmem:[#allocation3 + $0x20] sm:$0xff] %vm1703, %v1616
      %1709 = vst.msk [vmem:[#allocation3 + $0x28] sm:$0xff] %vm1703, %v1618
      %1710 = vst.msk [vmem:[#allocation3 + $0x30] sm:$0xff] %vm1703, %v1620
      %1711 = vst.msk [vmem:[#allocation3 + $0x38] sm:$0xff] %vm1703, %v1622
      %1712 = vst.msk [vmem:[#allocation3 + $0x40] sm:$0xff] %vm1703, %v1624
      %1713 = vst.msk [vmem:[#allocation3 + $0x48] sm:$0xff] %vm1703, %v1626
      %1714 = vst.msk [vmem:[#allocation3 + $0x50] sm:$0xff] %vm1703, %v1628
      %1715 = vst.msk [vmem:[#allocation3 + $0x58] sm:$0xff] %vm1703, %v1630
      %1716 = vst.msk [vmem:[#allocation3 + $0x60] sm:$0xff] %vm1703, %v1632
      %1717 = vst.msk [vmem:[#allocation3 + $0x68] sm:$0xff] %vm1703, %v1634
      %1718 = vst.msk [vmem:[#allocation3 + $0x70] sm:$0xff] %vm1703, %v1636
      %1719 = vst.msk [vmem:[#allocation3 + $0x78] sm:$0xff] %vm1703, %v1638
      %1720 = vst.msk [vmem:[#allocation3 + $0x80] sm:$0xff] %vm1703, %v1640
      %1721 = vst.msk [vmem:[#allocation3 + $0x88] sm:$0xff] %vm1703, %v1642
      %1722 = vst.msk [vmem:[#allocation3 + $0x90] sm:$0xff] %vm1703, %v1644
      %1723 = vst.msk [vmem:[#allocation3 + $0x98] sm:$0xff] %vm1703, %v1646
      %1724 = vst.msk [vmem:[#allocation3 + $0xa0] sm:$0xff] %vm1703, %v1648
      %1725 = vst.msk [vmem:[#allocation3 + $0xa8] sm:$0xff] %vm1703, %v1650
      %1726 = vst.msk [vmem:[#allocation3 + $0xb0] sm:$0xff] %vm1703, %v1652
      %1727 = vst.msk [vmem:[#allocation3 + $0xb8] sm:$0xff] %vm1703, %v1654
      %1728 = vst.msk [vmem:[#allocation3 + $0xc0] sm:$0xff] %vm1703, %v1656
      %1729 = vst.msk [vmem:[#allocation3 + $0xc8] sm:$0xff] %vm1703, %v1658
      %1730 = vst.msk [vmem:[#allocation3 + $0xd0] sm:$0xff] %vm1703, %v1660
      %1731 = vst.msk [vmem:[#allocation3 + $0xd8] sm:$0xff] %vm1703, %v1662
      %1732 = vst.msk [vmem:[#allocation3 + $0xe0] sm:$0xff] %vm1703, %v1664
      %1733 = vst.msk [vmem:[#allocation3 + $0xe8] sm:$0xff] %vm1703, %v1666
      %1734 = vst.msk [vmem:[#allocation3 + $0xf0] sm:$0xff] %vm1703, %v1668
      %1735 = vst.msk [vmem:[#allocation3 + $0xf8] sm:$0xff] %vm1703, %v1670
      %v1736 = vld [vmem:[%s1542 + $0x1] sm:$0xff]
      %v1737 = vld [vmem:[%s1542 + $0x9] sm:$0xff]
      %v1738 = vld [vmem:[%s1542 + $0x19] sm:$0xff]
      %v1739 = vld [vmem:[%s1542 + $0x21] sm:$0xff]
      %v1740 = vld [vmem:[%s1542 + $0x31] sm:$0xff]
      %v1741 = vld [vmem:[%s1542 + $0x39] sm:$0xff]
      %v1742 = vld [vmem:[%s1542 + $0x49] sm:$0xff]
      %v1743 = vld [vmem:[%s1542 + $0x51] sm:$0xff]
      %v1744 = vld [vmem:[%s1542 + $0x61] sm:$0xff]
      %v1745 = vld [vmem:[%s1542 + $0x69] sm:$0xff]
      %v1746 = vld [vmem:[%s1542 + $0x79] sm:$0xff]
      %v1747 = vld [vmem:[%s1542 + $0x81] sm:$0xff]
      %v1748 = vld [vmem:[%s1542 + $0x91] sm:$0xff]
      %v1749 = vld [vmem:[%s1542 + $0x99] sm:$0xff]
      %v1750 = vld [vmem:[%s1542 + $0xa9] sm:$0xff]
      %v1751 = vld [vmem:[%s1542 + $0xb1] sm:$0xff]
      %v1752 = vld [vmem:[%s1542 + $0xc1] sm:$0xff]
      %v1753 = vld [vmem:[%s1542 + $0xc9] sm:$0xff]
      %v1754 = vld [vmem:[%s1542 + $0xd9] sm:$0xff]
      %v1755 = vld [vmem:[%s1542 + $0xe1] sm:$0xff]
      %v1756 = vld [vmem:[%s1542 + $0xf1] sm:$0xff]
      %v1757 = vld [vmem:[%s1542 + $0xf9] sm:$0xff]
      %v1758 = vld [vmem:[%s1542 + $0x109] sm:$0xff]
      %v1759 = vld [vmem:[%s1542 + $0x111] sm:$0xff]
      %v1760 = vld [vmem:[%s1542 + $0x121] sm:$0xff]
      %v1761 = vld [vmem:[%s1542 + $0x129] sm:$0xff]
      %v1762 = vld [vmem:[%s1542 + $0x139] sm:$0xff]
      %v1763 = vld [vmem:[%s1542 + $0x141] sm:$0xff]
      %v1764 = vld [vmem:[%s1542 + $0x151] sm:$0xff]
      %v1765 = vld [vmem:[%s1542 + $0x159] sm:$0xff]
      %v1766 = vld [vmem:[%s1542 + $0x169] sm:$0xff]
      %v1767 = vld [vmem:[%s1542 + $0x171] sm:$0xff]
      %1800 = vrot.lane.b32.xlu0 %v1736, 28
      %v1801 = vpop.permute.xlu0 %1800
      %1802 = vrot.lane.b32.xlu0 %v1737, 28
      %v1803 = vpop.permute.xlu0 %1802
      %1804 = vrot.lane.b32.xlu0 %v1738, 28
      %v1805 = vpop.permute.xlu0 %1804
      %1806 = vrot.lane.b32.xlu0 %v1739, 28
      %v1807 = vpop.permute.xlu0 %1806
      %1808 = vrot.lane.b32.xlu0 %v1740, 28
      %v1809 = vpop.permute.xlu0 %1808
      %1810 = vrot.lane.b32.xlu0 %v1741, 28
      %v1811 = vpop.permute.xlu0 %1810
      %1812 = vrot.lane.b32.xlu0 %v1742, 28
      %v1813 = vpop.permute.xlu0 %1812
      %1814 = vrot.lane.b32.xlu0 %v1743, 28
      %v1815 = vpop.permute.xlu0 %1814
      %1816 = vrot.lane.b32.xlu0 %v1744, 28
      %v1817 = vpop.permute.xlu0 %1816
      %1818 = vrot.lane.b32.xlu0 %v1745, 28
      %v1819 = vpop.permute.xlu0 %1818
      %1820 = vrot.lane.b32.xlu0 %v1746, 28
      %v1821 = vpop.permute.xlu0 %1820
      %1822 = vrot.lane.b32.xlu0 %v1747, 28
      %v1823 = vpop.permute.xlu0 %1822
      %1824 = vrot.lane.b32.xlu0 %v1748, 28
      %v1825 = vpop.permute.xlu0 %1824
      %1826 = vrot.lane.b32.xlu0 %v1749, 28
      %v1827 = vpop.permute.xlu0 %1826
      %1828 = vrot.lane.b32.xlu0 %v1750, 28
      %v1829 = vpop.permute.xlu0 %1828
      %1830 = vrot.lane.b32.xlu0 %v1751, 28
      %v1831 = vpop.permute.xlu0 %1830
      %1832 = vrot.lane.b32.xlu0 %v1752, 28
      %v1833 = vpop.permute.xlu0 %1832
      %1834 = vrot.lane.b32.xlu0 %v1753, 28
      %v1835 = vpop.permute.xlu0 %1834
      %1836 = vrot.lane.b32.xlu0 %v1754, 28
      %v1837 = vpop.permute.xlu0 %1836
      %1838 = vrot.lane.b32.xlu0 %v1755, 28
      %v1839 = vpop.permute.xlu0 %1838
      %1840 = vrot.lane.b32.xlu0 %v1756, 28
      %v1841 = vpop.permute.xlu0 %1840
      %1842 = vrot.lane.b32.xlu0 %v1757, 28
      %v1843 = vpop.permute.xlu0 %1842
      %1844 = vrot.lane.b32.xlu0 %v1758, 28
      %v1845 = vpop.permute.xlu0 %1844
      %1846 = vrot.lane.b32.xlu0 %v1759, 28
      %v1847 = vpop.permute.xlu0 %1846
      %1848 = vrot.lane.b32.xlu0 %v1760, 28
      %v1849 = vpop.permute.xlu0 %1848
      %1850 = vrot.lane.b32.xlu0 %v1761, 28
      %v1851 = vpop.permute.xlu0 %1850
      %1852 = vrot.lane.b32.xlu0 %v1762, 28
      %v1853 = vpop.permute.xlu0 %1852
      %1854 = vrot.lane.b32.xlu0 %v1763, 28
      %v1855 = vpop.permute.xlu0 %1854
      %1856 = vrot.lane.b32.xlu0 %v1764, 28
      %v1857 = vpop.permute.xlu0 %1856
      %1858 = vrot.lane.b32.xlu0 %v1765, 28
      %v1859 = vpop.permute.xlu0 %1858
      %1860 = vrot.lane.b32.xlu0 %v1766, 28
      %v1861 = vpop.permute.xlu0 %1860
      %1862 = vrot.lane.b32.xlu0 %v1767, 28
      %v1863 = vpop.permute.xlu0 %1862
      %vm1896 = vcmask 261344
      %1897 = vst.msk [vmem:[#allocation3] sm:$0xff] %vm1896, %v1801
      %1898 = vst.msk [vmem:[#allocation3 + $0x8] sm:$0xff] %vm1896, %v1803
      %1899 = vst.msk [vmem:[#allocation3 + $0x10] sm:$0xff] %vm1896, %v1805
      %1900 = vst.msk [vmem:[#allocation3 + $0x18] sm:$0xff] %vm1896, %v1807
      %1901 = vst.msk [vmem:[#allocation3 + $0x20] sm:$0xff] %vm1896, %v1809
      %1902 = vst.msk [vmem:[#allocation3 + $0x28] sm:$0xff] %vm1896, %v1811
      %1903 = vst.msk [vmem:[#allocation3 + $0x30] sm:$0xff] %vm1896, %v1813
      %1904 = vst.msk [vmem:[#allocation3 + $0x38] sm:$0xff] %vm1896, %v1815
      %1905 = vst.msk [vmem:[#allocation3 + $0x40] sm:$0xff] %vm1896, %v1817
      %1906 = vst.msk [vmem:[#allocation3 + $0x48] sm:$0xff] %vm1896, %v1819
      %1907 = vst.msk [vmem:[#allocation3 + $0x50] sm:$0xff] %vm1896, %v1821
      %1908 = vst.msk [vmem:[#allocation3 + $0x58] sm:$0xff] %vm1896, %v1823
      %1909 = vst.msk [vmem:[#allocation3 + $0x60] sm:$0xff] %vm1896, %v1825
      %1910 = vst.msk [vmem:[#allocation3 + $0x68] sm:$0xff] %vm1896, %v1827
      %1911 = vst.msk [vmem:[#allocation3 + $0x70] sm:$0xff] %vm1896, %v1829
      %1912 = vst.msk [vmem:[#allocation3 + $0x78] sm:$0xff] %vm1896, %v1831
      %1913 = vst.msk [vmem:[#allocation3 + $0x80] sm:$0xff] %vm1896, %v1833
      %1914 = vst.msk [vmem:[#allocation3 + $0x88] sm:$0xff] %vm1896, %v1835
      %1915 = vst.msk [vmem:[#allocation3 + $0x90] sm:$0xff] %vm1896, %v1837
      %1916 = vst.msk [vmem:[#allocation3 + $0x98] sm:$0xff] %vm1896, %v1839
      %1917 = vst.msk [vmem:[#allocation3 + $0xa0] sm:$0xff] %vm1896, %v1841
      %1918 = vst.msk [vmem:[#allocation3 + $0xa8] sm:$0xff] %vm1896, %v1843
      %1919 = vst.msk [vmem:[#allocation3 + $0xb0] sm:$0xff] %vm1896, %v1845
      %1920 = vst.msk [vmem:[#allocation3 + $0xb8] sm:$0xff] %vm1896, %v1847
      %1921 = vst.msk [vmem:[#allocation3 + $0xc0] sm:$0xff] %vm1896, %v1849
      %1922 = vst.msk [vmem:[#allocation3 + $0xc8] sm:$0xff] %vm1896, %v1851
      %1923 = vst.msk [vmem:[#allocation3 + $0xd0] sm:$0xff] %vm1896, %v1853
      %1924 = vst.msk [vmem:[#allocation3 + $0xd8] sm:$0xff] %vm1896, %v1855
      %1925 = vst.msk [vmem:[#allocation3 + $0xe0] sm:$0xff] %vm1896, %v1857
      %1926 = vst.msk [vmem:[#allocation3 + $0xe8] sm:$0xff] %vm1896, %v1859
      %1927 = vst.msk [vmem:[#allocation3 + $0xf0] sm:$0xff] %vm1896, %v1861
      %1928 = vst.msk [vmem:[#allocation3 + $0xf8] sm:$0xff] %vm1896, %v1863
      %v1929 = vld [vmem:[%s1542 + $0x2] sm:$0xff]
      %v1930 = vld [vmem:[%s1542 + $0xa] sm:$0xff]
      %v1931 = vld [vmem:[%s1542 + $0x1a] sm:$0xff]
      %v1932 = vld [vmem:[%s1542 + $0x22] sm:$0xff]
      %v1933 = vld [vmem:[%s1542 + $0x32] sm:$0xff]
      %v1934 = vld [vmem:[%s1542 + $0x3a] sm:$0xff]
      %v1935 = vld [vmem:[%s1542 + $0x4a] sm:$0xff]
      %v1936 = vld [vmem:[%s1542 + $0x52] sm:$0xff]
      %v1937 = vld [vmem:[%s1542 + $0x62] sm:$0xff]
      %v1938 = vld [vmem:[%s1542 + $0x6a] sm:$0xff]
      %v1939 = vld [vmem:[%s1542 + $0x7a] sm:$0xff]
      %v1940 = vld [vmem:[%s1542 + $0x82] sm:$0xff]
      %v1941 = vld [vmem:[%s1542 + $0x92] sm:$0xff]
      %v1942 = vld [vmem:[%s1542 + $0x9a] sm:$0xff]
      %v1943 = vld [vmem:[%s1542 + $0xaa] sm:$0xff]
      %v1944 = vld [vmem:[%s1542 + $0xb2] sm:$0xff]
      %v1945 = vld [vmem:[%s1542 + $0xc2] sm:$0xff]
      %v1946 = vld [vmem:[%s1542 + $0xca] sm:$0xff]
      %v1947 = vld [vmem:[%s1542 + $0xda] sm:$0xff]
      %v1948 = vld [vmem:[%s1542 + $0xe2] sm:$0xff]
      %v1949 = vld [vmem:[%s1542 + $0xf2] sm:$0xff]
      %v1950 = vld [vmem:[%s1542 + $0xfa] sm:$0xff]
      %v1951 = vld [vmem:[%s1542 + $0x10a] sm:$0xff]
      %v1952 = vld [vmem:[%s1542 + $0x112] sm:$0xff]
      %v1953 = vld [vmem:[%s1542 + $0x122] sm:$0xff]
      %v1954 = vld [vmem:[%s1542 + $0x12a] sm:$0xff]
      %v1955 = vld [vmem:[%s1542 + $0x13a] sm:$0xff]
      %v1956 = vld [vmem:[%s1542 + $0x142] sm:$0xff]
      %v1957 = vld [vmem:[%s1542 + $0x152] sm:$0xff]
      %v1958 = vld [vmem:[%s1542 + $0x15a] sm:$0xff]
      %v1959 = vld [vmem:[%s1542 + $0x16a] sm:$0xff]
      %v1960 = vld [vmem:[%s1542 + $0x172] sm:$0xff]
      %1993 = vrot.lane.b32.xlu0 %v1929, 32
      %v1994 = vpop.permute.xlu0 %1993
      %1995 = vrot.lane.b32.xlu0 %v1930, 32
      %v1996 = vpop.permute.xlu0 %1995
      %1997 = vrot.lane.b32.xlu0 %v1931, 32
      %v1998 = vpop.permute.xlu0 %1997
      %1999 = vrot.lane.b32.xlu0 %v1932, 32
      %v2000 = vpop.permute.xlu0 %1999
      %2001 = vrot.lane.b32.xlu0 %v1933, 32
      %v2002 = vpop.permute.xlu0 %2001
      %2003 = vrot.lane.b32.xlu0 %v1934, 32
      %v2004 = vpop.permute.xlu0 %2003
      %2005 = vrot.lane.b32.xlu0 %v1935, 32
      %v2006 = vpop.permute.xlu0 %2005
      %2007 = vrot.lane.b32.xlu0 %v1936, 32
      %v2008 = vpop.permute.xlu0 %2007
      %2009 = vrot.lane.b32.xlu0 %v1937, 32
      %v2010 = vpop.permute.xlu0 %2009
      %2011 = vrot.lane.b32.xlu0 %v1938, 32
      %v2012 = vpop.permute.xlu0 %2011
      %2013 = vrot.lane.b32.xlu0 %v1939, 32
      %v2014 = vpop.permute.xlu0 %2013
      %2015 = vrot.lane.b32.xlu0 %v1940, 32
      %v2016 = vpop.permute.xlu0 %2015
      %2017 = vrot.lane.b32.xlu0 %v1941, 32
      %v2018 = vpop.permute.xlu0 %2017
      %2019 = vrot.lane.b32.xlu0 %v1942, 32
      %v2020 = vpop.permute.xlu0 %2019
      %2021 = vrot.lane.b32.xlu0 %v1943, 32
      %v2022 = vpop.permute.xlu0 %2021
      %2023 = vrot.lane.b32.xlu0 %v1944, 32
      %v2024 = vpop.permute.xlu0 %2023
      %2025 = vrot.lane.b32.xlu0 %v1945, 32
      %v2026 = vpop.permute.xlu0 %2025
      %2027 = vrot.lane.b32.xlu0 %v1946, 32
      %v2028 = vpop.permute.xlu0 %2027
      %2029 = vrot.lane.b32.xlu0 %v1947, 32
      %v2030 = vpop.permute.xlu0 %2029
      %2031 = vrot.lane.b32.xlu0 %v1948, 32
      %v2032 = vpop.permute.xlu0 %2031
      %2033 = vrot.lane.b32.xlu0 %v1949, 32
      %v2034 = vpop.permute.xlu0 %2033
      %2035 = vrot.lane.b32.xlu0 %v1950, 32
      %v2036 = vpop.permute.xlu0 %2035
      %2037 = vrot.lane.b32.xlu0 %v1951, 32
      %v2038 = vpop.permute.xlu0 %2037
      %2039 = vrot.lane.b32.xlu0 %v1952, 32
      %v2040 = vpop.permute.xlu0 %2039
      %2041 = vrot.lane.b32.xlu0 %v1953, 32
      %v2042 = vpop.permute.xlu0 %2041
      %2043 = vrot.lane.b32.xlu0 %v1954, 32
      %v2044 = vpop.permute.xlu0 %2043
      %2045 = vrot.lane.b32.xlu0 %v1955, 32
      %v2046 = vpop.permute.xlu0 %2045
      %2047 = vrot.lane.b32.xlu0 %v1956, 32
      %v2048 = vpop.permute.xlu0 %2047
      %2049 = vrot.lane.b32.xlu0 %v1957, 32
      %v2050 = vpop.permute.xlu0 %2049
      %2051 = vrot.lane.b32.xlu0 %v1958, 32
      %v2052 = vpop.permute.xlu0 %2051
      %2053 = vrot.lane.b32.xlu0 %v1959, 32
      %v2054 = vpop.permute.xlu0 %2053
      %2055 = vrot.lane.b32.xlu0 %v1960, 32
      %v2056 = vpop.permute.xlu0 %2055
      %vm2089 = vcmask 294144
      %2090 = vst.msk [vmem:[#allocation3] sm:$0xff] %vm2089, %v1994
      %2091 = vst.msk [vmem:[#allocation3 + $0x8] sm:$0xff] %vm2089, %v1996
      %2092 = vst.msk [vmem:[#allocation3 + $0x10] sm:$0xff] %vm2089, %v1998
      %2093 = vst.msk [vmem:[#allocation3 + $0x18] sm:$0xff] %vm2089, %v2000
      %2094 = vst.msk [vmem:[#allocation3 + $0x20] sm:$0xff] %vm2089, %v2002
      %2095 = vst.msk [vmem:[#allocation3 + $0x28] sm:$0xff] %vm2089, %v2004
      %2096 = vst.msk [vmem:[#allocation3 + $0x30] sm:$0xff] %vm2089, %v2006
      %2097 = vst.msk [vmem:[#allocation3 + $0x38] sm:$0xff] %vm2089, %v2008
      %2098 = vst.msk [vmem:[#allocation3 + $0x40] sm:$0xff] %vm2089, %v2010
      %2099 = vst.msk [vmem:[#allocation3 + $0x48] sm:$0xff] %vm2089, %v2012
      %2100 = vst.msk [vmem:[#allocation3 + $0x50] sm:$0xff] %vm2089, %v2014
      %2101 = vst.msk [vmem:[#allocation3 + $0x58] sm:$0xff] %vm2089, %v2016
      %2102 = vst.msk [vmem:[#allocation3 + $0x60] sm:$0xff] %vm2089, %v2018
      %2103 = vst.msk [vmem:[#allocation3 + $0x68] sm:$0xff] %vm2089, %v2020
      %2104 = vst.msk [vmem:[#allocation3 + $0x70] sm:$0xff] %vm2089, %v2022
      %2105 = vst.msk [vmem:[#allocation3 + $0x78] sm:$0xff] %vm2089, %v2024
      %2106 = vst.msk [vmem:[#allocation3 + $0x80] sm:$0xff] %vm2089, %v2026
      %2107 = vst.msk [vmem:[#allocation3 + $0x88] sm:$0xff] %vm2089, %v2028
      %2108 = vst.msk [vmem:[#allocation3 + $0x90] sm:$0xff] %vm2089, %v2030
      %2109 = vst.msk [vmem:[#allocation3 + $0x98] sm:$0xff] %vm2089, %v2032
      %2110 = vst.msk [vmem:[#allocation3 + $0xa0] sm:$0xff] %vm2089, %v2034
      %2111 = vst.msk [vmem:[#allocation3 + $0xa8] sm:$0xff] %vm2089, %v2036
      %2112 = vst.msk [vmem:[#allocation3 + $0xb0] sm:$0xff] %vm2089, %v2038
      %2113 = vst.msk [vmem:[#allocation3 + $0xb8] sm:$0xff] %vm2089, %v2040
      %2114 = vst.msk [vmem:[#allocation3 + $0xc0] sm:$0xff] %vm2089, %v2042
      %2115 = vst.msk [vmem:[#allocation3 + $0xc8] sm:$0xff] %vm2089, %v2044
      %2116 = vst.msk [vmem:[#allocation3 + $0xd0] sm:$0xff] %vm2089, %v2046
      %2117 = vst.msk [vmem:[#allocation3 + $0xd8] sm:$0xff] %vm2089, %v2048
      %2118 = vst.msk [vmem:[#allocation3 + $0xe0] sm:$0xff] %vm2089, %v2050
      %2119 = vst.msk [vmem:[#allocation3 + $0xe8] sm:$0xff] %vm2089, %v2052
      %2120 = vst.msk [vmem:[#allocation3 + $0xf0] sm:$0xff] %vm2089, %v2054
      %2121 = vst.msk [vmem:[#allocation3 + $0xf8] sm:$0xff] %vm2089, %v2056
      %v2122 = vld [vmem:[#allocation3] sm:$0xff]
      %v2123 = vld [vmem:[#allocation3 + $0x8] sm:$0xff]
      %v2124 = vld [vmem:[#allocation3 + $0x10] sm:$0xff]
      %v2125 = vld [vmem:[#allocation3 + $0x18] sm:$0xff]
      %v2126 = vld [vmem:[#allocation3 + $0x20] sm:$0xff]
      %v2127 = vld [vmem:[#allocation3 + $0x28] sm:$0xff]
      %v2128 = vld [vmem:[#allocation3 + $0x30] sm:$0xff]
      %v2129 = vld [vmem:[#allocation3 + $0x38] sm:$0xff]
      %v2130 = vld [vmem:[#allocation3 + $0x40] sm:$0xff]
      %v2131 = vld [vmem:[#allocation3 + $0x48] sm:$0xff]
      %v2132 = vld [vmem:[#allocation3 + $0x50] sm:$0xff]
      %v2133 = vld [vmem:[#allocation3 + $0x58] sm:$0xff]
      %v2134 = vld [vmem:[#allocation3 + $0x60] sm:$0xff]
      %v2135 = vld [vmem:[#allocation3 + $0x68] sm:$0xff]
      %v2136 = vld [vmem:[#allocation3 + $0x70] sm:$0xff]
      %v2137 = vld [vmem:[#allocation3 + $0x78] sm:$0xff]
      %v2138 = vld [vmem:[#allocation3 + $0x80] sm:$0xff]
      %v2139 = vld [vmem:[#allocation3 + $0x88] sm:$0xff]
      %v2140 = vld [vmem:[#allocation3 + $0x90] sm:$0xff]
      %v2141 = vld [vmem:[#allocation3 + $0x98] sm:$0xff]
      %v2142 = vld [vmem:[#allocation3 + $0xa0] sm:$0xff]
      %v2143 = vld [vmem:[#allocation3 + $0xa8] sm:$0xff]
      %v2144 = vld [vmem:[#allocation3 + $0xb0] sm:$0xff]
      %v2145 = vld [vmem:[#allocation3 + $0xb8] sm:$0xff]
      %v2146 = vld [vmem:[#allocation3 + $0xc0] sm:$0xff]
      %v2147 = vld [vmem:[#allocation3 + $0xc8] sm:$0xff]
      %v2148 = vld [vmem:[#allocation3 + $0xd0] sm:$0xff]
      %v2149 = vld [vmem:[#allocation3 + $0xd8] sm:$0xff]
      %v2150 = vld [vmem:[#allocation3 + $0xe0] sm:$0xff]
      %v2151 = vld [vmem:[#allocation3 + $0xe8] sm:$0xff]
      %v2152 = vld [vmem:[#allocation3 + $0xf0] sm:$0xff]
      %v2153 = vld [vmem:[#allocation3 + $0xf8] sm:$0xff]
      %v2154 = vld [vmem:[%s2] sm:$0xff]
      %v2155 = vld [vmem:[%s2 + $0x8] sm:$0xff]
      %v2156 = vld [vmem:[%s2 + $0x10] sm:$0xff]
      %v2157 = vld [vmem:[%s2 + $0x18] sm:$0xff]
      %v2158 = vld [vmem:[%s2 + $0x20] sm:$0xf]
      %v2159 = vlaneseq
      %v2160 = vshrl.u32 %v2159, 7
      %v2161 = vsub.s32 0, %v2160
      %v2162 = vrot.slane %v434, %v2161
      %vm2163 = vcmask 293888
      %v2165 = vsel %vm2163, %v2122, 0
      %v2168 = vsel %vm2163, %v2123, 0
      %v2171 = vsel %vm2163, %v2124, 0
      %v2174 = vsel %vm2163, %v2125, 0
      %v2177 = vsel %vm2163, %v2126, 0
      %v2180 = vsel %vm2163, %v2127, 0
      %v2183 = vsel %vm2163, %v2128, 0
      %v2186 = vsel %vm2163, %v2129, 0
      %v2189 = vsel %vm2163, %v2130, 0
      %v2192 = vsel %vm2163, %v2131, 0
      %v2195 = vsel %vm2163, %v2132, 0
      %v2198 = vsel %vm2163, %v2133, 0
      %v2201 = vsel %vm2163, %v2134, 0
      %v2204 = vsel %vm2163, %v2135, 0
      %v2207 = vsel %vm2163, %v2136, 0
      %v2210 = vsel %vm2163, %v2137, 0
      %v2213 = vsel %vm2163, %v2138, 0
      %v2216 = vsel %vm2163, %v2139, 0
      %v2219 = vsel %vm2163, %v2140, 0
      %v2222 = vsel %vm2163, %v2141, 0
      %v2225 = vsel %vm2163, %v2142, 0
      %v2228 = vsel %vm2163, %v2143, 0
      %v2231 = vsel %vm2163, %v2144, 0
      %v2234 = vsel %vm2163, %v2145, 0
      %v2237 = vsel %vm2163, %v2146, 0
      %v2240 = vsel %vm2163, %v2147, 0
      %v2243 = vsel %vm2163, %v2148, 0
      %v2246 = vsel %vm2163, %v2149, 0
      %v2249 = vsel %vm2163, %v2150, 0
      %v2252 = vsel %vm2163, %v2151, 0
      %v2255 = vsel %vm2163, %v2152, 0
      %v2258 = vsel %vm2163, %v2153, 0
      %v2261 = vsel %vm359, %v2158, 0
      %2263 = vmatprep.subr.mxu0 0.0
      %2264 = vmatpush1.msra.mxu0 0.0
      %2265 = vmatprep.subr.mxu0 0.0
      %2266 = vmatpush1.msra.mxu0 0.0
      %2267 = vmatprep.subr.mxu0 0.0
      %2268 = vmatpush1.msra.mxu0 0.0
      %2269 = vmatprep.subr.mxu0 0.0
      %2270 = vmatpush1.msra.mxu0 0.0
      %2271 = vmatprep.subr.mxu0 0.0
      %2272 = vmatpush1.msra.mxu0 0.0
      %2273 = vmatprep.subr.mxu0 0.0
      %2274 = vmatpush1.msra.mxu0 0.0
      %2275 = vmatprep.subr.mxu0 0.0
      %2276 = vmatpush1.msra.mxu0 0.0
      %2277 = vmatprep.subr.mxu0 0.0
      %2278 = vmatpush1.msra.mxu0 0.0
      %2279 = vmatprep.subr.mxu0 0.0
      %2280 = vmatpush1.msra.mxu0 0.0
      %2281 = vmatprep.subr.mxu0 0.0
      %2282 = vmatpush1.msra.mxu0 0.0
      %2283 = vmatprep.subr.mxu0 0.0
      %2284 = vmatpush1.msra.mxu0 0.0
      %2285 = vmatprep.subr.mxu0 0.0
      %2286 = vmatpush1.msra.mxu0 %v2261
      %2287 = vmatprep.subr.mxu0 0.0
      %2288 = vmatpush1.msra.mxu0 %v2157
      %2289 = vmatprep.subr.mxu0 0.0
      %2290 = vmatpush1.msra.mxu0 %v2156
      %2291 = vmatprep.subr.mxu0 0.0
      %2292 = vmatpush1.msra.mxu0 %v2155
      %2293 = vmatprep.subr.mxu0 0.0
      %2294 = vmatpush1.msra.mxu0 %v2154
      %2295 = vmatprep.subr.mxu0 0.0
      %2296 = vmatpush2.msra.mxu0 0.0
      %2297 = vmatprep.subr.mxu0 0.0
      %2298 = vmatpush2.msra.mxu0 0.0
      %2299 = vmatprep.subr.mxu0 0.0
      %2300 = vmatpush2.msra.mxu0 0.0
      %2301 = vmatprep.subr.mxu0 0.0
      %2302 = vmatpush2.msra.mxu0 0.0
      %2303 = vmatprep.subr.mxu0 0.0
      %2304 = vmatpush2.msra.mxu0 0.0
      %2305 = vmatprep.subr.mxu0 0.0
      %2306 = vmatpush2.msra.mxu0 0.0
      %2307 = vmatprep.subr.mxu0 0.0
      %2308 = vmatpush2.msra.mxu0 0.0
      %2309 = vmatprep.subr.mxu0 0.0
      %2310 = vmatpush2.msra.mxu0 0.0
      %2311 = vmatprep.subr.mxu0 0.0
      %2312 = vmatpush2.msra.mxu0 0.0
      %2313 = vmatprep.subr.mxu0 0.0
      %2314 = vmatpush2.msra.mxu0 0.0
      %2315 = vmatprep.subr.mxu0 0.0
      %2316 = vmatpush2.msra.mxu0 0.0
      %2317 = vmatprep.subr.mxu0 0.0
      %2318 = vmatpush2.msra.mxu0 0.0
      %2319 = vmatprep.subr.mxu0 0.0
      %2320 = vmatpush2.msra.mxu0 0.0
      %2321 = vmatprep.subr.mxu0 0.0
      %2322 = vmatpush2.msra.mxu0 0.0
      %2323 = vmatprep.subr.mxu0 0.0
      %2324 = vmatpush2.msra.mxu0 0.0
      %2325 = vmatprep.subr.mxu0 0.0
      %2326 = vmatpush2.msra.mxu0 0.0
      %2327 = vmatprep.mubr.f32.mxu0 0.0
      %2328 = vmatmul.mubr.f32.gmra.mxu0 %v2165
      %v2329 = vpop.f32.mrf.mxu0
      %v2330 = vadd.f32 %v2162, %v2329
      %v2331 = vpop.f32.mrf.mxu0
      %2332 = vmatprep.mubr.f32.mxu0 0.0
      %2333 = vmatmul.mubr.f32.gmra.mxu0 %v2168
      %v2334 = vpop.f32.mrf.mxu0
      %v2335 = vadd.f32 %v2162, %v2334
      %v2336 = vpop.f32.mrf.mxu0
      %2337 = vmatprep.mubr.f32.mxu0 0.0
      %2338 = vmatmul.mubr.f32.gmra.mxu0 %v2171
      %v2339 = vpop.f32.mrf.mxu0
      %v2340 = vadd.f32 %v2162, %v2339
      %v2341 = vpop.f32.mrf.mxu0
      %2342 = vmatprep.mubr.f32.mxu0 0.0
      %2343 = vmatmul.mubr.f32.gmra.mxu0 %v2174
      %v2344 = vpop.f32.mrf.mxu0
      %v2345 = vadd.f32 %v2162, %v2344
      %v2346 = vpop.f32.mrf.mxu0
      %2347 = vmatprep.mubr.f32.mxu0 0.0
      %2348 = vmatmul.mubr.f32.gmra.mxu0 %v2177
      %v2349 = vpop.f32.mrf.mxu0
      %v2350 = vadd.f32 %v2162, %v2349
      %v2351 = vpop.f32.mrf.mxu0
      %2352 = vmatprep.mubr.f32.mxu0 0.0
      %2353 = vmatmul.mubr.f32.gmra.mxu0 %v2180
      %v2354 = vpop.f32.mrf.mxu0
      %v2355 = vadd.f32 %v2162, %v2354
      %v2356 = vpop.f32.mrf.mxu0
      %2357 = vmatprep.mubr.f32.mxu0 0.0
      %2358 = vmatmul.mubr.f32.gmra.mxu0 %v2183
      %v2359 = vpop.f32.mrf.mxu0
      %v2360 = vadd.f32 %v2162, %v2359
      %v2361 = vpop.f32.mrf.mxu0
      %2362 = vmatprep.mubr.f32.mxu0 0.0
      %2363 = vmatmul.mubr.f32.gmra.mxu0 %v2186
      %v2364 = vpop.f32.mrf.mxu0
      %v2365 = vadd.f32 %v2162, %v2364
      %v2366 = vpop.f32.mrf.mxu0
      %2367 = vmatprep.mubr.f32.mxu0 0.0
      %2368 = vmatmul.mubr.f32.gmra.mxu0 %v2189
      %v2369 = vpop.f32.mrf.mxu0
      %v2370 = vadd.f32 %v2162, %v2369
      %v2371 = vpop.f32.mrf.mxu0
      %2372 = vmatprep.mubr.f32.mxu0 0.0
      %2373 = vmatmul.mubr.f32.gmra.mxu0 %v2192
      %v2374 = vpop.f32.mrf.mxu0
      %v2375 = vadd.f32 %v2162, %v2374
      %v2376 = vpop.f32.mrf.mxu0
      %2377 = vmatprep.mubr.f32.mxu0 0.0
      %2378 = vmatmul.mubr.f32.gmra.mxu0 %v2195
      %v2379 = vpop.f32.mrf.mxu0
      %v2380 = vadd.f32 %v2162, %v2379
      %v2381 = vpop.f32.mrf.mxu0
      %2382 = vmatprep.mubr.f32.mxu0 0.0
      %2383 = vmatmul.mubr.f32.gmra.mxu0 %v2198
      %v2384 = vpop.f32.mrf.mxu0
      %v2385 = vadd.f32 %v2162, %v2384
      %v2386 = vpop.f32.mrf.mxu0
      %2387 = vmatprep.mubr.f32.mxu0 0.0
      %2388 = vmatmul.mubr.f32.gmra.mxu0 %v2201
      %v2389 = vpop.f32.mrf.mxu0
      %v2390 = vadd.f32 %v2162, %v2389
      %v2391 = vpop.f32.mrf.mxu0
      %2392 = vmatprep.mubr.f32.mxu0 0.0
      %2393 = vmatmul.mubr.f32.gmra.mxu0 %v2204
      %v2394 = vpop.f32.mrf.mxu0
      %v2395 = vadd.f32 %v2162, %v2394
      %v2396 = vpop.f32.mrf.mxu0
      %2397 = vmatprep.mubr.f32.mxu0 0.0
      %2398 = vmatmul.mubr.f32.gmra.mxu0 %v2207
      %v2399 = vpop.f32.mrf.mxu0
      %v2400 = vadd.f32 %v2162, %v2399
      %v2401 = vpop.f32.mrf.mxu0
      %2402 = vmatprep.mubr.f32.mxu0 0.0
      %2403 = vmatmul.mubr.f32.gmra.mxu0 %v2210
      %v2404 = vpop.f32.mrf.mxu0
      %v2405 = vadd.f32 %v2162, %v2404
      %v2406 = vpop.f32.mrf.mxu0
      %2407 = vmatprep.mubr.f32.mxu0 0.0
      %2408 = vmatmul.mubr.f32.gmra.mxu0 %v2213
      %v2409 = vpop.f32.mrf.mxu0
      %v2410 = vadd.f32 %v2162, %v2409
      %v2411 = vpop.f32.mrf.mxu0
      %2412 = vmatprep.mubr.f32.mxu0 0.0
      %2413 = vmatmul.mubr.f32.gmra.mxu0 %v2216
      %v2414 = vpop.f32.mrf.mxu0
      %v2415 = vadd.f32 %v2162, %v2414
      %v2416 = vpop.f32.mrf.mxu0
      %2417 = vmatprep.mubr.f32.mxu0 0.0
      %2418 = vmatmul.mubr.f32.gmra.mxu0 %v2219
      %v2419 = vpop.f32.mrf.mxu0
      %v2420 = vadd.f32 %v2162, %v2419
      %v2421 = vpop.f32.mrf.mxu0
      %2422 = vmatprep.mubr.f32.mxu0 0.0
      %2423 = vmatmul.mubr.f32.gmra.mxu0 %v2222
      %v2424 = vpop.f32.mrf.mxu0
      %v2425 = vadd.f32 %v2162, %v2424
      %v2426 = vpop.f32.mrf.mxu0
      %2427 = vmatprep.mubr.f32.mxu0 0.0
      %2428 = vmatmul.mubr.f32.gmra.mxu0 %v2225
      %v2429 = vpop.f32.mrf.mxu0
      %v2430 = vadd.f32 %v2162, %v2429
      %v2431 = vpop.f32.mrf.mxu0
      %2432 = vmatprep.mubr.f32.mxu0 0.0
      %2433 = vmatmul.mubr.f32.gmra.mxu0 %v2228
      %v2434 = vpop.f32.mrf.mxu0
      %v2435 = vadd.f32 %v2162, %v2434
      %v2436 = vpop.f32.mrf.mxu0
      %2437 = vmatprep.mubr.f32.mxu0 0.0
      %2438 = vmatmul.mubr.f32.gmra.mxu0 %v2231
      %v2439 = vpop.f32.mrf.mxu0
      %v2440 = vadd.f32 %v2162, %v2439
      %v2441 = vpop.f32.mrf.mxu0
      %2442 = vmatprep.mubr.f32.mxu0 0.0
      %2443 = vmatmul.mubr.f32.gmra.mxu0 %v2234
      %v2444 = vpop.f32.mrf.mxu0
      %v2445 = vadd.f32 %v2162, %v2444
      %v2446 = vpop.f32.mrf.mxu0
      %2447 = vmatprep.mubr.f32.mxu0 0.0
      %2448 = vmatmul.mubr.f32.gmra.mxu0 %v2237
      %v2449 = vpop.f32.mrf.mxu0
      %v2450 = vadd.f32 %v2162, %v2449
      %v2451 = vpop.f32.mrf.mxu0
      %2452 = vmatprep.mubr.f32.mxu0 0.0
      %2453 = vmatmul.mubr.f32.gmra.mxu0 %v2240
      %v2454 = vpop.f32.mrf.mxu0
      %v2455 = vadd.f32 %v2162, %v2454
      %v2456 = vpop.f32.mrf.mxu0
      %2457 = vmatprep.mubr.f32.mxu0 0.0
      %2458 = vmatmul.mubr.f32.gmra.mxu0 %v2243
      %v2459 = vpop.f32.mrf.mxu0
      %v2460 = vadd.f32 %v2162, %v2459
      %v2461 = vpop.f32.mrf.mxu0
      %2462 = vmatprep.mubr.f32.mxu0 0.0
      %2463 = vmatmul.mubr.f32.gmra.mxu0 %v2246
      %v2464 = vpop.f32.mrf.mxu0
      %v2465 = vadd.f32 %v2162, %v2464
      %v2466 = vpop.f32.mrf.mxu0
      %2467 = vmatprep.mubr.f32.mxu0 0.0
      %2468 = vmatmul.mubr.f32.gmra.mxu0 %v2249
      %v2469 = vpop.f32.mrf.mxu0
      %v2470 = vadd.f32 %v2162, %v2469
      %v2471 = vpop.f32.mrf.mxu0
      %2472 = vmatprep.mubr.f32.mxu0 0.0
      %2473 = vmatmul.mubr.f32.gmra.mxu0 %v2252
      %v2474 = vpop.f32.mrf.mxu0
      %v2475 = vadd.f32 %v2162, %v2474
      %v2476 = vpop.f32.mrf.mxu0
      %2477 = vmatprep.mubr.f32.mxu0 0.0
      %2478 = vmatmul.mubr.f32.gmra.mxu0 %v2255
      %v2479 = vpop.f32.mrf.mxu0
      %v2480 = vadd.f32 %v2162, %v2479
      %v2481 = vpop.f32.mrf.mxu0
      %2482 = vmatprep.mubr.f32.mxu0 0.0
      %2483 = vmatmul.mubr.f32.gmra.mxu0 %v2258
      %v2484 = vpop.f32.mrf.mxu0
      %v2485 = vadd.f32 %v2162, %v2484
      %v2486 = vpop.f32.mrf.mxu0
      %2487 = vdwg.mxu0
      %v2488 = vmax.f32 %v2330, 0.0
      %v2489 = vmax.f32 %v2335, 0.0
      %v2490 = vmax.f32 %v2340, 0.0
      %v2491 = vmax.f32 %v2345, 0.0
      %v2492 = vmax.f32 %v2350, 0.0
      %v2493 = vmax.f32 %v2355, 0.0
      %v2494 = vmax.f32 %v2360, 0.0
      %v2495 = vmax.f32 %v2365, 0.0
      %v2496 = vmax.f32 %v2370, 0.0
      %v2497 = vmax.f32 %v2375, 0.0
      %v2498 = vmax.f32 %v2380, 0.0
      %v2499 = vmax.f32 %v2385, 0.0
      %v2500 = vmax.f32 %v2390, 0.0
      %v2501 = vmax.f32 %v2395, 0.0
      %v2502 = vmax.f32 %v2400, 0.0
      %v2503 = vmax.f32 %v2405, 0.0
      %v2504 = vmax.f32 %v2410, 0.0
      %v2505 = vmax.f32 %v2415, 0.0
      %v2506 = vmax.f32 %v2420, 0.0
      %v2507 = vmax.f32 %v2425, 0.0
      %v2508 = vmax.f32 %v2430, 0.0
      %v2509 = vmax.f32 %v2435, 0.0
      %v2510 = vmax.f32 %v2440, 0.0
      %v2511 = vmax.f32 %v2445, 0.0
      %v2512 = vmax.f32 %v2450, 0.0
      %v2513 = vmax.f32 %v2455, 0.0
      %v2514 = vmax.f32 %v2460, 0.0
      %v2515 = vmax.f32 %v2465, 0.0
      %v2516 = vmax.f32 %v2470, 0.0
      %v2517 = vmax.f32 %v2475, 0.0
      %v2518 = vmax.f32 %v2480, 0.0
      %v2519 = vmax.f32 %v2485, 0.0
      %2520 = vst.msk [vmem:[%s480 + $0x1] sm:$0xff] %vm355, %v2488
      %2521 = vst.msk [vmem:[%s480 + $0x9] sm:$0xff] %vm355, %v2489
      %2522 = vst.msk [vmem:[%s480 + $0x19] sm:$0xff] %vm355, %v2490
      %2523 = vst.msk [vmem:[%s480 + $0x21] sm:$0xff] %vm355, %v2491
      %2524 = vst.msk [vmem:[%s480 + $0x31] sm:$0xff] %vm355, %v2492
      %2525 = vst.msk [vmem:[%s480 + $0x39] sm:$0xff] %vm355, %v2493
      %2526 = vst.msk [vmem:[%s480 + $0x49] sm:$0xff] %vm355, %v2494
      %2527 = vst.msk [vmem:[%s480 + $0x51] sm:$0xff] %vm355, %v2495
      %2528 = vst.msk [vmem:[%s480 + $0x61] sm:$0xff] %vm355, %v2496
      %2529 = vst.msk [vmem:[%s480 + $0x69] sm:$0xff] %vm355, %v2497
      %2530 = vst.msk [vmem:[%s480 + $0x79] sm:$0xff] %vm355, %v2498
      %2531 = vst.msk [vmem:[%s480 + $0x81] sm:$0xff] %vm355, %v2499
      %2532 = vst.msk [vmem:[%s480 + $0x91] sm:$0xff] %vm355, %v2500
      %2533 = vst.msk [vmem:[%s480 + $0x99] sm:$0xff] %vm355, %v2501
      %2534 = vst.msk [vmem:[%s480 + $0xa9] sm:$0xff] %vm355, %v2502
      %2535 = vst.msk [vmem:[%s480 + $0xb1] sm:$0xff] %vm355, %v2503
      %2536 = vst.msk [vmem:[%s480 + $0xc1] sm:$0xff] %vm355, %v2504
      %2537 = vst.msk [vmem:[%s480 + $0xc9] sm:$0xff] %vm355, %v2505
      %2538 = vst.msk [vmem:[%s480 + $0xd9] sm:$0xff] %vm355, %v2506
      %2539 = vst.msk [vmem:[%s480 + $0xe1] sm:$0xff] %vm355, %v2507
      %2540 = vst.msk [vmem:[%s480 + $0xf1] sm:$0xff] %vm355, %v2508
      %2541 = vst.msk [vmem:[%s480 + $0xf9] sm:$0xff] %vm355, %v2509
      %2542 = vst.msk [vmem:[%s480 + $0x109] sm:$0xff] %vm355, %v2510
      %2543 = vst.msk [vmem:[%s480 + $0x111] sm:$0xff] %vm355, %v2511
      %2544 = vst.msk [vmem:[%s480 + $0x121] sm:$0xff] %vm355, %v2512
      %2545 = vst.msk [vmem:[%s480 + $0x129] sm:$0xff] %vm355, %v2513
      %2546 = vst.msk [vmem:[%s480 + $0x139] sm:$0xff] %vm355, %v2514
      %2547 = vst.msk [vmem:[%s480 + $0x141] sm:$0xff] %vm355, %v2515
      %2548 = vst.msk [vmem:[%s480 + $0x151] sm:$0xff] %vm355, %v2516
      %2549 = vst.msk [vmem:[%s480 + $0x159] sm:$0xff] %vm355, %v2517
      %2550 = vst.msk [vmem:[%s480 + $0x169] sm:$0xff] %vm355, %v2518
      %2551 = vst.msk [vmem:[%s480 + $0x171] sm:$0xff] %vm355, %v2519
      %v2552 = vld [vmem:[#allocation2] sm:$0xff]
      %v2553 = vld [vmem:[#allocation2 + $0x8] sm:$0xff]
      %v2554 = vld [vmem:[#allocation2 + $0x18] sm:$0xff]
      %v2555 = vld [vmem:[#allocation2 + $0x20] sm:$0xff]
      %v2556 = vld [vmem:[#allocation2 + $0x30] sm:$0xff]
      %v2557 = vld [vmem:[#allocation2 + $0x38] sm:$0xff]
      %v2558 = vld [vmem:[#allocation2 + $0x48] sm:$0xff]
      %v2559 = vld [vmem:[#allocation2 + $0x50] sm:$0xff]
      %v2560 = vld [vmem:[#allocation2 + $0x60] sm:$0xff]
      %v2561 = vld [vmem:[#allocation2 + $0x68] sm:$0xff]
      %v2562 = vld [vmem:[#allocation2 + $0x78] sm:$0xff]
      %v2563 = vld [vmem:[#allocation2 + $0x80] sm:$0xff]
      %v2564 = vld [vmem:[#allocation2 + $0x90] sm:$0xff]
      %v2565 = vld [vmem:[#allocation2 + $0x98] sm:$0xff]
      %v2566 = vld [vmem:[#allocation2 + $0xa8] sm:$0xff]
      %v2567 = vld [vmem:[#allocation2 + $0xb0] sm:$0xff]
      %v2568 = vld [vmem:[#allocation2 + $0xc0] sm:$0xff]
      %v2569 = vld [vmem:[#allocation2 + $0xc8] sm:$0xff]
      %v2570 = vld [vmem:[#allocation2 + $0xd8] sm:$0xff]
      %v2571 = vld [vmem:[#allocation2 + $0xe0] sm:$0xff]
      %v2572 = vld [vmem:[#allocation2 + $0xf0] sm:$0xff]
      %v2573 = vld [vmem:[#allocation2 + $0xf8] sm:$0xff]
      %v2574 = vld [vmem:[#allocation2 + $0x108] sm:$0xff]
      %v2575 = vld [vmem:[#allocation2 + $0x110] sm:$0xff]
      %v2576 = vld [vmem:[#allocation2 + $0x120] sm:$0xff]
      %v2577 = vld [vmem:[#allocation2 + $0x128] sm:$0xff]
      %v2578 = vld [vmem:[#allocation2 + $0x138] sm:$0xff]
      %v2579 = vld [vmem:[#allocation2 + $0x140] sm:$0xff]
      %v2580 = vld [vmem:[#allocation2 + $0x150] sm:$0xff]
      %v2581 = vld [vmem:[#allocation2 + $0x158] sm:$0xff]
      %v2582 = vld [vmem:[#allocation2 + $0x168] sm:$0xff]
      %v2583 = vld [vmem:[#allocation2 + $0x170] sm:$0xff]
      %2584 = vst.msk [vmem:[#allocation3] sm:$0xff] %vm355, %v2552
      %2585 = vst.msk [vmem:[#allocation3 + $0x8] sm:$0xff] %vm355, %v2553
      %2586 = vst.msk [vmem:[#allocation3 + $0x10] sm:$0xff] %vm355, %v2554
      %2587 = vst.msk [vmem:[#allocation3 + $0x18] sm:$0xff] %vm355, %v2555
      %2588 = vst.msk [vmem:[#allocation3 + $0x20] sm:$0xff] %vm355, %v2556
      %2589 = vst.msk [vmem:[#allocation3 + $0x28] sm:$0xff] %vm355, %v2557
      %2590 = vst.msk [vmem:[#allocation3 + $0x30] sm:$0xff] %vm355, %v2558
      %2591 = vst.msk [vmem:[#allocation3 + $0x38] sm:$0xff] %vm355, %v2559
      %2592 = vst.msk [vmem:[#allocation3 + $0x40] sm:$0xff] %vm355, %v2560
      %2593 = vst.msk [vmem:[#allocation3 + $0x48] sm:$0xff] %vm355, %v2561
      %2594 = vst.msk [vmem:[#allocation3 + $0x50] sm:$0xff] %vm355, %v2562
      %2595 = vst.msk [vmem:[#allocation3 + $0x58] sm:$0xff] %vm355, %v2563
      %2596 = vst.msk [vmem:[#allocation3 + $0x60] sm:$0xff] %vm355, %v2564
      %2597 = vst.msk [vmem:[#allocation3 + $0x68] sm:$0xff] %vm355, %v2565
      %2598 = vst.msk [vmem:[#allocation3 + $0x70] sm:$0xff] %vm355, %v2566
      %2599 = vst.msk [vmem:[#allocation3 + $0x78] sm:$0xff] %vm355, %v2567
      %2600 = vst.msk [vmem:[#allocation3 + $0x80] sm:$0xff] %vm355, %v2568
      %2601 = vst.msk [vmem:[#allocation3 + $0x88] sm:$0xff] %vm355, %v2569
      %2602 = vst.msk [vmem:[#allocation3 + $0x90] sm:$0xff] %vm355, %v2570
      %2603 = vst.msk [vmem:[#allocation3 + $0x98] sm:$0xff] %vm355, %v2571
      %2604 = vst.msk [vmem:[#allocation3 + $0xa0] sm:$0xff] %vm355, %v2572
      %2605 = vst.msk [vmem:[#allocation3 + $0xa8] sm:$0xff] %vm355, %v2573
      %2606 = vst.msk [vmem:[#allocation3 + $0xb0] sm:$0xff] %vm355, %v2574
      %2607 = vst.msk [vmem:[#allocation3 + $0xb8] sm:$0xff] %vm355, %v2575
      %2608 = vst.msk [vmem:[#allocation3 + $0xc0] sm:$0xff] %vm355, %v2576
      %2609 = vst.msk [vmem:[#allocation3 + $0xc8] sm:$0xff] %vm355, %v2577
      %2610 = vst.msk [vmem:[#allocation3 + $0xd0] sm:$0xff] %vm355, %v2578
      %2611 = vst.msk [vmem:[#allocation3 + $0xd8] sm:$0xff] %vm355, %v2579
      %2612 = vst.msk [vmem:[#allocation3 + $0xe0] sm:$0xff] %vm355, %v2580
      %2613 = vst.msk [vmem:[#allocation3 + $0xe8] sm:$0xff] %vm355, %v2581
      %2614 = vst.msk [vmem:[#allocation3 + $0xf0] sm:$0xff] %vm355, %v2582
      %2615 = vst.msk [vmem:[#allocation3 + $0xf8] sm:$0xff] %vm355, %v2583
      %v2616 = vld [vmem:[#allocation2 + $0x1] sm:$0xff]
      %v2617 = vld [vmem:[#allocation2 + $0x9] sm:$0xff]
      %v2618 = vld [vmem:[#allocation2 + $0x19] sm:$0xff]
      %v2619 = vld [vmem:[#allocation2 + $0x21] sm:$0xff]
      %v2620 = vld [vmem:[#allocation2 + $0x31] sm:$0xff]
      %v2621 = vld [vmem:[#allocation2 + $0x39] sm:$0xff]
      %v2622 = vld [vmem:[#allocation2 + $0x49] sm:$0xff]
      %v2623 = vld [vmem:[#allocation2 + $0x51] sm:$0xff]
      %v2624 = vld [vmem:[#allocation2 + $0x61] sm:$0xff]
      %v2625 = vld [vmem:[#allocation2 + $0x69] sm:$0xff]
      %v2626 = vld [vmem:[#allocation2 + $0x79] sm:$0xff]
      %v2627 = vld [vmem:[#allocation2 + $0x81] sm:$0xff]
      %v2628 = vld [vmem:[#allocation2 + $0x91] sm:$0xff]
      %v2629 = vld [vmem:[#allocation2 + $0x99] sm:$0xff]
      %v2630 = vld [vmem:[#allocation2 + $0xa9] sm:$0xff]
      %v2631 = vld [vmem:[#allocation2 + $0xb1] sm:$0xff]
      %v2632 = vld [vmem:[#allocation2 + $0xc1] sm:$0xff]
      %v2633 = vld [vmem:[#allocation2 + $0xc9] sm:$0xff]
      %v2634 = vld [vmem:[#allocation2 + $0xd9] sm:$0xff]
      %v2635 = vld [vmem:[#allocation2 + $0xe1] sm:$0xff]
      %v2636 = vld [vmem:[#allocation2 + $0xf1] sm:$0xff]
      %v2637 = vld [vmem:[#allocation2 + $0xf9] sm:$0xff]
      %v2638 = vld [vmem:[#allocation2 + $0x109] sm:$0xff]
      %v2639 = vld [vmem:[#allocation2 + $0x111] sm:$0xff]
      %v2640 = vld [vmem:[#allocation2 + $0x121] sm:$0xff]
      %v2641 = vld [vmem:[#allocation2 + $0x129] sm:$0xff]
      %v2642 = vld [vmem:[#allocation2 + $0x139] sm:$0xff]
      %v2643 = vld [vmem:[#allocation2 + $0x141] sm:$0xff]
      %v2644 = vld [vmem:[#allocation2 + $0x151] sm:$0xff]
      %v2645 = vld [vmem:[#allocation2 + $0x159] sm:$0xff]
      %v2646 = vld [vmem:[#allocation2 + $0x169] sm:$0xff]
      %v2647 = vld [vmem:[#allocation2 + $0x171] sm:$0xff]
      %2680 = vrot.lane.b32.xlu0 %v2616, 4
      %v2681 = vpop.permute.xlu0 %2680
      %2682 = vrot.lane.b32.xlu0 %v2617, 4
      %v2683 = vpop.permute.xlu0 %2682
      %2684 = vrot.lane.b32.xlu0 %v2618, 4
      %v2685 = vpop.permute.xlu0 %2684
      %2686 = vrot.lane.b32.xlu0 %v2619, 4
      %v2687 = vpop.permute.xlu0 %2686
      %2688 = vrot.lane.b32.xlu0 %v2620, 4
      %v2689 = vpop.permute.xlu0 %2688
      %2690 = vrot.lane.b32.xlu0 %v2621, 4
      %v2691 = vpop.permute.xlu0 %2690
      %2692 = vrot.lane.b32.xlu0 %v2622, 4
      %v2693 = vpop.permute.xlu0 %2692
      %2694 = vrot.lane.b32.xlu0 %v2623, 4
      %v2695 = vpop.permute.xlu0 %2694
      %2696 = vrot.lane.b32.xlu0 %v2624, 4
      %v2697 = vpop.permute.xlu0 %2696
      %2698 = vrot.lane.b32.xlu0 %v2625, 4
      %v2699 = vpop.permute.xlu0 %2698
      %2700 = vrot.lane.b32.xlu0 %v2626, 4
      %v2701 = vpop.permute.xlu0 %2700
      %2702 = vrot.lane.b32.xlu0 %v2627, 4
      %v2703 = vpop.permute.xlu0 %2702
      %2704 = vrot.lane.b32.xlu0 %v2628, 4
      %v2705 = vpop.permute.xlu0 %2704
      %2706 = vrot.lane.b32.xlu0 %v2629, 4
      %v2707 = vpop.permute.xlu0 %2706
      %2708 = vrot.lane.b32.xlu0 %v2630, 4
      %v2709 = vpop.permute.xlu0 %2708
      %2710 = vrot.lane.b32.xlu0 %v2631, 4
      %v2711 = vpop.permute.xlu0 %2710
      %2712 = vrot.lane.b32.xlu0 %v2632, 4
      %v2713 = vpop.permute.xlu0 %2712
      %2714 = vrot.lane.b32.xlu0 %v2633, 4
      %v2715 = vpop.permute.xlu0 %2714
      %2716 = vrot.lane.b32.xlu0 %v2634, 4
      %v2717 = vpop.permute.xlu0 %2716
      %2718 = vrot.lane.b32.xlu0 %v2635, 4
      %v2719 = vpop.permute.xlu0 %2718
      %2720 = vrot.lane.b32.xlu0 %v2636, 4
      %v2721 = vpop.permute.xlu0 %2720
      %2722 = vrot.lane.b32.xlu0 %v2637, 4
      %v2723 = vpop.permute.xlu0 %2722
      %2724 = vrot.lane.b32.xlu0 %v2638, 4
      %v2725 = vpop.permute.xlu0 %2724
      %2726 = vrot.lane.b32.xlu0 %v2639, 4
      %v2727 = vpop.permute.xlu0 %2726
      %2728 = vrot.lane.b32.xlu0 %v2640, 4
      %v2729 = vpop.permute.xlu0 %2728
      %2730 = vrot.lane.b32.xlu0 %v2641, 4
      %v2731 = vpop.permute.xlu0 %2730
      %2732 = vrot.lane.b32.xlu0 %v2642, 4
      %v2733 = vpop.permute.xlu0 %2732
      %2734 = vrot.lane.b32.xlu0 %v2643, 4
      %v2735 = vpop.permute.xlu0 %2734
      %2736 = vrot.lane.b32.xlu0 %v2644, 4
      %v2737 = vpop.permute.xlu0 %2736
      %2738 = vrot.lane.b32.xlu0 %v2645, 4
      %v2739 = vpop.permute.xlu0 %2738
      %2740 = vrot.lane.b32.xlu0 %v2646, 4
      %v2741 = vpop.permute.xlu0 %2740
      %2742 = vrot.lane.b32.xlu0 %v2647, 4
      %v2743 = vpop.permute.xlu0 %2742
      %2776 = vst.msk [vmem:[#allocation3] sm:$0xff] %vm737, %v2681
      %2777 = vst.msk [vmem:[#allocation3 + $0x8] sm:$0xff] %vm737, %v2683
      %2778 = vst.msk [vmem:[#allocation3 + $0x10] sm:$0xff] %vm737, %v2685
      %2779 = vst.msk [vmem:[#allocation3 + $0x18] sm:$0xff] %vm737, %v2687
      %2780 = vst.msk [vmem:[#allocation3 + $0x20] sm:$0xff] %vm737, %v2689
      %2781 = vst.msk [vmem:[#allocation3 + $0x28] sm:$0xff] %vm737, %v2691
      %2782 = vst.msk [vmem:[#allocation3 + $0x30] sm:$0xff] %vm737, %v2693
      %2783 = vst.msk [vmem:[#allocation3 + $0x38] sm:$0xff] %vm737, %v2695
      %2784 = vst.msk [vmem:[#allocation3 + $0x40] sm:$0xff] %vm737, %v2697
      %2785 = vst.msk [vmem:[#allocation3 + $0x48] sm:$0xff] %vm737, %v2699
      %2786 = vst.msk [vmem:[#allocation3 + $0x50] sm:$0xff] %vm737, %v2701
      %2787 = vst.msk [vmem:[#allocation3 + $0x58] sm:$0xff] %vm737, %v2703
      %2788 = vst.msk [vmem:[#allocation3 + $0x60] sm:$0xff] %vm737, %v2705
      %2789 = vst.msk [vmem:[#allocation3 + $0x68] sm:$0xff] %vm737, %v2707
      %2790 = vst.msk [vmem:[#allocation3 + $0x70] sm:$0xff] %vm737, %v2709
      %2791 = vst.msk [vmem:[#allocation3 + $0x78] sm:$0xff] %vm737, %v2711
      %2792 = vst.msk [vmem:[#allocation3 + $0x80] sm:$0xff] %vm737, %v2713
      %2793 = vst.msk [vmem:[#allocation3 + $0x88] sm:$0xff] %vm737, %v2715
      %2794 = vst.msk [vmem:[#allocation3 + $0x90] sm:$0xff] %vm737, %v2717
      %2795 = vst.msk [vmem:[#allocation3 + $0x98] sm:$0xff] %vm737, %v2719
      %2796 = vst.msk [vmem:[#allocation3 + $0xa0] sm:$0xff] %vm737, %v2721
      %2797 = vst.msk [vmem:[#allocation3 + $0xa8] sm:$0xff] %vm737, %v2723
      %2798 = vst.msk [vmem:[#allocation3 + $0xb0] sm:$0xff] %vm737, %v2725
      %2799 = vst.msk [vmem:[#allocation3 + $0xb8] sm:$0xff] %vm737, %v2727
      %2800 = vst.msk [vmem:[#allocation3 + $0xc0] sm:$0xff] %vm737, %v2729
      %2801 = vst.msk [vmem:[#allocation3 + $0xc8] sm:$0xff] %vm737, %v2731
      %2802 = vst.msk [vmem:[#allocation3 + $0xd0] sm:$0xff] %vm737, %v2733
      %2803 = vst.msk [vmem:[#allocation3 + $0xd8] sm:$0xff] %vm737, %v2735
      %2804 = vst.msk [vmem:[#allocation3 + $0xe0] sm:$0xff] %vm737, %v2737
      %2805 = vst.msk [vmem:[#allocation3 + $0xe8] sm:$0xff] %vm737, %v2739
      %2806 = vst.msk [vmem:[#allocation3 + $0xf0] sm:$0xff] %vm737, %v2741
      %2807 = vst.msk [vmem:[#allocation3 + $0xf8] sm:$0xff] %vm737, %v2743
      %v2808 = vld [vmem:[#allocation2 + $0x2] sm:$0xff]
      %v2809 = vld [vmem:[#allocation2 + $0xa] sm:$0xff]
      %v2810 = vld [vmem:[#allocation2 + $0x1a] sm:$0xff]
      %v2811 = vld [vmem:[#allocation2 + $0x22] sm:$0xff]
      %v2812 = vld [vmem:[#allocation2 + $0x32] sm:$0xff]
      %v2813 = vld [vmem:[#allocation2 + $0x3a] sm:$0xff]
      %v2814 = vld [vmem:[#allocation2 + $0x4a] sm:$0xff]
      %v2815 = vld [vmem:[#allocation2 + $0x52] sm:$0xff]
      %v2816 = vld [vmem:[#allocation2 + $0x62] sm:$0xff]
      %v2817 = vld [vmem:[#allocation2 + $0x6a] sm:$0xff]
      %v2818 = vld [vmem:[#allocation2 + $0x7a] sm:$0xff]
      %v2819 = vld [vmem:[#allocation2 + $0x82] sm:$0xff]
      %v2820 = vld [vmem:[#allocation2 + $0x92] sm:$0xff]
      %v2821 = vld [vmem:[#allocation2 + $0x9a] sm:$0xff]
      %v2822 = vld [vmem:[#allocation2 + $0xaa] sm:$0xff]
      %v2823 = vld [vmem:[#allocation2 + $0xb2] sm:$0xff]
      %v2824 = vld [vmem:[#allocation2 + $0xc2] sm:$0xff]
      %v2825 = vld [vmem:[#allocation2 + $0xca] sm:$0xff]
      %v2826 = vld [vmem:[#allocation2 + $0xda] sm:$0xff]
      %v2827 = vld [vmem:[#allocation2 + $0xe2] sm:$0xff]
      %v2828 = vld [vmem:[#allocation2 + $0xf2] sm:$0xff]
      %v2829 = vld [vmem:[#allocation2 + $0xfa] sm:$0xff]
      %v2830 = vld [vmem:[#allocation2 + $0x10a] sm:$0xff]
      %v2831 = vld [vmem:[#allocation2 + $0x112] sm:$0xff]
      %v2832 = vld [vmem:[#allocation2 + $0x122] sm:$0xff]
      %v2833 = vld [vmem:[#allocation2 + $0x12a] sm:$0xff]
      %v2834 = vld [vmem:[#allocation2 + $0x13a] sm:$0xff]
      %v2835 = vld [vmem:[#allocation2 + $0x142] sm:$0xff]
      %v2836 = vld [vmem:[#allocation2 + $0x152] sm:$0xff]
      %v2837 = vld [vmem:[#allocation2 + $0x15a] sm:$0xff]
      %v2838 = vld [vmem:[#allocation2 + $0x16a] sm:$0xff]
      %v2839 = vld [vmem:[#allocation2 + $0x172] sm:$0xff]
      %2872 = vrot.lane.b32.xlu0 %v2808, 8
      %v2873 = vpop.permute.xlu0 %2872
      %2874 = vrot.lane.b32.xlu0 %v2809, 8
      %v2875 = vpop.permute.xlu0 %2874
      %2876 = vrot.lane.b32.xlu0 %v2810, 8
      %v2877 = vpop.permute.xlu0 %2876
      %2878 = vrot.lane.b32.xlu0 %v2811, 8
      %v2879 = vpop.permute.xlu0 %2878
      %2880 = vrot.lane.b32.xlu0 %v2812, 8
      %v2881 = vpop.permute.xlu0 %2880
      %2882 = vrot.lane.b32.xlu0 %v2813, 8
      %v2883 = vpop.permute.xlu0 %2882
      %2884 = vrot.lane.b32.xlu0 %v2814, 8
      %v2885 = vpop.permute.xlu0 %2884
      %2886 = vrot.lane.b32.xlu0 %v2815, 8
      %v2887 = vpop.permute.xlu0 %2886
      %2888 = vrot.lane.b32.xlu0 %v2816, 8
      %v2889 = vpop.permute.xlu0 %2888
      %2890 = vrot.lane.b32.xlu0 %v2817, 8
      %v2891 = vpop.permute.xlu0 %2890
      %2892 = vrot.lane.b32.xlu0 %v2818, 8
      %v2893 = vpop.permute.xlu0 %2892
      %2894 = vrot.lane.b32.xlu0 %v2819, 8
      %v2895 = vpop.permute.xlu0 %2894
      %2896 = vrot.lane.b32.xlu0 %v2820, 8
      %v2897 = vpop.permute.xlu0 %2896
      %2898 = vrot.lane.b32.xlu0 %v2821, 8
      %v2899 = vpop.permute.xlu0 %2898
      %2900 = vrot.lane.b32.xlu0 %v2822, 8
      %v2901 = vpop.permute.xlu0 %2900
      %2902 = vrot.lane.b32.xlu0 %v2823, 8
      %v2903 = vpop.permute.xlu0 %2902
      %2904 = vrot.lane.b32.xlu0 %v2824, 8
      %v2905 = vpop.permute.xlu0 %2904
      %2906 = vrot.lane.b32.xlu0 %v2825, 8
      %v2907 = vpop.permute.xlu0 %2906
      %2908 = vrot.lane.b32.xlu0 %v2826, 8
      %v2909 = vpop.permute.xlu0 %2908
      %2910 = vrot.lane.b32.xlu0 %v2827, 8
      %v2911 = vpop.permute.xlu0 %2910
      %2912 = vrot.lane.b32.xlu0 %v2828, 8
      %v2913 = vpop.permute.xlu0 %2912
      %2914 = vrot.lane.b32.xlu0 %v2829, 8
      %v2915 = vpop.permute.xlu0 %2914
      %2916 = vrot.lane.b32.xlu0 %v2830, 8
      %v2917 = vpop.permute.xlu0 %2916
      %2918 = vrot.lane.b32.xlu0 %v2831, 8
      %v2919 = vpop.permute.xlu0 %2918
      %2920 = vrot.lane.b32.xlu0 %v2832, 8
      %v2921 = vpop.permute.xlu0 %2920
      %2922 = vrot.lane.b32.xlu0 %v2833, 8
      %v2923 = vpop.permute.xlu0 %2922
      %2924 = vrot.lane.b32.xlu0 %v2834, 8
      %v2925 = vpop.permute.xlu0 %2924
      %2926 = vrot.lane.b32.xlu0 %v2835, 8
      %v2927 = vpop.permute.xlu0 %2926
      %2928 = vrot.lane.b32.xlu0 %v2836, 8
      %v2929 = vpop.permute.xlu0 %2928
      %2930 = vrot.lane.b32.xlu0 %v2837, 8
      %v2931 = vpop.permute.xlu0 %2930
      %2932 = vrot.lane.b32.xlu0 %v2838, 8
      %v2933 = vpop.permute.xlu0 %2932
      %2934 = vrot.lane.b32.xlu0 %v2839, 8
      %v2935 = vpop.permute.xlu0 %2934
      %2968 = vst.msk [vmem:[#allocation3] sm:$0xff] %vm930, %v2873
      %2969 = vst.msk [vmem:[#allocation3 + $0x8] sm:$0xff] %vm930, %v2875
      %2970 = vst.msk [vmem:[#allocation3 + $0x10] sm:$0xff] %vm930, %v2877
      %2971 = vst.msk [vmem:[#allocation3 + $0x18] sm:$0xff] %vm930, %v2879
      %2972 = vst.msk [vmem:[#allocation3 + $0x20] sm:$0xff] %vm930, %v2881
      %2973 = vst.msk [vmem:[#allocation3 + $0x28] sm:$0xff] %vm930, %v2883
      %2974 = vst.msk [vmem:[#allocation3 + $0x30] sm:$0xff] %vm930, %v2885
      %2975 = vst.msk [vmem:[#allocation3 + $0x38] sm:$0xff] %vm930, %v2887
      %2976 = vst.msk [vmem:[#allocation3 + $0x40] sm:$0xff] %vm930, %v2889
      %2977 = vst.msk [vmem:[#allocation3 + $0x48] sm:$0xff] %vm930, %v2891
      %2978 = vst.msk [vmem:[#allocation3 + $0x50] sm:$0xff] %vm930, %v2893
      %2979 = vst.msk [vmem:[#allocation3 + $0x58] sm:$0xff] %vm930, %v2895
      %2980 = vst.msk [vmem:[#allocation3 + $0x60] sm:$0xff] %vm930, %v2897
      %2981 = vst.msk [vmem:[#allocation3 + $0x68] sm:$0xff] %vm930, %v2899
      %2982 = vst.msk [vmem:[#allocation3 + $0x70] sm:$0xff] %vm930, %v2901
      %2983 = vst.msk [vmem:[#allocation3 + $0x78] sm:$0xff] %vm930, %v2903
      %2984 = vst.msk [vmem:[#allocation3 + $0x80] sm:$0xff] %vm930, %v2905
      %2985 = vst.msk [vmem:[#allocation3 + $0x88] sm:$0xff] %vm930, %v2907
      %2986 = vst.msk [vmem:[#allocation3 + $0x90] sm:$0xff] %vm930, %v2909
      %2987 = vst.msk [vmem:[#allocation3 + $0x98] sm:$0xff] %vm930, %v2911
      %2988 = vst.msk [vmem:[#allocation3 + $0xa0] sm:$0xff] %vm930, %v2913
      %2989 = vst.msk [vmem:[#allocation3 + $0xa8] sm:$0xff] %vm930, %v2915
      %2990 = vst.msk [vmem:[#allocation3 + $0xb0] sm:$0xff] %vm930, %v2917
      %2991 = vst.msk [vmem:[#allocation3 + $0xb8] sm:$0xff] %vm930, %v2919
      %2992 = vst.msk [vmem:[#allocation3 + $0xc0] sm:$0xff] %vm930, %v2921
      %2993 = vst.msk [vmem:[#allocation3 + $0xc8] sm:$0xff] %vm930, %v2923
      %2994 = vst.msk [vmem:[#allocation3 + $0xd0] sm:$0xff] %vm930, %v2925
      %2995 = vst.msk [vmem:[#allocation3 + $0xd8] sm:$0xff] %vm930, %v2927
      %2996 = vst.msk [vmem:[#allocation3 + $0xe0] sm:$0xff] %vm930, %v2929
      %2997 = vst.msk [vmem:[#allocation3 + $0xe8] sm:$0xff] %vm930, %v2931
      %2998 = vst.msk [vmem:[#allocation3 + $0xf0] sm:$0xff] %vm930, %v2933
      %2999 = vst.msk [vmem:[#allocation3 + $0xf8] sm:$0xff] %vm930, %v2935
      %v3000 = vld [vmem:[%s480] sm:$0xff]
      %v3001 = vld [vmem:[%s480 + $0x8] sm:$0xff]
      %v3002 = vld [vmem:[%s480 + $0x18] sm:$0xff]
      %v3003 = vld [vmem:[%s480 + $0x20] sm:$0xff]
      %v3004 = vld [vmem:[%s480 + $0x30] sm:$0xff]
      %v3005 = vld [vmem:[%s480 + $0x38] sm:$0xff]
      %v3006 = vld [vmem:[%s480 + $0x48] sm:$0xff]
      %v3007 = vld [vmem:[%s480 + $0x50] sm:$0xff]
      %v3008 = vld [vmem:[%s480 + $0x60] sm:$0xff]
      %v3009 = vld [vmem:[%s480 + $0x68] sm:$0xff]
      %v3010 = vld [vmem:[%s480 + $0x78] sm:$0xff]
      %v3011 = vld [vmem:[%s480 + $0x80] sm:$0xff]
      %v3012 = vld [vmem:[%s480 + $0x90] sm:$0xff]
      %v3013 = vld [vmem:[%s480 + $0x98] sm:$0xff]
      %v3014 = vld [vmem:[%s480 + $0xa8] sm:$0xff]
      %v3015 = vld [vmem:[%s480 + $0xb0] sm:$0xff]
      %v3016 = vld [vmem:[%s480 + $0xc0] sm:$0xff]
      %v3017 = vld [vmem:[%s480 + $0xc8] sm:$0xff]
      %v3018 = vld [vmem:[%s480 + $0xd8] sm:$0xff]
      %v3019 = vld [vmem:[%s480 + $0xe0] sm:$0xff]
      %v3020 = vld [vmem:[%s480 + $0xf0] sm:$0xff]
      %v3021 = vld [vmem:[%s480 + $0xf8] sm:$0xff]
      %v3022 = vld [vmem:[%s480 + $0x108] sm:$0xff]
      %v3023 = vld [vmem:[%s480 + $0x110] sm:$0xff]
      %v3024 = vld [vmem:[%s480 + $0x120] sm:$0xff]
      %v3025 = vld [vmem:[%s480 + $0x128] sm:$0xff]
      %v3026 = vld [vmem:[%s480 + $0x138] sm:$0xff]
      %v3027 = vld [vmem:[%s480 + $0x140] sm:$0xff]
      %v3028 = vld [vmem:[%s480 + $0x150] sm:$0xff]
      %v3029 = vld [vmem:[%s480 + $0x158] sm:$0xff]
      %v3030 = vld [vmem:[%s480 + $0x168] sm:$0xff]
      %v3031 = vld [vmem:[%s480 + $0x170] sm:$0xff]
      %3064 = vrot.lane.b32.xlu0 %v3000, 12
      %v3065 = vpop.permute.xlu0 %3064
      %3066 = vrot.lane.b32.xlu0 %v3001, 12
      %v3067 = vpop.permute.xlu0 %3066
      %3068 = vrot.lane.b32.xlu0 %v3002, 12
      %v3069 = vpop.permute.xlu0 %3068
      %3070 = vrot.lane.b32.xlu0 %v3003, 12
      %v3071 = vpop.permute.xlu0 %3070
      %3072 = vrot.lane.b32.xlu0 %v3004, 12
      %v3073 = vpop.permute.xlu0 %3072
      %3074 = vrot.lane.b32.xlu0 %v3005, 12
      %v3075 = vpop.permute.xlu0 %3074
      %3076 = vrot.lane.b32.xlu0 %v3006, 12
      %v3077 = vpop.permute.xlu0 %3076
      %3078 = vrot.lane.b32.xlu0 %v3007, 12
      %v3079 = vpop.permute.xlu0 %3078
      %3080 = vrot.lane.b32.xlu0 %v3008, 12
      %v3081 = vpop.permute.xlu0 %3080
      %3082 = vrot.lane.b32.xlu0 %v3009, 12
      %v3083 = vpop.permute.xlu0 %3082
      %3084 = vrot.lane.b32.xlu0 %v3010, 12
      %v3085 = vpop.permute.xlu0 %3084
      %3086 = vrot.lane.b32.xlu0 %v3011, 12
      %v3087 = vpop.permute.xlu0 %3086
      %3088 = vrot.lane.b32.xlu0 %v3012, 12
      %v3089 = vpop.permute.xlu0 %3088
      %3090 = vrot.lane.b32.xlu0 %v3013, 12
      %v3091 = vpop.permute.xlu0 %3090
      %3092 = vrot.lane.b32.xlu0 %v3014, 12
      %v3093 = vpop.permute.xlu0 %3092
      %3094 = vrot.lane.b32.xlu0 %v3015, 12
      %v3095 = vpop.permute.xlu0 %3094
      %3096 = vrot.lane.b32.xlu0 %v3016, 12
      %v3097 = vpop.permute.xlu0 %3096
      %3098 = vrot.lane.b32.xlu0 %v3017, 12
      %v3099 = vpop.permute.xlu0 %3098
      %3100 = vrot.lane.b32.xlu0 %v3018, 12
      %v3101 = vpop.permute.xlu0 %3100
      %3102 = vrot.lane.b32.xlu0 %v3019, 12
      %v3103 = vpop.permute.xlu0 %3102
      %3104 = vrot.lane.b32.xlu0 %v3020, 12
      %v3105 = vpop.permute.xlu0 %3104
      %3106 = vrot.lane.b32.xlu0 %v3021, 12
      %v3107 = vpop.permute.xlu0 %3106
      %3108 = vrot.lane.b32.xlu0 %v3022, 12
      %v3109 = vpop.permute.xlu0 %3108
      %3110 = vrot.lane.b32.xlu0 %v3023, 12
      %v3111 = vpop.permute.xlu0 %3110
      %3112 = vrot.lane.b32.xlu0 %v3024, 12
      %v3113 = vpop.permute.xlu0 %3112
      %3114 = vrot.lane.b32.xlu0 %v3025, 12
      %v3115 = vpop.permute.xlu0 %3114
      %3116 = vrot.lane.b32.xlu0 %v3026, 12
      %v3117 = vpop.permute.xlu0 %3116
      %3118 = vrot.lane.b32.xlu0 %v3027, 12
      %v3119 = vpop.permute.xlu0 %3118
      %3120 = vrot.lane.b32.xlu0 %v3028, 12
      %v3121 = vpop.permute.xlu0 %3120
      %3122 = vrot.lane.b32.xlu0 %v3029, 12
      %v3123 = vpop.permute.xlu0 %3122
      %3124 = vrot.lane.b32.xlu0 %v3030, 12
      %v3125 = vpop.permute.xlu0 %3124
      %3126 = vrot.lane.b32.xlu0 %v3031, 12
      %v3127 = vpop.permute.xlu0 %3126
      %3160 = vst.msk [vmem:[#allocation3] sm:$0xff] %vm1123, %v3065
      %3161 = vst.msk [vmem:[#allocation3 + $0x8] sm:$0xff] %vm1123, %v3067
      %3162 = vst.msk [vmem:[#allocation3 + $0x10] sm:$0xff] %vm1123, %v3069
      %3163 = vst.msk [vmem:[#allocation3 + $0x18] sm:$0xff] %vm1123, %v3071
      %3164 = vst.msk [vmem:[#allocation3 + $0x20] sm:$0xff] %vm1123, %v3073
      %3165 = vst.msk [vmem:[#allocation3 + $0x28] sm:$0xff] %vm1123, %v3075
      %3166 = vst.msk [vmem:[#allocation3 + $0x30] sm:$0xff] %vm1123, %v3077
      %3167 = vst.msk [vmem:[#allocation3 + $0x38] sm:$0xff] %vm1123, %v3079
      %3168 = vst.msk [vmem:[#allocation3 + $0x40] sm:$0xff] %vm1123, %v3081
      %3169 = vst.msk [vmem:[#allocation3 + $0x48] sm:$0xff] %vm1123, %v3083
      %3170 = vst.msk [vmem:[#allocation3 + $0x50] sm:$0xff] %vm1123, %v3085
      %3171 = vst.msk [vmem:[#allocation3 + $0x58] sm:$0xff] %vm1123, %v3087
      %3172 = vst.msk [vmem:[#allocation3 + $0x60] sm:$0xff] %vm1123, %v3089
      %3173 = vst.msk [vmem:[#allocation3 + $0x68] sm:$0xff] %vm1123, %v3091
      %3174 = vst.msk [vmem:[#allocation3 + $0x70] sm:$0xff] %vm1123, %v3093
      %3175 = vst.msk [vmem:[#allocation3 + $0x78] sm:$0xff] %vm1123, %v3095
      %3176 = vst.msk [vmem:[#allocation3 + $0x80] sm:$0xff] %vm1123, %v3097
      %3177 = vst.msk [vmem:[#allocation3 + $0x88] sm:$0xff] %vm1123, %v3099
      %3178 = vst.msk [vmem:[#allocation3 + $0x90] sm:$0xff] %vm1123, %v3101
      %3179 = vst.msk [vmem:[#allocation3 + $0x98] sm:$0xff] %vm1123, %v3103
      %3180 = vst.msk [vmem:[#allocation3 + $0xa0] sm:$0xff] %vm1123, %v3105
      %3181 = vst.msk [vmem:[#allocation3 + $0xa8] sm:$0xff] %vm1123, %v3107
      %3182 = vst.msk [vmem:[#allocation3 + $0xb0] sm:$0xff] %vm1123, %v3109
      %3183 = vst.msk [vmem:[#allocation3 + $0xb8] sm:$0xff] %vm1123, %v3111
      %3184 = vst.msk [vmem:[#allocation3 + $0xc0] sm:$0xff] %vm1123, %v3113
      %3185 = vst.msk [vmem:[#allocation3 + $0xc8] sm:$0xff] %vm1123, %v3115
      %3186 = vst.msk [vmem:[#allocation3 + $0xd0] sm:$0xff] %vm1123, %v3117
      %3187 = vst.msk [vmem:[#allocation3 + $0xd8] sm:$0xff] %vm1123, %v3119
      %3188 = vst.msk [vmem:[#allocation3 + $0xe0] sm:$0xff] %vm1123, %v3121
      %3189 = vst.msk [vmem:[#allocation3 + $0xe8] sm:$0xff] %vm1123, %v3123
      %3190 = vst.msk [vmem:[#allocation3 + $0xf0] sm:$0xff] %vm1123, %v3125
      %3191 = vst.msk [vmem:[#allocation3 + $0xf8] sm:$0xff] %vm1123, %v3127
      %v3192 = vld [vmem:[%s480 + $0x1] sm:$0xff]
      %v3193 = vld [vmem:[%s480 + $0x9] sm:$0xff]
      %v3194 = vld [vmem:[%s480 + $0x19] sm:$0xff]
      %v3195 = vld [vmem:[%s480 + $0x21] sm:$0xff]
      %v3196 = vld [vmem:[%s480 + $0x31] sm:$0xff]
      %v3197 = vld [vmem:[%s480 + $0x39] sm:$0xff]
      %v3198 = vld [vmem:[%s480 + $0x49] sm:$0xff]
      %v3199 = vld [vmem:[%s480 + $0x51] sm:$0xff]
      %v3200 = vld [vmem:[%s480 + $0x61] sm:$0xff]
      %v3201 = vld [vmem:[%s480 + $0x69] sm:$0xff]
      %v3202 = vld [vmem:[%s480 + $0x79] sm:$0xff]
      %v3203 = vld [vmem:[%s480 + $0x81] sm:$0xff]
      %v3204 = vld [vmem:[%s480 + $0x91] sm:$0xff]
      %v3205 = vld [vmem:[%s480 + $0x99] sm:$0xff]
      %v3206 = vld [vmem:[%s480 + $0xa9] sm:$0xff]
      %v3207 = vld [vmem:[%s480 + $0xb1] sm:$0xff]
      %v3208 = vld [vmem:[%s480 + $0xc1] sm:$0xff]
      %v3209 = vld [vmem:[%s480 + $0xc9] sm:$0xff]
      %v3210 = vld [vmem:[%s480 + $0xd9] sm:$0xff]
      %v3211 = vld [vmem:[%s480 + $0xe1] sm:$0xff]
      %v3212 = vld [vmem:[%s480 + $0xf1] sm:$0xff]
      %v3213 = vld [vmem:[%s480 + $0xf9] sm:$0xff]
      %v3214 = vld [vmem:[%s480 + $0x109] sm:$0xff]
      %v3215 = vld [vmem:[%s480 + $0x111] sm:$0xff]
      %v3216 = vld [vmem:[%s480 + $0x121] sm:$0xff]
      %v3217 = vld [vmem:[%s480 + $0x129] sm:$0xff]
      %v3218 = vld [vmem:[%s480 + $0x139] sm:$0xff]
      %v3219 = vld [vmem:[%s480 + $0x141] sm:$0xff]
      %v3220 = vld [vmem:[%s480 + $0x151] sm:$0xff]
      %v3221 = vld [vmem:[%s480 + $0x159] sm:$0xff]
      %v3222 = vld [vmem:[%s480 + $0x169] sm:$0xff]
      %v3223 = vld [vmem:[%s480 + $0x171] sm:$0xff]
      %3256 = vrot.lane.b32.xlu0 %v3192, 16
      %v3257 = vpop.permute.xlu0 %3256
      %3258 = vrot.lane.b32.xlu0 %v3193, 16
      %v3259 = vpop.permute.xlu0 %3258
      %3260 = vrot.lane.b32.xlu0 %v3194, 16
      %v3261 = vpop.permute.xlu0 %3260
      %3262 = vrot.lane.b32.xlu0 %v3195, 16
      %v3263 = vpop.permute.xlu0 %3262
      %3264 = vrot.lane.b32.xlu0 %v3196, 16
      %v3265 = vpop.permute.xlu0 %3264
      %3266 = vrot.lane.b32.xlu0 %v3197, 16
      %v3267 = vpop.permute.xlu0 %3266
      %3268 = vrot.lane.b32.xlu0 %v3198, 16
      %v3269 = vpop.permute.xlu0 %3268
      %3270 = vrot.lane.b32.xlu0 %v3199, 16
      %v3271 = vpop.permute.xlu0 %3270
      %3272 = vrot.lane.b32.xlu0 %v3200, 16
      %v3273 = vpop.permute.xlu0 %3272
      %3274 = vrot.lane.b32.xlu0 %v3201, 16
      %v3275 = vpop.permute.xlu0 %3274
      %3276 = vrot.lane.b32.xlu0 %v3202, 16
      %v3277 = vpop.permute.xlu0 %3276
      %3278 = vrot.lane.b32.xlu0 %v3203, 16
      %v3279 = vpop.permute.xlu0 %3278
      %3280 = vrot.lane.b32.xlu0 %v3204, 16
      %v3281 = vpop.permute.xlu0 %3280
      %3282 = vrot.lane.b32.xlu0 %v3205, 16
      %v3283 = vpop.permute.xlu0 %3282
      %3284 = vrot.lane.b32.xlu0 %v3206, 16
      %v3285 = vpop.permute.xlu0 %3284
      %3286 = vrot.lane.b32.xlu0 %v3207, 16
      %v3287 = vpop.permute.xlu0 %3286
      %3288 = vrot.lane.b32.xlu0 %v3208, 16
      %v3289 = vpop.permute.xlu0 %3288
      %3290 = vrot.lane.b32.xlu0 %v3209, 16
      %v3291 = vpop.permute.xlu0 %3290
      %3292 = vrot.lane.b32.xlu0 %v3210, 16
      %v3293 = vpop.permute.xlu0 %3292
      %3294 = vrot.lane.b32.xlu0 %v3211, 16
      %v3295 = vpop.permute.xlu0 %3294
      %3296 = vrot.lane.b32.xlu0 %v3212, 16
      %v3297 = vpop.permute.xlu0 %3296
      %3298 = vrot.lane.b32.xlu0 %v3213, 16
      %v3299 = vpop.permute.xlu0 %3298
      %3300 = vrot.lane.b32.xlu0 %v3214, 16
      %v3301 = vpop.permute.xlu0 %3300
      %3302 = vrot.lane.b32.xlu0 %v3215, 16
      %v3303 = vpop.permute.xlu0 %3302
      %3304 = vrot.lane.b32.xlu0 %v3216, 16
      %v3305 = vpop.permute.xlu0 %3304
      %3306 = vrot.lane.b32.xlu0 %v3217, 16
      %v3307 = vpop.permute.xlu0 %3306
      %3308 = vrot.lane.b32.xlu0 %v3218, 16
      %v3309 = vpop.permute.xlu0 %3308
      %3310 = vrot.lane.b32.xlu0 %v3219, 16
      %v3311 = vpop.permute.xlu0 %3310
      %3312 = vrot.lane.b32.xlu0 %v3220, 16
      %v3313 = vpop.permute.xlu0 %3312
      %3314 = vrot.lane.b32.xlu0 %v3221, 16
      %v3315 = vpop.permute.xlu0 %3314
      %3316 = vrot.lane.b32.xlu0 %v3222, 16
      %v3317 = vpop.permute.xlu0 %3316
      %3318 = vrot.lane.b32.xlu0 %v3223, 16
      %v3319 = vpop.permute.xlu0 %3318
      %3352 = vst.msk [vmem:[#allocation3] sm:$0xff] %vm1316, %v3257
      %3353 = vst.msk [vmem:[#allocation3 + $0x8] sm:$0xff] %vm1316, %v3259
      %3354 = vst.msk [vmem:[#allocation3 + $0x10] sm:$0xff] %vm1316, %v3261
      %3355 = vst.msk [vmem:[#allocation3 + $0x18] sm:$0xff] %vm1316, %v3263
      %3356 = vst.msk [vmem:[#allocation3 + $0x20] sm:$0xff] %vm1316, %v3265
      %3357 = vst.msk [vmem:[#allocation3 + $0x28] sm:$0xff] %vm1316, %v3267
      %3358 = vst.msk [vmem:[#allocation3 + $0x30] sm:$0xff] %vm1316, %v3269
      %3359 = vst.msk [vmem:[#allocation3 + $0x38] sm:$0xff] %vm1316, %v3271
      %3360 = vst.msk [vmem:[#allocation3 + $0x40] sm:$0xff] %vm1316, %v3273
      %3361 = vst.msk [vmem:[#allocation3 + $0x48] sm:$0xff] %vm1316, %v3275
      %3362 = vst.msk [vmem:[#allocation3 + $0x50] sm:$0xff] %vm1316, %v3277
      %3363 = vst.msk [vmem:[#allocation3 + $0x58] sm:$0xff] %vm1316, %v3279
      %3364 = vst.msk [vmem:[#allocation3 + $0x60] sm:$0xff] %vm1316, %v3281
      %3365 = vst.msk [vmem:[#allocation3 + $0x68] sm:$0xff] %vm1316, %v3283
      %3366 = vst.msk [vmem:[#allocation3 + $0x70] sm:$0xff] %vm1316, %v3285
      %3367 = vst.msk [vmem:[#allocation3 + $0x78] sm:$0xff] %vm1316, %v3287
      %3368 = vst.msk [vmem:[#allocation3 + $0x80] sm:$0xff] %vm1316, %v3289
      %3369 = vst.msk [vmem:[#allocation3 + $0x88] sm:$0xff] %vm1316, %v3291
      %3370 = vst.msk [vmem:[#allocation3 + $0x90] sm:$0xff] %vm1316, %v3293
      %3371 = vst.msk [vmem:[#allocation3 + $0x98] sm:$0xff] %vm1316, %v3295
      %3372 = vst.msk [vmem:[#allocation3 + $0xa0] sm:$0xff] %vm1316, %v3297
      %3373 = vst.msk [vmem:[#allocation3 + $0xa8] sm:$0xff] %vm1316, %v3299
      %3374 = vst.msk [vmem:[#allocation3 + $0xb0] sm:$0xff] %vm1316, %v3301
      %3375 = vst.msk [vmem:[#allocation3 + $0xb8] sm:$0xff] %vm1316, %v3303
      %3376 = vst.msk [vmem:[#allocation3 + $0xc0] sm:$0xff] %vm1316, %v3305
      %3377 = vst.msk [vmem:[#allocation3 + $0xc8] sm:$0xff] %vm1316, %v3307
      %3378 = vst.msk [vmem:[#allocation3 + $0xd0] sm:$0xff] %vm1316, %v3309
      %3379 = vst.msk [vmem:[#allocation3 + $0xd8] sm:$0xff] %vm1316, %v3311
      %3380 = vst.msk [vmem:[#allocation3 + $0xe0] sm:$0xff] %vm1316, %v3313
      %3381 = vst.msk [vmem:[#allocation3 + $0xe8] sm:$0xff] %vm1316, %v3315
      %3382 = vst.msk [vmem:[#allocation3 + $0xf0] sm:$0xff] %vm1316, %v3317
      %3383 = vst.msk [vmem:[#allocation3 + $0xf8] sm:$0xff] %vm1316, %v3319
      %v3384 = vld [vmem:[%s480 + $0x2] sm:$0xff]
      %v3385 = vld [vmem:[%s480 + $0xa] sm:$0xff]
      %v3386 = vld [vmem:[%s480 + $0x1a] sm:$0xff]
      %v3387 = vld [vmem:[%s480 + $0x22] sm:$0xff]
      %v3388 = vld [vmem:[%s480 + $0x32] sm:$0xff]
      %v3389 = vld [vmem:[%s480 + $0x3a] sm:$0xff]
      %v3390 = vld [vmem:[%s480 + $0x4a] sm:$0xff]
      %v3391 = vld [vmem:[%s480 + $0x52] sm:$0xff]
      %v3392 = vld [vmem:[%s480 + $0x62] sm:$0xff]
      %v3393 = vld [vmem:[%s480 + $0x6a] sm:$0xff]
      %v3394 = vld [vmem:[%s480 + $0x7a] sm:$0xff]
      %v3395 = vld [vmem:[%s480 + $0x82] sm:$0xff]
      %v3396 = vld [vmem:[%s480 + $0x92] sm:$0xff]
      %v3397 = vld [vmem:[%s480 + $0x9a] sm:$0xff]
      %v3398 = vld [vmem:[%s480 + $0xaa] sm:$0xff]
      %v3399 = vld [vmem:[%s480 + $0xb2] sm:$0xff]
      %v3400 = vld [vmem:[%s480 + $0xc2] sm:$0xff]
      %v3401 = vld [vmem:[%s480 + $0xca] sm:$0xff]
      %v3402 = vld [vmem:[%s480 + $0xda] sm:$0xff]
      %v3403 = vld [vmem:[%s480 + $0xe2] sm:$0xff]
      %v3404 = vld [vmem:[%s480 + $0xf2] sm:$0xff]
      %v3405 = vld [vmem:[%s480 + $0xfa] sm:$0xff]
      %v3406 = vld [vmem:[%s480 + $0x10a] sm:$0xff]
      %v3407 = vld [vmem:[%s480 + $0x112] sm:$0xff]
      %v3408 = vld [vmem:[%s480 + $0x122] sm:$0xff]
      %v3409 = vld [vmem:[%s480 + $0x12a] sm:$0xff]
      %v3410 = vld [vmem:[%s480 + $0x13a] sm:$0xff]
      %v3411 = vld [vmem:[%s480 + $0x142] sm:$0xff]
      %v3412 = vld [vmem:[%s480 + $0x152] sm:$0xff]
      %v3413 = vld [vmem:[%s480 + $0x15a] sm:$0xff]
      %v3414 = vld [vmem:[%s480 + $0x16a] sm:$0xff]
      %v3415 = vld [vmem:[%s480 + $0x172] sm:$0xff]
      %3448 = vrot.lane.b32.xlu0 %v3384, 20
      %v3449 = vpop.permute.xlu0 %3448
      %3450 = vrot.lane.b32.xlu0 %v3385, 20
      %v3451 = vpop.permute.xlu0 %3450
      %3452 = vrot.lane.b32.xlu0 %v3386, 20
      %v3453 = vpop.permute.xlu0 %3452
      %3454 = vrot.lane.b32.xlu0 %v3387, 20
      %v3455 = vpop.permute.xlu0 %3454
      %3456 = vrot.lane.b32.xlu0 %v3388, 20
      %v3457 = vpop.permute.xlu0 %3456
      %3458 = vrot.lane.b32.xlu0 %v3389, 20
      %v3459 = vpop.permute.xlu0 %3458
      %3460 = vrot.lane.b32.xlu0 %v3390, 20
      %v3461 = vpop.permute.xlu0 %3460
      %3462 = vrot.lane.b32.xlu0 %v3391, 20
      %v3463 = vpop.permute.xlu0 %3462
      %3464 = vrot.lane.b32.xlu0 %v3392, 20
      %v3465 = vpop.permute.xlu0 %3464
      %3466 = vrot.lane.b32.xlu0 %v3393, 20
      %v3467 = vpop.permute.xlu0 %3466
      %3468 = vrot.lane.b32.xlu0 %v3394, 20
      %v3469 = vpop.permute.xlu0 %3468
      %3470 = vrot.lane.b32.xlu0 %v3395, 20
      %v3471 = vpop.permute.xlu0 %3470
      %3472 = vrot.lane.b32.xlu0 %v3396, 20
      %v3473 = vpop.permute.xlu0 %3472
      %3474 = vrot.lane.b32.xlu0 %v3397, 20
      %v3475 = vpop.permute.xlu0 %3474
      %3476 = vrot.lane.b32.xlu0 %v3398, 20
      %v3477 = vpop.permute.xlu0 %3476
      %3478 = vrot.lane.b32.xlu0 %v3399, 20
      %v3479 = vpop.permute.xlu0 %3478
      %3480 = vrot.lane.b32.xlu0 %v3400, 20
      %v3481 = vpop.permute.xlu0 %3480
      %3482 = vrot.lane.b32.xlu0 %v3401, 20
      %v3483 = vpop.permute.xlu0 %3482
      %3484 = vrot.lane.b32.xlu0 %v3402, 20
      %v3485 = vpop.permute.xlu0 %3484
      %3486 = vrot.lane.b32.xlu0 %v3403, 20
      %v3487 = vpop.permute.xlu0 %3486
      %3488 = vrot.lane.b32.xlu0 %v3404, 20
      %v3489 = vpop.permute.xlu0 %3488
      %3490 = vrot.lane.b32.xlu0 %v3405, 20
      %v3491 = vpop.permute.xlu0 %3490
      %3492 = vrot.lane.b32.xlu0 %v3406, 20
      %v3493 = vpop.permute.xlu0 %3492
      %3494 = vrot.lane.b32.xlu0 %v3407, 20
      %v3495 = vpop.permute.xlu0 %3494
      %3496 = vrot.lane.b32.xlu0 %v3408, 20
      %v3497 = vpop.permute.xlu0 %3496
      %3498 = vrot.lane.b32.xlu0 %v3409, 20
      %v3499 = vpop.permute.xlu0 %3498
      %3500 = vrot.lane.b32.xlu0 %v3410, 20
      %v3501 = vpop.permute.xlu0 %3500
      %3502 = vrot.lane.b32.xlu0 %v3411, 20
      %v3503 = vpop.permute.xlu0 %3502
      %3504 = vrot.lane.b32.xlu0 %v3412, 20
      %v3505 = vpop.permute.xlu0 %3504
      %3506 = vrot.lane.b32.xlu0 %v3413, 20
      %v3507 = vpop.permute.xlu0 %3506
      %3508 = vrot.lane.b32.xlu0 %v3414, 20
      %v3509 = vpop.permute.xlu0 %3508
      %3510 = vrot.lane.b32.xlu0 %v3415, 20
      %v3511 = vpop.permute.xlu0 %3510
      %3544 = vst.msk [vmem:[#allocation3] sm:$0xff] %vm1509, %v3449
      %3545 = vst.msk [vmem:[#allocation3 + $0x8] sm:$0xff] %vm1509, %v3451
      %3546 = vst.msk [vmem:[#allocation3 + $0x10] sm:$0xff] %vm1509, %v3453
      %3547 = vst.msk [vmem:[#allocation3 + $0x18] sm:$0xff] %vm1509, %v3455
      %3548 = vst.msk [vmem:[#allocation3 + $0x20] sm:$0xff] %vm1509, %v3457
      %3549 = vst.msk [vmem:[#allocation3 + $0x28] sm:$0xff] %vm1509, %v3459
      %3550 = vst.msk [vmem:[#allocation3 + $0x30] sm:$0xff] %vm1509, %v3461
      %3551 = vst.msk [vmem:[#allocation3 + $0x38] sm:$0xff] %vm1509, %v3463
      %3552 = vst.msk [vmem:[#allocation3 + $0x40] sm:$0xff] %vm1509, %v3465
      %3553 = vst.msk [vmem:[#allocation3 + $0x48] sm:$0xff] %vm1509, %v3467
      %3554 = vst.msk [vmem:[#allocation3 + $0x50] sm:$0xff] %vm1509, %v3469
      %3555 = vst.msk [vmem:[#allocation3 + $0x58] sm:$0xff] %vm1509, %v3471
      %3556 = vst.msk [vmem:[#allocation3 + $0x60] sm:$0xff] %vm1509, %v3473
      %3557 = vst.msk [vmem:[#allocation3 + $0x68] sm:$0xff] %vm1509, %v3475
      %3558 = vst.msk [vmem:[#allocation3 + $0x70] sm:$0xff] %vm1509, %v3477
      %3559 = vst.msk [vmem:[#allocation3 + $0x78] sm:$0xff] %vm1509, %v3479
      %3560 = vst.msk [vmem:[#allocation3 + $0x80] sm:$0xff] %vm1509, %v3481
      %3561 = vst.msk [vmem:[#allocation3 + $0x88] sm:$0xff] %vm1509, %v3483
      %3562 = vst.msk [vmem:[#allocation3 + $0x90] sm:$0xff] %vm1509, %v3485
      %3563 = vst.msk [vmem:[#allocation3 + $0x98] sm:$0xff] %vm1509, %v3487
      %3564 = vst.msk [vmem:[#allocation3 + $0xa0] sm:$0xff] %vm1509, %v3489
      %3565 = vst.msk [vmem:[#allocation3 + $0xa8] sm:$0xff] %vm1509, %v3491
      %3566 = vst.msk [vmem:[#allocation3 + $0xb0] sm:$0xff] %vm1509, %v3493
      %3567 = vst.msk [vmem:[#allocation3 + $0xb8] sm:$0xff] %vm1509, %v3495
      %3568 = vst.msk [vmem:[#allocation3 + $0xc0] sm:$0xff] %vm1509, %v3497
      %3569 = vst.msk [vmem:[#allocation3 + $0xc8] sm:$0xff] %vm1509, %v3499
      %3570 = vst.msk [vmem:[#allocation3 + $0xd0] sm:$0xff] %vm1509, %v3501
      %3571 = vst.msk [vmem:[#allocation3 + $0xd8] sm:$0xff] %vm1509, %v3503
      %3572 = vst.msk [vmem:[#allocation3 + $0xe0] sm:$0xff] %vm1509, %v3505
      %3573 = vst.msk [vmem:[#allocation3 + $0xe8] sm:$0xff] %vm1509, %v3507
      %3574 = vst.msk [vmem:[#allocation3 + $0xf0] sm:$0xff] %vm1509, %v3509
      %3575 = vst.msk [vmem:[#allocation3 + $0xf8] sm:$0xff] %vm1509, %v3511
      %v3576 = vld [vmem:[%s1542] sm:$0xff]
      %v3577 = vld [vmem:[%s1542 + $0x8] sm:$0xff]
      %v3578 = vld [vmem:[%s1542 + $0x18] sm:$0xff]
      %v3579 = vld [vmem:[%s1542 + $0x20] sm:$0xff]
      %v3580 = vld [vmem:[%s1542 + $0x30] sm:$0xff]
      %v3581 = vld [vmem:[%s1542 + $0x38] sm:$0xff]
      %v3582 = vld [vmem:[%s1542 + $0x48] sm:$0xff]
      %v3583 = vld [vmem:[%s1542 + $0x50] sm:$0xff]
      %v3584 = vld [vmem:[%s1542 + $0x60] sm:$0xff]
      %v3585 = vld [vmem:[%s1542 + $0x68] sm:$0xff]
      %v3586 = vld [vmem:[%s1542 + $0x78] sm:$0xff]
      %v3587 = vld [vmem:[%s1542 + $0x80] sm:$0xff]
      %v3588 = vld [vmem:[%s1542 + $0x90] sm:$0xff]
      %v3589 = vld [vmem:[%s1542 + $0x98] sm:$0xff]
      %v3590 = vld [vmem:[%s1542 + $0xa8] sm:$0xff]
      %v3591 = vld [vmem:[%s1542 + $0xb0] sm:$0xff]
      %v3592 = vld [vmem:[%s1542 + $0xc0] sm:$0xff]
      %v3593 = vld [vmem:[%s1542 + $0xc8] sm:$0xff]
      %v3594 = vld [vmem:[%s1542 + $0xd8] sm:$0xff]
      %v3595 = vld [vmem:[%s1542 + $0xe0] sm:$0xff]
      %v3596 = vld [vmem:[%s1542 + $0xf0] sm:$0xff]
      %v3597 = vld [vmem:[%s1542 + $0xf8] sm:$0xff]
      %v3598 = vld [vmem:[%s1542 + $0x108] sm:$0xff]
      %v3599 = vld [vmem:[%s1542 + $0x110] sm:$0xff]
      %v3600 = vld [vmem:[%s1542 + $0x120] sm:$0xff]
      %v3601 = vld [vmem:[%s1542 + $0x128] sm:$0xff]
      %v3602 = vld [vmem:[%s1542 + $0x138] sm:$0xff]
      %v3603 = vld [vmem:[%s1542 + $0x140] sm:$0xff]
      %v3604 = vld [vmem:[%s1542 + $0x150] sm:$0xff]
      %v3605 = vld [vmem:[%s1542 + $0x158] sm:$0xff]
      %v3606 = vld [vmem:[%s1542 + $0x168] sm:$0xff]
      %v3607 = vld [vmem:[%s1542 + $0x170] sm:$0xff]
      %3640 = vrot.lane.b32.xlu0 %v3576, 24
      %v3641 = vpop.permute.xlu0 %3640
      %3642 = vrot.lane.b32.xlu0 %v3577, 24
      %v3643 = vpop.permute.xlu0 %3642
      %3644 = vrot.lane.b32.xlu0 %v3578, 24
      %v3645 = vpop.permute.xlu0 %3644
      %3646 = vrot.lane.b32.xlu0 %v3579, 24
      %v3647 = vpop.permute.xlu0 %3646
      %3648 = vrot.lane.b32.xlu0 %v3580, 24
      %v3649 = vpop.permute.xlu0 %3648
      %3650 = vrot.lane.b32.xlu0 %v3581, 24
      %v3651 = vpop.permute.xlu0 %3650
      %3652 = vrot.lane.b32.xlu0 %v3582, 24
      %v3653 = vpop.permute.xlu0 %3652
      %3654 = vrot.lane.b32.xlu0 %v3583, 24
      %v3655 = vpop.permute.xlu0 %3654
      %3656 = vrot.lane.b32.xlu0 %v3584, 24
      %v3657 = vpop.permute.xlu0 %3656
      %3658 = vrot.lane.b32.xlu0 %v3585, 24
      %v3659 = vpop.permute.xlu0 %3658
      %3660 = vrot.lane.b32.xlu0 %v3586, 24
      %v3661 = vpop.permute.xlu0 %3660
      %3662 = vrot.lane.b32.xlu0 %v3587, 24
      %v3663 = vpop.permute.xlu0 %3662
      %3664 = vrot.lane.b32.xlu0 %v3588, 24
      %v3665 = vpop.permute.xlu0 %3664
      %3666 = vrot.lane.b32.xlu0 %v3589, 24
      %v3667 = vpop.permute.xlu0 %3666
      %3668 = vrot.lane.b32.xlu0 %v3590, 24
      %v3669 = vpop.permute.xlu0 %3668
      %3670 = vrot.lane.b32.xlu0 %v3591, 24
      %v3671 = vpop.permute.xlu0 %3670
      %3672 = vrot.lane.b32.xlu0 %v3592, 24
      %v3673 = vpop.permute.xlu0 %3672
      %3674 = vrot.lane.b32.xlu0 %v3593, 24
      %v3675 = vpop.permute.xlu0 %3674
      %3676 = vrot.lane.b32.xlu0 %v3594, 24
      %v3677 = vpop.permute.xlu0 %3676
      %3678 = vrot.lane.b32.xlu0 %v3595, 24
      %v3679 = vpop.permute.xlu0 %3678
      %3680 = vrot.lane.b32.xlu0 %v3596, 24
      %v3681 = vpop.permute.xlu0 %3680
      %3682 = vrot.lane.b32.xlu0 %v3597, 24
      %v3683 = vpop.permute.xlu0 %3682
      %3684 = vrot.lane.b32.xlu0 %v3598, 24
      %v3685 = vpop.permute.xlu0 %3684
      %3686 = vrot.lane.b32.xlu0 %v3599, 24
      %v3687 = vpop.permute.xlu0 %3686
      %3688 = vrot.lane.b32.xlu0 %v3600, 24
      %v3689 = vpop.permute.xlu0 %3688
      %3690 = vrot.lane.b32.xlu0 %v3601, 24
      %v3691 = vpop.permute.xlu0 %3690
      %3692 = vrot.lane.b32.xlu0 %v3602, 24
      %v3693 = vpop.permute.xlu0 %3692
      %3694 = vrot.lane.b32.xlu0 %v3603, 24
      %v3695 = vpop.permute.xlu0 %3694
      %3696 = vrot.lane.b32.xlu0 %v3604, 24
      %v3697 = vpop.permute.xlu0 %3696
      %3698 = vrot.lane.b32.xlu0 %v3605, 24
      %v3699 = vpop.permute.xlu0 %3698
      %3700 = vrot.lane.b32.xlu0 %v3606, 24
      %v3701 = vpop.permute.xlu0 %3700
      %3702 = vrot.lane.b32.xlu0 %v3607, 24
      %v3703 = vpop.permute.xlu0 %3702
      %3736 = vst.msk [vmem:[#allocation3] sm:$0xff] %vm1703, %v3641
      %3737 = vst.msk [vmem:[#allocation3 + $0x8] sm:$0xff] %vm1703, %v3643
      %3738 = vst.msk [vmem:[#allocation3 + $0x10] sm:$0xff] %vm1703, %v3645
      %3739 = vst.msk [vmem:[#allocation3 + $0x18] sm:$0xff] %vm1703, %v3647
      %3740 = vst.msk [vmem:[#allocation3 + $0x20] sm:$0xff] %vm1703, %v3649
      %3741 = vst.msk [vmem:[#allocation3 + $0x28] sm:$0xff] %vm1703, %v3651
      %3742 = vst.msk [vmem:[#allocation3 + $0x30] sm:$0xff] %vm1703, %v3653
      %3743 = vst.msk [vmem:[#allocation3 + $0x38] sm:$0xff] %vm1703, %v3655
      %3744 = vst.msk [vmem:[#allocation3 + $0x40] sm:$0xff] %vm1703, %v3657
      %3745 = vst.msk [vmem:[#allocation3 + $0x48] sm:$0xff] %vm1703, %v3659
      %3746 = vst.msk [vmem:[#allocation3 + $0x50] sm:$0xff] %vm1703, %v3661
      %3747 = vst.msk [vmem:[#allocation3 + $0x58] sm:$0xff] %vm1703, %v3663
      %3748 = vst.msk [vmem:[#allocation3 + $0x60] sm:$0xff] %vm1703, %v3665
      %3749 = vst.msk [vmem:[#allocation3 + $0x68] sm:$0xff] %vm1703, %v3667
      %3750 = vst.msk [vmem:[#allocation3 + $0x70] sm:$0xff] %vm1703, %v3669
      %3751 = vst.msk [vmem:[#allocation3 + $0x78] sm:$0xff] %vm1703, %v3671
      %3752 = vst.msk [vmem:[#allocation3 + $0x80] sm:$0xff] %vm1703, %v3673
      %3753 = vst.msk [vmem:[#allocation3 + $0x88] sm:$0xff] %vm1703, %v3675
      %3754 = vst.msk [vmem:[#allocation3 + $0x90] sm:$0xff] %vm1703, %v3677
      %3755 = vst.msk [vmem:[#allocation3 + $0x98] sm:$0xff] %vm1703, %v3679
      %3756 = vst.msk [vmem:[#allocation3 + $0xa0] sm:$0xff] %vm1703, %v3681
      %3757 = vst.msk [vmem:[#allocation3 + $0xa8] sm:$0xff] %vm1703, %v3683
      %3758 = vst.msk [vmem:[#allocation3 + $0xb0] sm:$0xff] %vm1703, %v3685
      %3759 = vst.msk [vmem:[#allocation3 + $0xb8] sm:$0xff] %vm1703, %v3687
      %3760 = vst.msk [vmem:[#allocation3 + $0xc0] sm:$0xff] %vm1703, %v3689
      %3761 = vst.msk [vmem:[#allocation3 + $0xc8] sm:$0xff] %vm1703, %v3691
      %3762 = vst.msk [vmem:[#allocation3 + $0xd0] sm:$0xff] %vm1703, %v3693
      %3763 = vst.msk [vmem:[#allocation3 + $0xd8] sm:$0xff] %vm1703, %v3695
      %3764 = vst.msk [vmem:[#allocation3 + $0xe0] sm:$0xff] %vm1703, %v3697
      %3765 = vst.msk [vmem:[#allocation3 + $0xe8] sm:$0xff] %vm1703, %v3699
      %3766 = vst.msk [vmem:[#allocation3 + $0xf0] sm:$0xff] %vm1703, %v3701
      %3767 = vst.msk [vmem:[#allocation3 + $0xf8] sm:$0xff] %vm1703, %v3703
      %v3768 = vld [vmem:[%s1542 + $0x1] sm:$0xff]
      %v3769 = vld [vmem:[%s1542 + $0x9] sm:$0xff]
      %v3770 = vld [vmem:[%s1542 + $0x19] sm:$0xff]
      %v3771 = vld [vmem:[%s1542 + $0x21] sm:$0xff]
      %v3772 = vld [vmem:[%s1542 + $0x31] sm:$0xff]
      %v3773 = vld [vmem:[%s1542 + $0x39] sm:$0xff]
      %v3774 = vld [vmem:[%s1542 + $0x49] sm:$0xff]
      %v3775 = vld [vmem:[%s1542 + $0x51] sm:$0xff]
      %v3776 = vld [vmem:[%s1542 + $0x61] sm:$0xff]
      %v3777 = vld [vmem:[%s1542 + $0x69] sm:$0xff]
      %v3778 = vld [vmem:[%s1542 + $0x79] sm:$0xff]
      %v3779 = vld [vmem:[%s1542 + $0x81] sm:$0xff]
      %v3780 = vld [vmem:[%s1542 + $0x91] sm:$0xff]
      %v3781 = vld [vmem:[%s1542 + $0x99] sm:$0xff]
      %v3782 = vld [vmem:[%s1542 + $0xa9] sm:$0xff]
      %v3783 = vld [vmem:[%s1542 + $0xb1] sm:$0xff]
      %v3784 = vld [vmem:[%s1542 + $0xc1] sm:$0xff]
      %v3785 = vld [vmem:[%s1542 + $0xc9] sm:$0xff]
      %v3786 = vld [vmem:[%s1542 + $0xd9] sm:$0xff]
      %v3787 = vld [vmem:[%s1542 + $0xe1] sm:$0xff]
      %v3788 = vld [vmem:[%s1542 + $0xf1] sm:$0xff]
      %v3789 = vld [vmem:[%s1542 + $0xf9] sm:$0xff]
      %v3790 = vld [vmem:[%s1542 + $0x109] sm:$0xff]
      %v3791 = vld [vmem:[%s1542 + $0x111] sm:$0xff]
      %v3792 = vld [vmem:[%s1542 + $0x121] sm:$0xff]
      %v3793 = vld [vmem:[%s1542 + $0x129] sm:$0xff]
      %v3794 = vld [vmem:[%s1542 + $0x139] sm:$0xff]
      %v3795 = vld [vmem:[%s1542 + $0x141] sm:$0xff]
      %v3796 = vld [vmem:[%s1542 + $0x151] sm:$0xff]
      %v3797 = vld [vmem:[%s1542 + $0x159] sm:$0xff]
      %v3798 = vld [vmem:[%s1542 + $0x169] sm:$0xff]
      %v3799 = vld [vmem:[%s1542 + $0x171] sm:$0xff]
      %3832 = vrot.lane.b32.xlu0 %v3768, 28
      %v3833 = vpop.permute.xlu0 %3832
      %3834 = vrot.lane.b32.xlu0 %v3769, 28
      %v3835 = vpop.permute.xlu0 %3834
      %3836 = vrot.lane.b32.xlu0 %v3770, 28
      %v3837 = vpop.permute.xlu0 %3836
      %3838 = vrot.lane.b32.xlu0 %v3771, 28
      %v3839 = vpop.permute.xlu0 %3838
      %3840 = vrot.lane.b32.xlu0 %v3772, 28
      %v3841 = vpop.permute.xlu0 %3840
      %3842 = vrot.lane.b32.xlu0 %v3773, 28
      %v3843 = vpop.permute.xlu0 %3842
      %3844 = vrot.lane.b32.xlu0 %v3774, 28
      %v3845 = vpop.permute.xlu0 %3844
      %3846 = vrot.lane.b32.xlu0 %v3775, 28
      %v3847 = vpop.permute.xlu0 %3846
      %3848 = vrot.lane.b32.xlu0 %v3776, 28
      %v3849 = vpop.permute.xlu0 %3848
      %3850 = vrot.lane.b32.xlu0 %v3777, 28
      %v3851 = vpop.permute.xlu0 %3850
      %3852 = vrot.lane.b32.xlu0 %v3778, 28
      %v3853 = vpop.permute.xlu0 %3852
      %3854 = vrot.lane.b32.xlu0 %v3779, 28
      %v3855 = vpop.permute.xlu0 %3854
      %3856 = vrot.lane.b32.xlu0 %v3780, 28
      %v3857 = vpop.permute.xlu0 %3856
      %3858 = vrot.lane.b32.xlu0 %v3781, 28
      %v3859 = vpop.permute.xlu0 %3858
      %3860 = vrot.lane.b32.xlu0 %v3782, 28
      %v3861 = vpop.permute.xlu0 %3860
      %3862 = vrot.lane.b32.xlu0 %v3783, 28
      %v3863 = vpop.permute.xlu0 %3862
      %3864 = vrot.lane.b32.xlu0 %v3784, 28
      %v3865 = vpop.permute.xlu0 %3864
      %3866 = vrot.lane.b32.xlu0 %v3785, 28
      %v3867 = vpop.permute.xlu0 %3866
      %3868 = vrot.lane.b32.xlu0 %v3786, 28
      %v3869 = vpop.permute.xlu0 %3868
      %3870 = vrot.lane.b32.xlu0 %v3787, 28
      %v3871 = vpop.permute.xlu0 %3870
      %3872 = vrot.lane.b32.xlu0 %v3788, 28
      %v3873 = vpop.permute.xlu0 %3872
      %3874 = vrot.lane.b32.xlu0 %v3789, 28
      %v3875 = vpop.permute.xlu0 %3874
      %3876 = vrot.lane.b32.xlu0 %v3790, 28
      %v3877 = vpop.permute.xlu0 %3876
      %3878 = vrot.lane.b32.xlu0 %v3791, 28
      %v3879 = vpop.permute.xlu0 %3878
      %3880 = vrot.lane.b32.xlu0 %v3792, 28
      %v3881 = vpop.permute.xlu0 %3880
      %3882 = vrot.lane.b32.xlu0 %v3793, 28
      %v3883 = vpop.permute.xlu0 %3882
      %3884 = vrot.lane.b32.xlu0 %v3794, 28
      %v3885 = vpop.permute.xlu0 %3884
      %3886 = vrot.lane.b32.xlu0 %v3795, 28
      %v3887 = vpop.permute.xlu0 %3886
      %3888 = vrot.lane.b32.xlu0 %v3796, 28
      %v3889 = vpop.permute.xlu0 %3888
      %3890 = vrot.lane.b32.xlu0 %v3797, 28
      %v3891 = vpop.permute.xlu0 %3890
      %3892 = vrot.lane.b32.xlu0 %v3798, 28
      %v3893 = vpop.permute.xlu0 %3892
      %3894 = vrot.lane.b32.xlu0 %v3799, 28
      %v3895 = vpop.permute.xlu0 %3894
      %3928 = vst.msk [vmem:[#allocation3] sm:$0xff] %vm1896, %v3833
      %3929 = vst.msk [vmem:[#allocation3 + $0x8] sm:$0xff] %vm1896, %v3835
      %3930 = vst.msk [vmem:[#allocation3 + $0x10] sm:$0xff] %vm1896, %v3837
      %3931 = vst.msk [vmem:[#allocation3 + $0x18] sm:$0xff] %vm1896, %v3839
      %3932 = vst.msk [vmem:[#allocation3 + $0x20] sm:$0xff] %vm1896, %v3841
      %3933 = vst.msk [vmem:[#allocation3 + $0x28] sm:$0xff] %vm1896, %v3843
      %3934 = vst.msk [vmem:[#allocation3 + $0x30] sm:$0xff] %vm1896, %v3845
      %3935 = vst.msk [vmem:[#allocation3 + $0x38] sm:$0xff] %vm1896, %v3847
      %3936 = vst.msk [vmem:[#allocation3 + $0x40] sm:$0xff] %vm1896, %v3849
      %3937 = vst.msk [vmem:[#allocation3 + $0x48] sm:$0xff] %vm1896, %v3851
      %3938 = vst.msk [vmem:[#allocation3 + $0x50] sm:$0xff] %vm1896, %v3853
      %3939 = vst.msk [vmem:[#allocation3 + $0x58] sm:$0xff] %vm1896, %v3855
      %3940 = vst.msk [vmem:[#allocation3 + $0x60] sm:$0xff] %vm1896, %v3857
      %3941 = vst.msk [vmem:[#allocation3 + $0x68] sm:$0xff] %vm1896, %v3859
      %3942 = vst.msk [vmem:[#allocation3 + $0x70] sm:$0xff] %vm1896, %v3861
      %3943 = vst.msk [vmem:[#allocation3 + $0x78] sm:$0xff] %vm1896, %v3863
      %3944 = vst.msk [vmem:[#allocation3 + $0x80] sm:$0xff] %vm1896, %v3865
      %3945 = vst.msk [vmem:[#allocation3 + $0x88] sm:$0xff] %vm1896, %v3867
      %3946 = vst.msk [vmem:[#allocation3 + $0x90] sm:$0xff] %vm1896, %v3869
      %3947 = vst.msk [vmem:[#allocation3 + $0x98] sm:$0xff] %vm1896, %v3871
      %3948 = vst.msk [vmem:[#allocation3 + $0xa0] sm:$0xff] %vm1896, %v3873
      %3949 = vst.msk [vmem:[#allocation3 + $0xa8] sm:$0xff] %vm1896, %v3875
      %3950 = vst.msk [vmem:[#allocation3 + $0xb0] sm:$0xff] %vm1896, %v3877
      %3951 = vst.msk [vmem:[#allocation3 + $0xb8] sm:$0xff] %vm1896, %v3879
      %3952 = vst.msk [vmem:[#allocation3 + $0xc0] sm:$0xff] %vm1896, %v3881
      %3953 = vst.msk [vmem:[#allocation3 + $0xc8] sm:$0xff] %vm1896, %v3883
      %3954 = vst.msk [vmem:[#allocation3 + $0xd0] sm:$0xff] %vm1896, %v3885
      %3955 = vst.msk [vmem:[#allocation3 + $0xd8] sm:$0xff] %vm1896, %v3887
      %3956 = vst.msk [vmem:[#allocation3 + $0xe0] sm:$0xff] %vm1896, %v3889
      %3957 = vst.msk [vmem:[#allocation3 + $0xe8] sm:$0xff] %vm1896, %v3891
      %3958 = vst.msk [vmem:[#allocation3 + $0xf0] sm:$0xff] %vm1896, %v3893
      %3959 = vst.msk [vmem:[#allocation3 + $0xf8] sm:$0xff] %vm1896, %v3895
      %v3960 = vld [vmem:[%s1542 + $0x2] sm:$0xff]
      %v3961 = vld [vmem:[%s1542 + $0xa] sm:$0xff]
      %v3962 = vld [vmem:[%s1542 + $0x1a] sm:$0xff]
      %v3963 = vld [vmem:[%s1542 + $0x22] sm:$0xff]
      %v3964 = vld [vmem:[%s1542 + $0x32] sm:$0xff]
      %v3965 = vld [vmem:[%s1542 + $0x3a] sm:$0xff]
      %v3966 = vld [vmem:[%s1542 + $0x4a] sm:$0xff]
      %v3967 = vld [vmem:[%s1542 + $0x52] sm:$0xff]
      %v3968 = vld [vmem:[%s1542 + $0x62] sm:$0xff]
      %v3969 = vld [vmem:[%s1542 + $0x6a] sm:$0xff]
      %v3970 = vld [vmem:[%s1542 + $0x7a] sm:$0xff]
      %v3971 = vld [vmem:[%s1542 + $0x82] sm:$0xff]
      %v3972 = vld [vmem:[%s1542 + $0x92] sm:$0xff]
      %v3973 = vld [vmem:[%s1542 + $0x9a] sm:$0xff]
      %v3974 = vld [vmem:[%s1542 + $0xaa] sm:$0xff]
      %v3975 = vld [vmem:[%s1542 + $0xb2] sm:$0xff]
      %v3976 = vld [vmem:[%s1542 + $0xc2] sm:$0xff]
      %v3977 = vld [vmem:[%s1542 + $0xca] sm:$0xff]
      %v3978 = vld [vmem:[%s1542 + $0xda] sm:$0xff]
      %v3979 = vld [vmem:[%s1542 + $0xe2] sm:$0xff]
      %v3980 = vld [vmem:[%s1542 + $0xf2] sm:$0xff]
      %v3981 = vld [vmem:[%s1542 + $0xfa] sm:$0xff]
      %v3982 = vld [vmem:[%s1542 + $0x10a] sm:$0xff]
      %v3983 = vld [vmem:[%s1542 + $0x112] sm:$0xff]
      %v3984 = vld [vmem:[%s1542 + $0x122] sm:$0xff]
      %v3985 = vld [vmem:[%s1542 + $0x12a] sm:$0xff]
      %v3986 = vld [vmem:[%s1542 + $0x13a] sm:$0xff]
      %v3987 = vld [vmem:[%s1542 + $0x142] sm:$0xff]
      %v3988 = vld [vmem:[%s1542 + $0x152] sm:$0xff]
      %v3989 = vld [vmem:[%s1542 + $0x15a] sm:$0xff]
      %v3990 = vld [vmem:[%s1542 + $0x16a] sm:$0xff]
      %v3991 = vld [vmem:[%s1542 + $0x172] sm:$0xff]
      %4024 = vrot.lane.b32.xlu0 %v3960, 32
      %v4025 = vpop.permute.xlu0 %4024
      %4026 = vrot.lane.b32.xlu0 %v3961, 32
      %v4027 = vpop.permute.xlu0 %4026
      %4028 = vrot.lane.b32.xlu0 %v3962, 32
      %v4029 = vpop.permute.xlu0 %4028
      %4030 = vrot.lane.b32.xlu0 %v3963, 32
      %v4031 = vpop.permute.xlu0 %4030
      %4032 = vrot.lane.b32.xlu0 %v3964, 32
      %v4033 = vpop.permute.xlu0 %4032
      %4034 = vrot.lane.b32.xlu0 %v3965, 32
      %v4035 = vpop.permute.xlu0 %4034
      %4036 = vrot.lane.b32.xlu0 %v3966, 32
      %v4037 = vpop.permute.xlu0 %4036
      %4038 = vrot.lane.b32.xlu0 %v3967, 32
      %v4039 = vpop.permute.xlu0 %4038
      %4040 = vrot.lane.b32.xlu0 %v3968, 32
      %v4041 = vpop.permute.xlu0 %4040
      %4042 = vrot.lane.b32.xlu0 %v3969, 32
      %v4043 = vpop.permute.xlu0 %4042
      %4044 = vrot.lane.b32.xlu0 %v3970, 32
      %v4045 = vpop.permute.xlu0 %4044
      %4046 = vrot.lane.b32.xlu0 %v3971, 32
      %v4047 = vpop.permute.xlu0 %4046
      %4048 = vrot.lane.b32.xlu0 %v3972, 32
      %v4049 = vpop.permute.xlu0 %4048
      %4050 = vrot.lane.b32.xlu0 %v3973, 32
      %v4051 = vpop.permute.xlu0 %4050
      %4052 = vrot.lane.b32.xlu0 %v3974, 32
      %v4053 = vpop.permute.xlu0 %4052
      %4054 = vrot.lane.b32.xlu0 %v3975, 32
      %v4055 = vpop.permute.xlu0 %4054
      %4056 = vrot.lane.b32.xlu0 %v3976, 32
      %v4057 = vpop.permute.xlu0 %4056
      %4058 = vrot.lane.b32.xlu0 %v3977, 32
      %v4059 = vpop.permute.xlu0 %4058
      %4060 = vrot.lane.b32.xlu0 %v3978, 32
      %v4061 = vpop.permute.xlu0 %4060
      %4062 = vrot.lane.b32.xlu0 %v3979, 32
      %v4063 = vpop.permute.xlu0 %4062
      %4064 = vrot.lane.b32.xlu0 %v3980, 32
      %v4065 = vpop.permute.xlu0 %4064
      %4066 = vrot.lane.b32.xlu0 %v3981, 32
      %v4067 = vpop.permute.xlu0 %4066
      %4068 = vrot.lane.b32.xlu0 %v3982, 32
      %v4069 = vpop.permute.xlu0 %4068
      %4070 = vrot.lane.b32.xlu0 %v3983, 32
      %v4071 = vpop.permute.xlu0 %4070
      %4072 = vrot.lane.b32.xlu0 %v3984, 32
      %v4073 = vpop.permute.xlu0 %4072
      %4074 = vrot.lane.b32.xlu0 %v3985, 32
      %v4075 = vpop.permute.xlu0 %4074
      %4076 = vrot.lane.b32.xlu0 %v3986, 32
      %v4077 = vpop.permute.xlu0 %4076
      %4078 = vrot.lane.b32.xlu0 %v3987, 32
      %v4079 = vpop.permute.xlu0 %4078
      %4080 = vrot.lane.b32.xlu0 %v3988, 32
      %v4081 = vpop.permute.xlu0 %4080
      %4082 = vrot.lane.b32.xlu0 %v3989, 32
      %v4083 = vpop.permute.xlu0 %4082
      %4084 = vrot.lane.b32.xlu0 %v3990, 32
      %v4085 = vpop.permute.xlu0 %4084
      %4086 = vrot.lane.b32.xlu0 %v3991, 32
      %v4087 = vpop.permute.xlu0 %4086
      %4120 = vst.msk [vmem:[#allocation3] sm:$0xff] %vm2089, %v4025
      %4121 = vst.msk [vmem:[#allocation3 + $0x8] sm:$0xff] %vm2089, %v4027
      %4122 = vst.msk [vmem:[#allocation3 + $0x10] sm:$0xff] %vm2089, %v4029
      %4123 = vst.msk [vmem:[#allocation3 + $0x18] sm:$0xff] %vm2089, %v4031
      %4124 = vst.msk [vmem:[#allocation3 + $0x20] sm:$0xff] %vm2089, %v4033
      %4125 = vst.msk [vmem:[#allocation3 + $0x28] sm:$0xff] %vm2089, %v4035
      %4126 = vst.msk [vmem:[#allocation3 + $0x30] sm:$0xff] %vm2089, %v4037
      %4127 = vst.msk [vmem:[#allocation3 + $0x38] sm:$0xff] %vm2089, %v4039
      %4128 = vst.msk [vmem:[#allocation3 + $0x40] sm:$0xff] %vm2089, %v4041
      %4129 = vst.msk [vmem:[#allocation3 + $0x48] sm:$0xff] %vm2089, %v4043
      %4130 = vst.msk [vmem:[#allocation3 + $0x50] sm:$0xff] %vm2089, %v4045
      %4131 = vst.msk [vmem:[#allocation3 + $0x58] sm:$0xff] %vm2089, %v4047
      %4132 = vst.msk [vmem:[#allocation3 + $0x60] sm:$0xff] %vm2089, %v4049
      %4133 = vst.msk [vmem:[#allocation3 + $0x68] sm:$0xff] %vm2089, %v4051
      %4134 = vst.msk [vmem:[#allocation3 + $0x70] sm:$0xff] %vm2089, %v4053
      %4135 = vst.msk [vmem:[#allocation3 + $0x78] sm:$0xff] %vm2089, %v4055
      %4136 = vst.msk [vmem:[#allocation3 + $0x80] sm:$0xff] %vm2089, %v4057
      %4137 = vst.msk [vmem:[#allocation3 + $0x88] sm:$0xff] %vm2089, %v4059
      %4138 = vst.msk [vmem:[#allocation3 + $0x90] sm:$0xff] %vm2089, %v4061
      %4139 = vst.msk [vmem:[#allocation3 + $0x98] sm:$0xff] %vm2089, %v4063
      %4140 = vst.msk [vmem:[#allocation3 + $0xa0] sm:$0xff] %vm2089, %v4065
      %4141 = vst.msk [vmem:[#allocation3 + $0xa8] sm:$0xff] %vm2089, %v4067
      %4142 = vst.msk [vmem:[#allocation3 + $0xb0] sm:$0xff] %vm2089, %v4069
      %4143 = vst.msk [vmem:[#allocation3 + $0xb8] sm:$0xff] %vm2089, %v4071
      %4144 = vst.msk [vmem:[#allocation3 + $0xc0] sm:$0xff] %vm2089, %v4073
      %4145 = vst.msk [vmem:[#allocation3 + $0xc8] sm:$0xff] %vm2089, %v4075
      %4146 = vst.msk [vmem:[#allocation3 + $0xd0] sm:$0xff] %vm2089, %v4077
      %4147 = vst.msk [vmem:[#allocation3 + $0xd8] sm:$0xff] %vm2089, %v4079
      %4148 = vst.msk [vmem:[#allocation3 + $0xe0] sm:$0xff] %vm2089, %v4081
      %4149 = vst.msk [vmem:[#allocation3 + $0xe8] sm:$0xff] %vm2089, %v4083
      %4150 = vst.msk [vmem:[#allocation3 + $0xf0] sm:$0xff] %vm2089, %v4085
      %4151 = vst.msk [vmem:[#allocation3 + $0xf8] sm:$0xff] %vm2089, %v4087
      %v4152 = vld [vmem:[#allocation3] sm:$0xff]
      %v4153 = vld [vmem:[#allocation3 + $0x8] sm:$0xff]
      %v4154 = vld [vmem:[#allocation3 + $0x10] sm:$0xff]
      %v4155 = vld [vmem:[#allocation3 + $0x18] sm:$0xff]
      %v4156 = vld [vmem:[#allocation3 + $0x20] sm:$0xff]
      %v4157 = vld [vmem:[#allocation3 + $0x28] sm:$0xff]
      %v4158 = vld [vmem:[#allocation3 + $0x30] sm:$0xff]
      %v4159 = vld [vmem:[#allocation3 + $0x38] sm:$0xff]
      %v4160 = vld [vmem:[#allocation3 + $0x40] sm:$0xff]
      %v4161 = vld [vmem:[#allocation3 + $0x48] sm:$0xff]
      %v4162 = vld [vmem:[#allocation3 + $0x50] sm:$0xff]
      %v4163 = vld [vmem:[#allocation3 + $0x58] sm:$0xff]
      %v4164 = vld [vmem:[#allocation3 + $0x60] sm:$0xff]
      %v4165 = vld [vmem:[#allocation3 + $0x68] sm:$0xff]
      %v4166 = vld [vmem:[#allocation3 + $0x70] sm:$0xff]
      %v4167 = vld [vmem:[#allocation3 + $0x78] sm:$0xff]
      %v4168 = vld [vmem:[#allocation3 + $0x80] sm:$0xff]
      %v4169 = vld [vmem:[#allocation3 + $0x88] sm:$0xff]
      %v4170 = vld [vmem:[#allocation3 + $0x90] sm:$0xff]
      %v4171 = vld [vmem:[#allocation3 + $0x98] sm:$0xff]
      %v4172 = vld [vmem:[#allocation3 + $0xa0] sm:$0xff]
      %v4173 = vld [vmem:[#allocation3 + $0xa8] sm:$0xff]
      %v4174 = vld [vmem:[#allocation3 + $0xb0] sm:$0xff]
      %v4175 = vld [vmem:[#allocation3 + $0xb8] sm:$0xff]
      %v4176 = vld [vmem:[#allocation3 + $0xc0] sm:$0xff]
      %v4177 = vld [vmem:[#allocation3 + $0xc8] sm:$0xff]
      %v4178 = vld [vmem:[#allocation3 + $0xd0] sm:$0xff]
      %v4179 = vld [vmem:[#allocation3 + $0xd8] sm:$0xff]
      %v4180 = vld [vmem:[#allocation3 + $0xe0] sm:$0xff]
      %v4181 = vld [vmem:[#allocation3 + $0xe8] sm:$0xff]
      %v4182 = vld [vmem:[#allocation3 + $0xf0] sm:$0xff]
      %v4183 = vld [vmem:[#allocation3 + $0xf8] sm:$0xff]
      %v4184 = vld [vmem:[%s4] sm:$0xff]
      %v4185 = vld [vmem:[%s4 + $0x8] sm:$0xff]
      %v4186 = vld [vmem:[%s4 + $0x10] sm:$0xff]
      %v4187 = vld [vmem:[%s4 + $0x18] sm:$0xff]
      %v4188 = vld [vmem:[%s4 + $0x20] sm:$0xf]
      %v4189 = vld [vmem:[%s5] sm:$0x1]
      %v4191 = vlaneseq
      %v4192 = vshrl.u32 %v4191, 7
      %v4193 = vsub.s32 0, %v4192
      %v4194 = vrot.slane %v4189, %v4193
      %v4197 = vsel %vm2163, %v4152, 0
      %v4200 = vsel %vm2163, %v4153, 0
      %v4203 = vsel %vm2163, %v4154, 0
      %v4206 = vsel %vm2163, %v4155, 0
      %v4209 = vsel %vm2163, %v4156, 0
      %v4212 = vsel %vm2163, %v4157, 0
      %v4215 = vsel %vm2163, %v4158, 0
      %v4218 = vsel %vm2163, %v4159, 0
      %v4221 = vsel %vm2163, %v4160, 0
      %v4224 = vsel %vm2163, %v4161, 0
      %v4227 = vsel %vm2163, %v4162, 0
      %v4230 = vsel %vm2163, %v4163, 0
      %v4233 = vsel %vm2163, %v4164, 0
      %v4236 = vsel %vm2163, %v4165, 0
      %v4239 = vsel %vm2163, %v4166, 0
      %v4242 = vsel %vm2163, %v4167, 0
      %v4245 = vsel %vm2163, %v4168, 0
      %v4248 = vsel %vm2163, %v4169, 0
      %v4251 = vsel %vm2163, %v4170, 0
      %v4254 = vsel %vm2163, %v4171, 0
      %v4257 = vsel %vm2163, %v4172, 0
      %v4260 = vsel %vm2163, %v4173, 0
      %v4263 = vsel %vm2163, %v4174, 0
      %v4266 = vsel %vm2163, %v4175, 0
      %v4269 = vsel %vm2163, %v4176, 0
      %v4272 = vsel %vm2163, %v4177, 0
      %v4275 = vsel %vm2163, %v4178, 0
      %v4278 = vsel %vm2163, %v4179, 0
      %v4281 = vsel %vm2163, %v4180, 0
      %v4284 = vsel %vm2163, %v4181, 0
      %v4287 = vsel %vm2163, %v4182, 0
      %v4290 = vsel %vm2163, %v4183, 0
      %v4293 = vsel %vm359, %v4188, 0
      %4295 = vmatprep.subr.mxu0 0.0
      %4296 = vmatpush1.msra.mxu0 0.0
      %4297 = vmatprep.subr.mxu0 0.0
      %4298 = vmatpush1.msra.mxu0 0.0
      %4299 = vmatprep.subr.mxu0 0.0
      %4300 = vmatpush1.msra.mxu0 0.0
      %4301 = vmatprep.subr.mxu0 0.0
      %4302 = vmatpush1.msra.mxu0 0.0
      %4303 = vmatprep.subr.mxu0 0.0
      %4304 = vmatpush1.msra.mxu0 0.0
      %4305 = vmatprep.subr.mxu0 0.0
      %4306 = vmatpush1.msra.mxu0 0.0
      %4307 = vmatprep.subr.mxu0 0.0
      %4308 = vmatpush1.msra.mxu0 0.0
      %4309 = vmatprep.subr.mxu0 0.0
      %4310 = vmatpush1.msra.mxu0 0.0
      %4311 = vmatprep.subr.mxu0 0.0
      %4312 = vmatpush1.msra.mxu0 0.0
      %4313 = vmatprep.subr.mxu0 0.0
      %4314 = vmatpush1.msra.mxu0 0.0
      %4315 = vmatprep.subr.mxu0 0.0
      %4316 = vmatpush1.msra.mxu0 0.0
      %4317 = vmatprep.subr.mxu0 0.0
      %4318 = vmatpush1.msra.mxu0 %v4293
      %4319 = vmatprep.subr.mxu0 0.0
      %4320 = vmatpush1.msra.mxu0 %v4187
      %4321 = vmatprep.subr.mxu0 0.0
      %4322 = vmatpush1.msra.mxu0 %v4186
      %4323 = vmatprep.subr.mxu0 0.0
      %4324 = vmatpush1.msra.mxu0 %v4185
      %4325 = vmatprep.subr.mxu0 0.0
      %4326 = vmatpush1.msra.mxu0 %v4184
      %4327 = vmatprep.subr.mxu0 0.0
      %4328 = vmatpush2.msra.mxu0 0.0
      %4329 = vmatprep.subr.mxu0 0.0
      %4330 = vmatpush2.msra.mxu0 0.0
      %4331 = vmatprep.subr.mxu0 0.0
      %4332 = vmatpush2.msra.mxu0 0.0
      %4333 = vmatprep.subr.mxu0 0.0
      %4334 = vmatpush2.msra.mxu0 0.0
      %4335 = vmatprep.subr.mxu0 0.0
      %4336 = vmatpush2.msra.mxu0 0.0
      %4337 = vmatprep.subr.mxu0 0.0
      %4338 = vmatpush2.msra.mxu0 0.0
      %4339 = vmatprep.subr.mxu0 0.0
      %4340 = vmatpush2.msra.mxu0 0.0
      %4341 = vmatprep.subr.mxu0 0.0
      %4342 = vmatpush2.msra.mxu0 0.0
      %4343 = vmatprep.subr.mxu0 0.0
      %4344 = vmatpush2.msra.mxu0 0.0
      %4345 = vmatprep.subr.mxu0 0.0
      %4346 = vmatpush2.msra.mxu0 0.0
      %4347 = vmatprep.subr.mxu0 0.0
      %4348 = vmatpush2.msra.mxu0 0.0
      %4349 = vmatprep.subr.mxu0 0.0
      %4350 = vmatpush2.msra.mxu0 0.0
      %4351 = vmatprep.subr.mxu0 0.0
      %4352 = vmatpush2.msra.mxu0 0.0
      %4353 = vmatprep.subr.mxu0 0.0
      %4354 = vmatpush2.msra.mxu0 0.0
      %4355 = vmatprep.subr.mxu0 0.0
      %4356 = vmatpush2.msra.mxu0 0.0
      %4357 = vmatprep.subr.mxu0 0.0
      %4358 = vmatpush2.msra.mxu0 0.0
      %4359 = vmatprep.mubr.f32.mxu0 0.0
      %4360 = vmatmul.mubr.f32.gmra.mxu0 %v4197
      %v4361 = vpop.f32.mrf.mxu0
      %v4362 = vadd.f32 %v4194, %v4361
      %v4363 = vpop.f32.mrf.mxu0
      %4364 = vmatprep.mubr.f32.mxu0 0.0
      %4365 = vmatmul.mubr.f32.gmra.mxu0 %v4200
      %v4366 = vpop.f32.mrf.mxu0
      %v4367 = vadd.f32 %v4194, %v4366
      %v4368 = vpop.f32.mrf.mxu0
      %4369 = vmatprep.mubr.f32.mxu0 0.0
      %4370 = vmatmul.mubr.f32.gmra.mxu0 %v4203
      %v4371 = vpop.f32.mrf.mxu0
      %v4372 = vadd.f32 %v4194, %v4371
      %v4373 = vpop.f32.mrf.mxu0
      %4374 = vmatprep.mubr.f32.mxu0 0.0
      %4375 = vmatmul.mubr.f32.gmra.mxu0 %v4206
      %v4376 = vpop.f32.mrf.mxu0
      %v4377 = vadd.f32 %v4194, %v4376
      %v4378 = vpop.f32.mrf.mxu0
      %4379 = vmatprep.mubr.f32.mxu0 0.0
      %4380 = vmatmul.mubr.f32.gmra.mxu0 %v4209
      %v4381 = vpop.f32.mrf.mxu0
      %v4382 = vadd.f32 %v4194, %v4381
      %v4383 = vpop.f32.mrf.mxu0
      %4384 = vmatprep.mubr.f32.mxu0 0.0
      %4385 = vmatmul.mubr.f32.gmra.mxu0 %v4212
      %v4386 = vpop.f32.mrf.mxu0
      %v4387 = vadd.f32 %v4194, %v4386
      %v4388 = vpop.f32.mrf.mxu0
      %4389 = vmatprep.mubr.f32.mxu0 0.0
      %4390 = vmatmul.mubr.f32.gmra.mxu0 %v4215
      %v4391 = vpop.f32.mrf.mxu0
      %v4392 = vadd.f32 %v4194, %v4391
      %v4393 = vpop.f32.mrf.mxu0
      %4394 = vmatprep.mubr.f32.mxu0 0.0
      %4395 = vmatmul.mubr.f32.gmra.mxu0 %v4218
      %v4396 = vpop.f32.mrf.mxu0
      %v4397 = vadd.f32 %v4194, %v4396
      %v4398 = vpop.f32.mrf.mxu0
      %4399 = vmatprep.mubr.f32.mxu0 0.0
      %4400 = vmatmul.mubr.f32.gmra.mxu0 %v4221
      %v4401 = vpop.f32.mrf.mxu0
      %v4402 = vadd.f32 %v4194, %v4401
      %v4403 = vpop.f32.mrf.mxu0
      %4404 = vmatprep.mubr.f32.mxu0 0.0
      %4405 = vmatmul.mubr.f32.gmra.mxu0 %v4224
      %v4406 = vpop.f32.mrf.mxu0
      %v4407 = vadd.f32 %v4194, %v4406
      %v4408 = vpop.f32.mrf.mxu0
      %4409 = vmatprep.mubr.f32.mxu0 0.0
      %4410 = vmatmul.mubr.f32.gmra.mxu0 %v4227
      %v4411 = vpop.f32.mrf.mxu0
      %v4412 = vadd.f32 %v4194, %v4411
      %v4413 = vpop.f32.mrf.mxu0
      %4414 = vmatprep.mubr.f32.mxu0 0.0
      %4415 = vmatmul.mubr.f32.gmra.mxu0 %v4230
      %v4416 = vpop.f32.mrf.mxu0
      %v4417 = vadd.f32 %v4194, %v4416
      %v4418 = vpop.f32.mrf.mxu0
      %4419 = vmatprep.mubr.f32.mxu0 0.0
      %4420 = vmatmul.mubr.f32.gmra.mxu0 %v4233
      %v4421 = vpop.f32.mrf.mxu0
      %v4422 = vadd.f32 %v4194, %v4421
      %v4423 = vpop.f32.mrf.mxu0
      %4424 = vmatprep.mubr.f32.mxu0 0.0
      %4425 = vmatmul.mubr.f32.gmra.mxu0 %v4236
      %v4426 = vpop.f32.mrf.mxu0
      %v4427 = vadd.f32 %v4194, %v4426
      %v4428 = vpop.f32.mrf.mxu0
      %4429 = vmatprep.mubr.f32.mxu0 0.0
      %4430 = vmatmul.mubr.f32.gmra.mxu0 %v4239
      %v4431 = vpop.f32.mrf.mxu0
      %v4432 = vadd.f32 %v4194, %v4431
      %v4433 = vpop.f32.mrf.mxu0
      %4434 = vmatprep.mubr.f32.mxu0 0.0
      %4435 = vmatmul.mubr.f32.gmra.mxu0 %v4242
      %v4436 = vpop.f32.mrf.mxu0
      %v4437 = vadd.f32 %v4194, %v4436
      %v4438 = vpop.f32.mrf.mxu0
      %4439 = vmatprep.mubr.f32.mxu0 0.0
      %4440 = vmatmul.mubr.f32.gmra.mxu0 %v4245
      %v4441 = vpop.f32.mrf.mxu0
      %v4442 = vadd.f32 %v4194, %v4441
      %v4443 = vpop.f32.mrf.mxu0
      %4444 = vmatprep.mubr.f32.mxu0 0.0
      %4445 = vmatmul.mubr.f32.gmra.mxu0 %v4248
      %v4446 = vpop.f32.mrf.mxu0
      %v4447 = vadd.f32 %v4194, %v4446
      %v4448 = vpop.f32.mrf.mxu0
      %4449 = vmatprep.mubr.f32.mxu0 0.0
      %4450 = vmatmul.mubr.f32.gmra.mxu0 %v4251
      %v4451 = vpop.f32.mrf.mxu0
      %v4452 = vadd.f32 %v4194, %v4451
      %v4453 = vpop.f32.mrf.mxu0
      %4454 = vmatprep.mubr.f32.mxu0 0.0
      %4455 = vmatmul.mubr.f32.gmra.mxu0 %v4254
      %v4456 = vpop.f32.mrf.mxu0
      %v4457 = vadd.f32 %v4194, %v4456
      %v4458 = vpop.f32.mrf.mxu0
      %4459 = vmatprep.mubr.f32.mxu0 0.0
      %4460 = vmatmul.mubr.f32.gmra.mxu0 %v4257
      %v4461 = vpop.f32.mrf.mxu0
      %v4462 = vadd.f32 %v4194, %v4461
      %v4463 = vpop.f32.mrf.mxu0
      %4464 = vmatprep.mubr.f32.mxu0 0.0
      %4465 = vmatmul.mubr.f32.gmra.mxu0 %v4260
      %v4466 = vpop.f32.mrf.mxu0
      %v4467 = vadd.f32 %v4194, %v4466
      %v4468 = vpop.f32.mrf.mxu0
      %4469 = vmatprep.mubr.f32.mxu0 0.0
      %4470 = vmatmul.mubr.f32.gmra.mxu0 %v4263
      %v4471 = vpop.f32.mrf.mxu0
      %v4472 = vadd.f32 %v4194, %v4471
      %v4473 = vpop.f32.mrf.mxu0
      %4474 = vmatprep.mubr.f32.mxu0 0.0
      %4475 = vmatmul.mubr.f32.gmra.mxu0 %v4266
      %v4476 = vpop.f32.mrf.mxu0
      %v4477 = vadd.f32 %v4194, %v4476
      %v4478 = vpop.f32.mrf.mxu0
      %4479 = vmatprep.mubr.f32.mxu0 0.0
      %4480 = vmatmul.mubr.f32.gmra.mxu0 %v4269
      %v4481 = vpop.f32.mrf.mxu0
      %v4482 = vadd.f32 %v4194, %v4481
      %v4483 = vpop.f32.mrf.mxu0
      %4484 = vmatprep.mubr.f32.mxu0 0.0
      %4485 = vmatmul.mubr.f32.gmra.mxu0 %v4272
      %v4486 = vpop.f32.mrf.mxu0
      %v4487 = vadd.f32 %v4194, %v4486
      %v4488 = vpop.f32.mrf.mxu0
      %4489 = vmatprep.mubr.f32.mxu0 0.0
      %4490 = vmatmul.mubr.f32.gmra.mxu0 %v4275
      %v4491 = vpop.f32.mrf.mxu0
      %v4492 = vadd.f32 %v4194, %v4491
      %v4493 = vpop.f32.mrf.mxu0
      %4494 = vmatprep.mubr.f32.mxu0 0.0
      %4495 = vmatmul.mubr.f32.gmra.mxu0 %v4278
      %v4496 = vpop.f32.mrf.mxu0
      %v4497 = vadd.f32 %v4194, %v4496
      %v4498 = vpop.f32.mrf.mxu0
      %4499 = vmatprep.mubr.f32.mxu0 0.0
      %4500 = vmatmul.mubr.f32.gmra.mxu0 %v4281
      %v4501 = vpop.f32.mrf.mxu0
      %v4502 = vadd.f32 %v4194, %v4501
      %v4503 = vpop.f32.mrf.mxu0
      %4504 = vmatprep.mubr.f32.mxu0 0.0
      %4505 = vmatmul.mubr.f32.gmra.mxu0 %v4284
      %v4506 = vpop.f32.mrf.mxu0
      %v4507 = vadd.f32 %v4194, %v4506
      %v4508 = vpop.f32.mrf.mxu0
      %4509 = vmatprep.mubr.f32.mxu0 0.0
      %4510 = vmatmul.mubr.f32.gmra.mxu0 %v4287
      %v4511 = vpop.f32.mrf.mxu0
      %v4512 = vadd.f32 %v4194, %v4511
      %v4513 = vpop.f32.mrf.mxu0
      %4514 = vmatprep.mubr.f32.mxu0 0.0
      %4515 = vmatmul.mubr.f32.gmra.mxu0 %v4290
      %v4516 = vpop.f32.mrf.mxu0
      %v4517 = vadd.f32 %v4194, %v4516
      %v4518 = vpop.f32.mrf.mxu0
      %4519 = vdwg.mxu0
      %v4520 = vadd.f32 %v320, %v4362
      %v4521 = vadd.f32 %v321, %v4367
      %v4522 = vadd.f32 %v322, %v4372
      %v4523 = vadd.f32 %v323, %v4377
      %v4524 = vadd.f32 %v324, %v4382
      %v4525 = vadd.f32 %v325, %v4387
      %v4526 = vadd.f32 %v326, %v4392
      %v4527 = vadd.f32 %v327, %v4397
      %v4528 = vadd.f32 %v328, %v4402
      %v4529 = vadd.f32 %v329, %v4407
      %v4530 = vadd.f32 %v330, %v4412
      %v4531 = vadd.f32 %v331, %v4417
      %v4532 = vadd.f32 %v332, %v4422
      %v4533 = vadd.f32 %v333, %v4427
      %v4534 = vadd.f32 %v334, %v4432
      %v4535 = vadd.f32 %v335, %v4437
      %v4536 = vadd.f32 %v336, %v4442
      %v4537 = vadd.f32 %v337, %v4447
      %v4538 = vadd.f32 %v338, %v4452
      %v4539 = vadd.f32 %v339, %v4457
      %v4540 = vadd.f32 %v340, %v4462
      %v4541 = vadd.f32 %v341, %v4467
      %v4542 = vadd.f32 %v342, %v4472
      %v4543 = vadd.f32 %v343, %v4477
      %v4544 = vadd.f32 %v344, %v4482
      %v4545 = vadd.f32 %v345, %v4487
      %v4546 = vadd.f32 %v346, %v4492
      %v4547 = vadd.f32 %v347, %v4497
      %v4548 = vadd.f32 %v348, %v4502
      %v4549 = vadd.f32 %v349, %v4507
      %v4550 = vadd.f32 %v350, %v4512
      %v4551 = vadd.f32 %v351, %v4517
      %4552 = vst.msk [vmem:[%s319] sm:$0xff] %vm355, %v4520
      %4553 = vst.msk [vmem:[%s319 + $0x8] sm:$0xff] %vm355, %v4521
      %4554 = vst.msk [vmem:[%s319 + $0x10] sm:$0xff] %vm355, %v4522
      %4555 = vst.msk [vmem:[%s319 + $0x18] sm:$0xff] %vm355, %v4523
      %4556 = vst.msk [vmem:[%s319 + $0x20] sm:$0xff] %vm355, %v4524
      %4557 = vst.msk [vmem:[%s319 + $0x28] sm:$0xff] %vm355, %v4525
      %4558 = vst.msk [vmem:[%s319 + $0x30] sm:$0xff] %vm355, %v4526
      %4559 = vst.msk [vmem:[%s319 + $0x38] sm:$0xff] %vm355, %v4527
      %4560 = vst.msk [vmem:[%s319 + $0x40] sm:$0xff] %vm355, %v4528
      %4561 = vst.msk [vmem:[%s319 + $0x48] sm:$0xff] %vm355, %v4529
      %4562 = vst.msk [vmem:[%s319 + $0x50] sm:$0xff] %vm355, %v4530
      %4563 = vst.msk [vmem:[%s319 + $0x58] sm:$0xff] %vm355, %v4531
      %4564 = vst.msk [vmem:[%s319 + $0x60] sm:$0xff] %vm355, %v4532
      %4565 = vst.msk [vmem:[%s319 + $0x68] sm:$0xff] %vm355, %v4533
      %4566 = vst.msk [vmem:[%s319 + $0x70] sm:$0xff] %vm355, %v4534
      %4567 = vst.msk [vmem:[%s319 + $0x78] sm:$0xff] %vm355, %v4535
      %4568 = vst.msk [vmem:[%s319 + $0x80] sm:$0xff] %vm355, %v4536
      %4569 = vst.msk [vmem:[%s319 + $0x88] sm:$0xff] %vm355, %v4537
      %4570 = vst.msk [vmem:[%s319 + $0x90] sm:$0xff] %vm355, %v4538
      %4571 = vst.msk [vmem:[%s319 + $0x98] sm:$0xff] %vm355, %v4539
      %4572 = vst.msk [vmem:[%s319 + $0xa0] sm:$0xff] %vm355, %v4540
      %4573 = vst.msk [vmem:[%s319 + $0xa8] sm:$0xff] %vm355, %v4541
      %4574 = vst.msk [vmem:[%s319 + $0xb0] sm:$0xff] %vm355, %v4542
      %4575 = vst.msk [vmem:[%s319 + $0xb8] sm:$0xff] %vm355, %v4543
      %4576 = vst.msk [vmem:[%s319 + $0xc0] sm:$0xff] %vm355, %v4544
      %4577 = vst.msk [vmem:[%s319 + $0xc8] sm:$0xff] %vm355, %v4545
      %4578 = vst.msk [vmem:[%s319 + $0xd0] sm:$0xff] %vm355, %v4546
      %4579 = vst.msk [vmem:[%s319 + $0xd8] sm:$0xff] %vm355, %v4547
      %4580 = vst.msk [vmem:[%s319 + $0xe0] sm:$0xff] %vm355, %v4548
      %4581 = vst.msk [vmem:[%s319 + $0xe8] sm:$0xff] %vm355, %v4549
      %4582 = vst.msk [vmem:[%s319 + $0xf0] sm:$0xff] %vm355, %v4550
      %4583 = vst.msk [vmem:[%s319 + $0xf8] sm:$0xff] %vm355, %v4551
      %p4584 = scmp.lt.s32.totalorder %s19, 1
      %s4585 = scalar_select %p4584, %s19, 1
      %s4586 = smul.addr %s4585, 32
      %s4587 = smul.addr %s4586, 8
      %s4588 = scalar_lea.vmem %s8, %s4587
      // Predicated region
      $region53: #{_lambda_.1} parent=51 // pred_check
        %p4589 = pneg %p215
      $region54: #{_lambda_.1} parent=51 // pred_check_branch
        %4591 = sbr.rel (%p4589) target = $region56
      $region55: #{_lambda_.1} parent=51 // pred_region
        _
      $region56: #{_lambda_.1} parent=51 // pred_fallthru
        _
    $region52: #{_lambda_.1} parent=5 // pred_fallthru
      _
    %p4592 = scmp.le.s32.totalorder 2, %s14
    // Predicated region
    $region57: #{_lambda_.1} parent=5 // pred_check
      %p4593 = pneg %p4592
    $region58: #{_lambda_.1} parent=5 // pred_check_branch
      %4595 = sbr.rel (%p4593) target = $region60
    $region59: #{_lambda_.1} parent=5 // pred_region
      %s4596 = ssub.s32 %s14, 2
      // Predicated region
      $region61: #{_lambda_.1} parent=59 // pred_check
        %p4597 = pneg %p221
      $region62: #{_lambda_.1} parent=59 // pred_check_branch
        %4599 = sbr.rel (%p4597) target = $region64
      $region63: #{_lambda_.1} parent=59 // pred_region
        %p4600 = scmp.lt.s32.totalorder %s20, 1
        %s4601 = scalar_select %p4600, %s20, 1
        %s4602 = smul.addr %s4601, 32
        %s4603 = smul.addr %s4602, 8
        %s4604 = scalar_lea.vmem %s8, %s4603
      $region64: #{_lambda_.1} parent=59 // pred_fallthru
        _
    $region60: #{_lambda_.1} parent=5 // pred_fallthru
      _
  $region6: #{_lambda_.1} parent=0 // loop_footer
    %s18 = sadd.s32 1, %s14
  $region7: #{_lambda_.1} parent=0 // loop_footer_branch
    %13 = sbr.rel target = $region3
  $region8: #{_lambda_.1} parent=0 // loop_exit
    _

</llo_original>
